<compile_context>
chip_gen: v7x
topology: tpu7x:2x2x1
jax: 0.10.0
libtpu: 0.0.40
codegen_flags: <defaults>
</compile_context>

<pallas_src>
import functools
import math

import jax
import jax.numpy as jnp
from jax.experimental import pallas as pl
from jax.experimental.pallas import tpu as pltpu

# ----------------------------- config ---------------------------------------
VOCAB_SIZE = 50
MAX_SEQ_LEN = 16
HIDDEN = 32
NUM_HEADS = 4
HEAD_SIZE = HIDDEN // NUM_HEADS
NUM_LAYERS = 2
LN_EPS = 1e-12
BIG_NEG = -10000.0

BATCH = 2
SEQ = 8


# --------------------------- in-kernel helpers -------------------------------
def _layernorm(x, gamma, beta, eps):
    # x: (rows, H) f32; gamma/beta: (1, H). Biased variance, like torch.nn.LayerNorm.
    mu = jnp.mean(x, axis=-1, keepdims=True)
    xc = x - mu
    var = jnp.mean(xc * xc, axis=-1, keepdims=True)
    return xc * jax.lax.rsqrt(var + eps) * gamma + beta


# --------------------------- fused encoder kernel ----------------------------
def bert_stack_kernel(
    tok_ref, pos_ref, typ_ref, mask_ref,
    lng_ref, lnb_ref,
    wp_ref, bp_ref, bo_ref,
    g1_ref, be1_ref, w1_ref, b1_ref, w2_ref, b2_ref,
    g2_ref, be2_ref,
    out_ref,
    *, num_layers, num_heads, head_size, eps,
):
    B, S, H = tok_ref.shape
    BS = B * S
    NHH = num_heads * H          # width of the folded V*W_O block

    # hoisted: additive mask, pre-broadcast to (B, S, S) in the wrapper,
    # loaded once and reused across heads x layers (no re-broadcast per use).
    mask_b = mask_ref[...]

    # embeddings sum + LayerNorm (BertCommon.ln1); dropout = identity (eval)
    x = tok_ref[...] + pos_ref[...] + typ_ref[...]               # (B, S, H) f32
    x = x.reshape(BS, H)
    x = _layernorm(x, lng_ref[...], lnb_ref[...], eps)

    for l in range(num_layers):                                  # static layer loop
        # --- fused Q | K | VO projection: one (BS,H)@(H,2H+NH*H) bf16 matmul ---
        xb = x.astype(jnp.bfloat16)
        proj = jnp.dot(xb, wp_ref[l],
                       preferred_element_type=jnp.float32) + bp_ref[l]   # (BS, 2H+NH*H) f32
        projb = proj.astype(jnp.bfloat16)
        q = projb[:, 0:H].reshape(B, S, H)                       # Q already * 1/sqrt(hd)
        k = projb[:, H:2 * H].reshape(B, S, H)
        vo = projb[:, 2 * H:2 * H + NHH].reshape(B, S, NHH)      # per-head x@Wvo_h+bvo_h

        attn = None
        for h in range(num_heads):                               # static head loop
            lo = h * head_size
            hi = lo + head_size
            s = jnp.einsum("bqd,bkd->bqk", q[..., lo:hi], k[..., lo:hi],
                           preferred_element_type=jnp.float32)   # (B, S, S) f32
            s = s + mask_b                                       # mask keys
            m = jnp.max(s, axis=-1, keepdims=True)
            e = jnp.exp(s - m)
            denom = jnp.sum(e, axis=-1, keepdims=True)
            p = (e * pl.reciprocal(denom, approx=True)).astype(jnp.bfloat16)
            # p @ vo_h directly emits a width-H contribution (W_O already folded in)
            contrib = jnp.einsum("bqk,bkd->bqd", p, vo[..., h * H:(h + 1) * H],
                                 preferred_element_type=jnp.float32)      # (B, S, H)
            attn = contrib if attn is None else attn + contrib
        attn = attn.reshape(BS, H) + bo_ref[l]

        # residual + LayerNorm (post-LN as in BERTBlock.forward), f32
        x = _layernorm(x + attn, g1_ref[l], be1_ref[l], eps)

        # MLP: fc1 -> tanh GELU (EUP) -> fc2 ; dropout = identity
        h1 = jnp.dot(x.astype(jnp.bfloat16), w1_ref[l],
                     preferred_element_type=jnp.float32) + b1_ref[l]
        h1 = jax.nn.gelu(h1, approximate=True)                   # tanh form, f32
        h2 = jnp.dot(h1.astype(jnp.bfloat16), w2_ref[l],
                     preferred_element_type=jnp.float32) + b2_ref[l]

        x = _layernorm(x + h2, g2_ref[l], be2_ref[l], eps)

    out_ref[...] = x.reshape(B, S, H)
    # NOTE: at H=32 the output store is a masked (25%-lane) vst; a lane-dense
    # (B, S*H) slab only pays off at larger S/H and would need the working
    # layout restructured (a late (BS,H)->(B,S*H) reshape crosses (8,128) tiles).


# ------------------------------ forward (Pallas) -----------------------------
def bert_common_forward(prepared, token_ids, one_zero_attention_mask, token_type_ids):
    B, S = token_ids.shape
    # embedding gathers are glue (plain JAX)
    tok_emb = prepared["tok_embedding"][token_ids]                # (B, S, H)
    pos_emb = prepared["pos_encoding"][:S]                        # (S, H)
    typ_emb = prepared["typ_embedding"][token_type_ids]           # (B, S, H)
    add_mask = (1.0 - one_zero_attention_mask.astype(jnp.float32)) * BIG_NEG  # (B, S)
    mask_b = jnp.broadcast_to(add_mask[:, None, :], (B, S, S))    # pre-broadcast once

    kern = functools.partial(
        bert_stack_kernel,
        num_layers=NUM_LAYERS, num_heads=NUM_HEADS, head_size=HEAD_SIZE, eps=LN_EPS)

    operands = (
        tok_emb, pos_emb, typ_emb, mask_b,
        prepared["ln_g"], prepared["ln_b"],
        prepared["wp"], prepared["bp"], prepared["bo"],
        prepared["ln1_g"], prepared["ln1_b"],
        prepared["w1"], prepared["b1"], prepared["w2"], prepared["b2"],
        prepared["ln2_g"], prepared["ln2_b"],
    )

    # advisory cost estimate for XLA's scheduler around the custom call
    BS, H, NH, HD = B * S, HIDDEN, NUM_HEADS, HEAD_SIZE
    flops_per_layer = 2 * (
        BS * H * (2 * H + NH * H)          # fused Q|K|VO projection
        + NH * (B * S * S * HD)            # scores
        + NH * (B * S * S * H)             # p @ vo_h
        + BS * H * 4 * H + BS * 4 * H * H  # MLP
    )
    flops = NUM_LAYERS * flops_per_layer
    transcendentals = NUM_LAYERS * (NH * B * S * S + BS * 4 * H)  # exp + tanh-gelu
    out_bytes = B * S * HIDDEN * 4
    bytes_accessed = sum(int(o.size) * o.dtype.itemsize for o in operands) + out_bytes

    vmem_spec = pl.BlockSpec(memory_space=pltpu.MemorySpace.VMEM)

    # Single invocation (grid=()), every operand explicitly VMEM-resident.
    return pl.pallas_call(
        kern,
        out_shape=jax.ShapeDtypeStruct((B, S, HIDDEN), jnp.float32),
        in_specs=[vmem_spec] * len(operands),
        out_specs=vmem_spec,
        compiler_params=pltpu.CompilerParams(
            # actual footprint ~100 KB; 4 MiB leaves ample compiler-scratch
            # headroom and stays well under the scoped default on v5e/v6e/v7x.
            vmem_limit_bytes=4 * 1024 * 1024,
        ),
        cost_estimate=pl.CostEstimate(
            flops=int(flops),
            transcendentals=int(transcendentals),
            bytes_accessed=int(bytes_accessed)),
    )(*operands)
    # TODO(synk): training-mode dropout not implemented (inference semantics).


# ------------------------------ parameter init -------------------------------
def init_params(key):
    def nxt():
        nonlocal key
        key, sub = jax.random.split(key)
        return sub

    def dense(fan_in, fan_out):
        w = jax.random.normal(nxt(), (fan_in, fan_out), jnp.float32) * 0.02
        b = jax.random.normal(nxt(), (1, fan_out), jnp.float32) * 0.01
        return w, b

    params = {
        "tok_embedding": jax.random.normal(nxt(), (VOCAB_SIZE, HIDDEN), jnp.float32) * 0.02,
        "pos_encoding": jax.random.normal(nxt(), (MAX_SEQ_LEN, HIDDEN), jnp.float32) * 0.02,
        "typ_embedding": jax.random.normal(nxt(), (2, HIDDEN), jnp.float32) * 0.02,
        "ln1_g": jnp.ones((1, HIDDEN), jnp.float32),
        "ln1_b": jnp.zeros((1, HIDDEN), jnp.float32),
        "layers": [],
    }
    for _ in range(NUM_LAYERS):
        wq, bq = dense(HIDDEN, HIDDEN)
        wk, bk = dense(HIDDEN, HIDDEN)
        wv, bv = dense(HIDDEN, HIDDEN)
        wo, bo = dense(HIDDEN, HIDDEN)
        w1, b1 = dense(HIDDEN, 4 * HIDDEN)
        w2, b2 = dense(4 * HIDDEN, HIDDEN)
        params["layers"].append({
            "wq": wq, "bq": bq, "wk": wk, "bk": bk, "wv": wv, "bv": bv,
            "wo": wo, "bo": bo,
            "ln1_g": jnp.ones((1, HIDDEN), jnp.float32),
            "ln1_b": jnp.zeros((1, HIDDEN), jnp.float32),
            "w1": w1, "b1": b1, "w2": w2, "b2": b2,
            "ln2_g": jnp.ones((1, HIDDEN), jnp.float32),
            "ln2_b": jnp.zeros((1, HIDDEN), jnp.float32),
        })
    return params


def prepare_stacked_params(params):
    """One-time prep (all folds in f32, weights then cast to bf16 for the MXU):
       * fold 1/sqrt(head_size) into the Q slice (weight AND bias),
       * fold W_O into W_V per head: Wvo_h = Wv[:,cols_h] @ Wo[rows_h,:],
         bvo_h = bv[:,cols_h] @ Wo[rows_h,:]  -> fused projection W = [Q|K|VO],
       * stack per-layer tensors along a leading NUM_LAYERS axis."""
    scale = 1.0 / math.sqrt(HEAD_SIZE)
    layers = params["layers"]

    def stack(key_, dtype=jnp.float32):
        return jnp.stack([lp[key_] for lp in layers], axis=0).astype(dtype)

    wp_l, bp_l = [], []
    for lp in layers:
        wvo = jnp.concatenate(
            [lp["wv"][:, h * HEAD_SIZE:(h + 1) * HEAD_SIZE]
             @ lp["wo"][h * HEAD_SIZE:(h + 1) * HEAD_SIZE, :]
             for h in range(NUM_HEADS)], axis=-1)                 # (H, NH*H)
        bvo = jnp.concatenate(
            [lp["bv"][:, h * HEAD_SIZE:(h + 1) * HEAD_SIZE]
             @ lp["wo"][h * HEAD_SIZE:(h + 1) * HEAD_SIZE, :]
             for h in range(NUM_HEADS)], axis=-1)                 # (1, NH*H)
        wp_l.append(jnp.concatenate([lp["wq"] * scale, lp["wk"], wvo], axis=-1))
        bp_l.append(jnp.concatenate([lp["bq"] * scale, lp["bk"], bvo], axis=-1))

    return {
        "tok_embedding": params["tok_embedding"],
        "pos_encoding": params["pos_encoding"],
        "typ_embedding": params["typ_embedding"],
        "ln_g": params["ln1_g"], "ln_b": params["ln1_b"],
        "wp": jnp.stack(wp_l, axis=0).astype(jnp.bfloat16),       # (L, H, 2H+NH*H)
        "bp": jnp.stack(bp_l, axis=0),                            # (L, 1, 2H+NH*H) f32
        "bo": stack("bo"),
        "ln1_g": stack("ln1_g"), "ln1_b": stack("ln1_b"),
        "w1": stack("w1", jnp.bfloat16), "b1": stack("b1"),
        "w2": stack("w2", jnp.bfloat16), "b2": stack("b2"),
        "ln2_g": stack("ln2_g"), "ln2_b": stack("ln2_b"),
    }


# ------------------------------ pure-JAX reference ---------------------------
def bert_common_reference(params, token_ids, one_zero_attention_mask, token_type_ids):
    def ln(x, g, b):
        mu = x.mean(-1, keepdims=True)
        var = ((x - mu) ** 2).mean(-1, keepdims=True)
        return (x - mu) / jnp.sqrt(var + LN_EPS) * g + b

    B, S = token_ids.shape
    x = (params["tok_embedding"][token_ids]
         + params["pos_encoding"][jnp.arange(S)][None]
         + params["typ_embedding"][token_type_ids])
    x = ln(x, params["ln1_g"], params["ln1_b"])
    add_mask = (1.0 - one_zero_attention_mask.astype(jnp.float32)) * BIG_NEG  # (B, S)
    add_mask = add_mask[:, None, None, :]                                     # (B,1,1,S)
    for lp in params["layers"]:
        q = x @ lp["wq"] + lp["bq"]
        k = x @ lp["wk"] + lp["bk"]
        v = x @ lp["wv"] + lp["bv"]
        q = q.reshape(B, S, NUM_HEADS, HEAD_SIZE)
        k = k.reshape(B, S, NUM_HEADS, HEAD_SIZE)
        v = v.reshape(B, S, NUM_HEADS, HEAD_SIZE)
        s = jnp.einsum("bqhd,bkhd->bhqk", q, k) / math.sqrt(HEAD_SIZE) + add_mask
        p = jax.nn.softmax(s, axis=-1)
        a = jnp.einsum("bhqk,bkhd->bqhd", p, v).reshape(B, S, HIDDEN)
        a = a @ lp["wo"] + lp["bo"]
        x = ln(x + a, lp["ln1_g"], lp["ln1_b"])
        h = jax.nn.gelu(x @ lp["w1"] + lp["b1"], approximate=False)
        m = h @ lp["w2"] + lp["b2"]
        x = ln(x + m, lp["ln2_g"], lp["ln2_b"])
    return x


# ----------------------------------- main ------------------------------------
if __name__ == "__main__":
    key = jax.random.PRNGKey(0)
    k_params, k_tok, k_typ = jax.random.split(key, 3)

    params = init_params(k_params)
    prepared = prepare_stacked_params(params)

    token_ids = jax.random.randint(k_tok, (BATCH, SEQ), 0, VOCAB_SIZE, dtype=jnp.int32)
    token_type_ids = jax.random.randint(k_typ, (BATCH, SEQ), 0, 2, dtype=jnp.int32)
    one_zero_mask = jnp.ones((BATCH, SEQ), jnp.float32)
    one_zero_mask = one_zero_mask.at[:, -2:].set(0.0)  # last two tokens are padding

    forward = jax.jit(bert_common_forward)
    out = forward(prepared, token_ids, one_zero_mask, token_type_ids)
    out = jax.block_until_ready(out)

    ref = bert_common_reference(params, token_ids, one_zero_mask, token_type_ids)
    assert out.shape == (BATCH, SEQ, HIDDEN)
    assert bool(jnp.isfinite(out).all())
    # Tolerance: kernel uses bf16 matmul operands (f32 accumulation), tanh-GELU
    # and an approx EUP reciprocal in softmax; reference is exact-f32 / erf-GELU.
    # Combined error over 2 layers stays well below 1e-2 on the unit-scale output.
    assert bool(jnp.allclose(out, ref, atol=1e-2, rtol=1e-2)), "mismatch vs JAX reference"

    print("KERNEL_OK")
</pallas_src>

<mosaic_0001>
module attributes {stable_mosaic.version = 11 : i64} {
  func.func @bert_stack_kernel(%arg0: memref<2x8x32xf32, #tpu.memory_space<vmem>>, %arg1: memref<8x32xf32, #tpu.memory_space<vmem>>, %arg2: memref<2x8x32xf32, #tpu.memory_space<vmem>>, %arg3: memref<2x8x8xf32, #tpu.memory_space<vmem>>, %arg4: memref<1x32xf32, #tpu.memory_space<vmem>>, %arg5: memref<1x32xf32, #tpu.memory_space<vmem>>, %arg6: memref<2x32x192xbf16, #tpu.memory_space<vmem>>, %arg7: memref<2x1x192xf32, #tpu.memory_space<vmem>>, %arg8: memref<2x1x32xf32, #tpu.memory_space<vmem>>, %arg9: memref<2x1x32xf32, #tpu.memory_space<vmem>>, %arg10: memref<2x1x32xf32, #tpu.memory_space<vmem>>, %arg11: memref<2x32x128xbf16, #tpu.memory_space<vmem>>, %arg12: memref<2x1x128xf32, #tpu.memory_space<vmem>>, %arg13: memref<2x128x32xbf16, #tpu.memory_space<vmem>>, %arg14: memref<2x1x32xf32, #tpu.memory_space<vmem>>, %arg15: memref<2x1x32xf32, #tpu.memory_space<vmem>>, %arg16: memref<2x1x32xf32, #tpu.memory_space<vmem>>, %arg17: memref<2x8x32xf32, #tpu.memory_space<vmem>>) attributes {dimension_semantics = [], scalar_prefetch = 0 : i64, scratch_operands = 0 : i64, tpu.core_type = #tpu.core_type<tc>} {
    %c0 = arith.constant 0 : index
    %c0_0 = arith.constant 0 : index
    %c0_1 = arith.constant 0 : index
    %0 = vector.load %arg3[%c0, %c0_0, %c0_1] : memref<2x8x8xf32, #tpu.memory_space<vmem>>, vector<2x8x8xf32>
    %c0_2 = arith.constant 0 : index
    %c0_3 = arith.constant 0 : index
    %c0_4 = arith.constant 0 : index
    %1 = vector.load %arg0[%c0_2, %c0_3, %c0_4] : memref<2x8x32xf32, #tpu.memory_space<vmem>>, vector<2x8x32xf32>
    %c0_5 = arith.constant 0 : index
    %c0_6 = arith.constant 0 : index
    %2 = vector.load %arg1[%c0_5, %c0_6] : memref<8x32xf32, #tpu.memory_space<vmem>>, vector<8x32xf32>
    %3 = vector.shape_cast %2 : vector<8x32xf32> to vector<1x8x32xf32>
    %4 = vector.broadcast %3 : vector<1x8x32xf32> to vector<2x8x32xf32>
    %5 = arith.addf %1, %4 : vector<2x8x32xf32>
    %c0_7 = arith.constant 0 : index
    %c0_8 = arith.constant 0 : index
    %c0_9 = arith.constant 0 : index
    %6 = vector.load %arg2[%c0_7, %c0_8, %c0_9] : memref<2x8x32xf32, #tpu.memory_space<vmem>>, vector<2x8x32xf32>
    %7 = arith.addf %5, %6 : vector<2x8x32xf32>
    %8 = vector.shape_cast %7 : vector<2x8x32xf32> to vector<16x32xf32>
    %c0_10 = arith.constant 0 : index
    %c0_11 = arith.constant 0 : index
    %9 = vector.load %arg4[%c0_10, %c0_11] : memref<1x32xf32, #tpu.memory_space<vmem>>, vector<1x32xf32>
    %c0_12 = arith.constant 0 : index
    %c0_13 = arith.constant 0 : index
    %10 = vector.load %arg5[%c0_12, %c0_13] : memref<1x32xf32, #tpu.memory_space<vmem>>, vector<1x32xf32>
    %cst = arith.constant dense<0.000000e+00> : vector<16xf32>
    %11 = vector.multi_reduction <add>, %8, %cst [1] : vector<16x32xf32> to vector<16xf32>
    %12 = vector.shape_cast %11 : vector<16xf32> to vector<16x1xf32>
    %cst_14 = arith.constant 3.200000e+01 : f32
    %13 = vector.broadcast %cst_14 : f32 to vector<16x1xf32>
    %14 = arith.divf %12, %13 : vector<16x1xf32>
    %15 = vector.broadcast %14 : vector<16x1xf32> to vector<16x32xf32>
    %16 = arith.subf %8, %15 : vector<16x32xf32>
    %17 = arith.mulf %16, %16 : vector<16x32xf32>
    %cst_15 = arith.constant dense<0.000000e+00> : vector<16xf32>
    %18 = vector.multi_reduction <add>, %17, %cst_15 [1] : vector<16x32xf32> to vector<16xf32>
    %19 = vector.shape_cast %18 : vector<16xf32> to vector<16x1xf32>
    %cst_16 = arith.constant 3.200000e+01 : f32
    %20 = vector.broadcast %cst_16 : f32 to vector<16x1xf32>
    %21 = arith.divf %19, %20 : vector<16x1xf32>
    %cst_17 = arith.constant 9.99999996E-13 : f32
    %22 = vector.broadcast %cst_17 : f32 to vector<16x1xf32>
    %23 = arith.addf %21, %22 : vector<16x1xf32>
    %24 = math.rsqrt %23 : vector<16x1xf32>
    %25 = vector.broadcast %24 : vector<16x1xf32> to vector<16x32xf32>
    %26 = arith.mulf %16, %25 : vector<16x32xf32>
    %27 = vector.broadcast %9 : vector<1x32xf32> to vector<16x32xf32>
    %28 = arith.mulf %26, %27 : vector<16x32xf32>
    %29 = vector.broadcast %10 : vector<1x32xf32> to vector<16x32xf32>
    %30 = arith.addf %28, %29 : vector<16x32xf32>
    %31 = arith.truncf %30 : vector<16x32xf32> to vector<16x32xbf16>
    %c0_18 = arith.constant 0 : index
    %c0_19 = arith.constant 0 : index
    %c0_20 = arith.constant 0 : index
    %32 = vector.load %arg6[%c0_18, %c0_19, %c0_20] : memref<2x32x192xbf16, #tpu.memory_space<vmem>>, vector<1x32x192xbf16>
    %33 = vector.shape_cast %32 : vector<1x32x192xbf16> to vector<32x192xbf16>
    %cst_21 = arith.constant dense<0.000000e+00> : vector<16x192xf32>
    %34 = tpu.matmul %31, %33, %cst_21 {dimension_numbers = #tpu.dot_dimension_numbers<[1], [0], [0], [1], [0, 0, 1, 1], [], []>} : vector<16x32xbf16>, vector<32x192xbf16>, vector<16x192xf32> -> vector<16x192xf32>
    %c0_22 = arith.constant 0 : index
    %c0_23 = arith.constant 0 : index
    %c0_24 = arith.constant 0 : index
    %35 = vector.load %arg7[%c0_22, %c0_23, %c0_24] : memref<2x1x192xf32, #tpu.memory_space<vmem>>, vector<1x1x192xf32>
    %36 = vector.shape_cast %35 : vector<1x1x192xf32> to vector<1x192xf32>
    %37 = vector.broadcast %36 : vector<1x192xf32> to vector<16x192xf32>
    %38 = arith.addf %34, %37 : vector<16x192xf32>
    %39 = arith.truncf %38 : vector<16x192xf32> to vector<16x192xbf16>
    %40 = vector.extract_strided_slice %39 {offsets = [0, 0], sizes = [16, 32], strides = [1, 1]} : vector<16x192xbf16> to vector<16x32xbf16>
    %41 = vector.shape_cast %40 : vector<16x32xbf16> to vector<2x8x32xbf16>
    %42 = vector.extract_strided_slice %39 {offsets = [0, 32], sizes = [16, 32], strides = [1, 1]} : vector<16x192xbf16> to vector<16x32xbf16>
    %43 = vector.shape_cast %42 : vector<16x32xbf16> to vector<2x8x32xbf16>
    %44 = vector.extract_strided_slice %39 {offsets = [0, 64], sizes = [16, 128], strides = [1, 1]} : vector<16x192xbf16> to vector<16x128xbf16>
    %45 = vector.shape_cast %44 : vector<16x128xbf16> to vector<2x8x128xbf16>
    %46 = vector.extract_strided_slice %41 {offsets = [0, 0, 0], sizes = [2, 8, 8], strides = [1, 1, 1]} : vector<2x8x32xbf16> to vector<2x8x8xbf16>
    %47 = vector.extract_strided_slice %43 {offsets = [0, 0, 0], sizes = [2, 8, 8], strides = [1, 1, 1]} : vector<2x8x32xbf16> to vector<2x8x8xbf16>
    "tpu.trace_start"() <{level = 10 : i32, message = "bqd,bkd->bqk"}> : () -> ()
    %cst_25 = arith.constant dense<0.000000e+00> : vector<2x8x8xf32>
    %48 = tpu.matmul %46, %47, %cst_25 {dimension_numbers = #tpu.dot_dimension_numbers<[2], [2], [1], [1], [0, 0, 0, 1, 1, 1], [0], [0]>} : vector<2x8x8xbf16>, vector<2x8x8xbf16>, vector<2x8x8xf32> -> vector<2x8x8xf32>
    "tpu.trace_stop"() : () -> ()
    %49 = arith.addf %48, %0 : vector<2x8x8xf32>
    %cst_26 = arith.constant dense<0xFF800000> : vector<2x8xf32>
    %50 = vector.multi_reduction <maximumf>, %49, %cst_26 [2] : vector<2x8x8xf32> to vector<2x8xf32>
    %51 = vector.shape_cast %50 : vector<2x8xf32> to vector<2x8x1xf32>
    %52 = vector.broadcast %51 : vector<2x8x1xf32> to vector<2x8x8xf32>
    %53 = arith.subf %49, %52 : vector<2x8x8xf32>
    %54 = math.exp %53 : vector<2x8x8xf32>
    %cst_27 = arith.constant dense<0.000000e+00> : vector<2x8xf32>
    %55 = vector.multi_reduction <add>, %54, %cst_27 [2] : vector<2x8x8xf32> to vector<2x8xf32>
    %56 = vector.shape_cast %55 : vector<2x8xf32> to vector<2x8x1xf32>
    %57 = tpu.reciprocal %56 {approx = true} : vector<2x8x1xf32> -> vector<2x8x1xf32>
    %58 = vector.broadcast %57 : vector<2x8x1xf32> to vector<2x8x8xf32>
    %59 = arith.mulf %54, %58 : vector<2x8x8xf32>
    %60 = arith.truncf %59 : vector<2x8x8xf32> to vector<2x8x8xbf16>
    %61 = vector.extract_strided_slice %45 {offsets = [0, 0, 0], sizes = [2, 8, 32], strides = [1, 1, 1]} : vector<2x8x128xbf16> to vector<2x8x32xbf16>
    "tpu.trace_start"() <{level = 10 : i32, message = "bqk,bkd->bqd"}> : () -> ()
    %cst_28 = arith.constant dense<0.000000e+00> : vector<2x8x32xf32>
    %62 = tpu.matmul %60, %61, %cst_28 {dimension_numbers = #tpu.dot_dimension_numbers<[2], [1], [1], [2], [0, 0, 0, 1, 1, 2], [0], [0]>} : vector<2x8x8xbf16>, vector<2x8x32xbf16>, vector<2x8x32xf32> -> vector<2x8x32xf32>
    "tpu.trace_stop"() : () -> ()
    %63 = vector.extract_strided_slice %41 {offsets = [0, 0, 8], sizes = [2, 8, 8], strides = [1, 1, 1]} : vector<2x8x32xbf16> to vector<2x8x8xbf16>
    %64 = vector.extract_strided_slice %43 {offsets = [0, 0, 8], sizes = [2, 8, 8], strides = [1, 1, 1]} : vector<2x8x32xbf16> to vector<2x8x8xbf16>
    "tpu.trace_start"() <{level = 10 : i32, message = "bqd,bkd->bqk"}> : () -> ()
    %cst_29 = arith.constant dense<0.000000e+00> : vector<2x8x8xf32>
    %65 = tpu.matmul %63, %64, %cst_29 {dimension_numbers = #tpu.dot_dimension_numbers<[2], [2], [1], [1], [0, 0, 0, 1, 1, 1], [0], [0]>} : vector<2x8x8xbf16>, vector<2x8x8xbf16>, vector<2x8x8xf32> -> vector<2x8x8xf32>
    "tpu.trace_stop"() : () -> ()
    %66 = arith.addf %65, %0 : vector<2x8x8xf32>
    %cst_30 = arith.constant dense<0xFF800000> : vector<2x8xf32>
    %67 = vector.multi_reduction <maximumf>, %66, %cst_30 [2] : vector<2x8x8xf32> to vector<2x8xf32>
    %68 = vector.shape_cast %67 : vector<2x8xf32> to vector<2x8x1xf32>
    %69 = vector.broadcast %68 : vector<2x8x1xf32> to vector<2x8x8xf32>
    %70 = arith.subf %66, %69 : vector<2x8x8xf32>
    %71 = math.exp %70 : vector<2x8x8xf32>
    %cst_31 = arith.constant dense<0.000000e+00> : vector<2x8xf32>
    %72 = vector.multi_reduction <add>, %71, %cst_31 [2] : vector<2x8x8xf32> to vector<2x8xf32>
    %73 = vector.shape_cast %72 : vector<2x8xf32> to vector<2x8x1xf32>
    %74 = tpu.reciprocal %73 {approx = true} : vector<2x8x1xf32> -> vector<2x8x1xf32>
    %75 = vector.broadcast %74 : vector<2x8x1xf32> to vector<2x8x8xf32>
    %76 = arith.mulf %71, %75 : vector<2x8x8xf32>
    %77 = arith.truncf %76 : vector<2x8x8xf32> to vector<2x8x8xbf16>
    %78 = vector.extract_strided_slice %45 {offsets = [0, 0, 32], sizes = [2, 8, 32], strides = [1, 1, 1]} : vector<2x8x128xbf16> to vector<2x8x32xbf16>
    "tpu.trace_start"() <{level = 10 : i32, message = "bqk,bkd->bqd"}> : () -> ()
    %cst_32 = arith.constant dense<0.000000e+00> : vector<2x8x32xf32>
    %79 = tpu.matmul %77, %78, %cst_32 {dimension_numbers = #tpu.dot_dimension_numbers<[2], [1], [1], [2], [0, 0, 0, 1, 1, 2], [0], [0]>} : vector<2x8x8xbf16>, vector<2x8x32xbf16>, vector<2x8x32xf32> -> vector<2x8x32xf32>
    "tpu.trace_stop"() : () -> ()
    %80 = arith.addf %62, %79 : vector<2x8x32xf32>
    %81 = vector.extract_strided_slice %41 {offsets = [0, 0, 16], sizes = [2, 8, 8], strides = [1, 1, 1]} : vector<2x8x32xbf16> to vector<2x8x8xbf16>
    %82 = vector.extract_strided_slice %43 {offsets = [0, 0, 16], sizes = [2, 8, 8], strides = [1, 1, 1]} : vector<2x8x32xbf16> to vector<2x8x8xbf16>
    "tpu.trace_start"() <{level = 10 : i32, message = "bqd,bkd->bqk"}> : () -> ()
    %cst_33 = arith.constant dense<0.000000e+00> : vector<2x8x8xf32>
    %83 = tpu.matmul %81, %82, %cst_33 {dimension_numbers = #tpu.dot_dimension_numbers<[2], [2], [1], [1], [0, 0, 0, 1, 1, 1], [0], [0]>} : vector<2x8x8xbf16>, vector<2x8x8xbf16>, vector<2x8x8xf32> -> vector<2x8x8xf32>
    "tpu.trace_stop"() : () -> ()
    %84 = arith.addf %83, %0 : vector<2x8x8xf32>
    %cst_34 = arith.constant dense<0xFF800000> : vector<2x8xf32>
    %85 = vector.multi_reduction <maximumf>, %84, %cst_34 [2] : vector<2x8x8xf32> to vector<2x8xf32>
    %86 = vector.shape_cast %85 : vector<2x8xf32> to vector<2x8x1xf32>
    %87 = vector.broadcast %86 : vector<2x8x1xf32> to vector<2x8x8xf32>
    %88 = arith.subf %84, %87 : vector<2x8x8xf32>
    %89 = math.exp %88 : vector<2x8x8xf32>
    %cst_35 = arith.constant dense<0.000000e+00> : vector<2x8xf32>
    %90 = vector.multi_reduction <add>, %89, %cst_35 [2] : vector<2x8x8xf32> to vector<2x8xf32>
    %91 = vector.shape_cast %90 : vector<2x8xf32> to vector<2x8x1xf32>
    %92 = tpu.reciprocal %91 {approx = true} : vector<2x8x1xf32> -> vector<2x8x1xf32>
    %93 = vector.broadcast %92 : vector<2x8x1xf32> to vector<2x8x8xf32>
    %94 = arith.mulf %89, %93 : vector<2x8x8xf32>
    %95 = arith.truncf %94 : vector<2x8x8xf32> to vector<2x8x8xbf16>
    %96 = vector.extract_strided_slice %45 {offsets = [0, 0, 64], sizes = [2, 8, 32], strides = [1, 1, 1]} : vector<2x8x128xbf16> to vector<2x8x32xbf16>
    "tpu.trace_start"() <{level = 10 : i32, message = "bqk,bkd->bqd"}> : () -> ()
    %cst_36 = arith.constant dense<0.000000e+00> : vector<2x8x32xf32>
    %97 = tpu.matmul %95, %96, %cst_36 {dimension_numbers = #tpu.dot_dimension_numbers<[2], [1], [1], [2], [0, 0, 0, 1, 1, 2], [0], [0]>} : vector<2x8x8xbf16>, vector<2x8x32xbf16>, vector<2x8x32xf32> -> vector<2x8x32xf32>
    "tpu.trace_stop"() : () -> ()
    %98 = arith.addf %80, %97 : vector<2x8x32xf32>
    %99 = vector.extract_strided_slice %41 {offsets = [0, 0, 24], sizes = [2, 8, 8], strides = [1, 1, 1]} : vector<2x8x32xbf16> to vector<2x8x8xbf16>
    %100 = vector.extract_strided_slice %43 {offsets = [0, 0, 24], sizes = [2, 8, 8], strides = [1, 1, 1]} : vector<2x8x32xbf16> to vector<2x8x8xbf16>
    "tpu.trace_start"() <{level = 10 : i32, message = "bqd,bkd->bqk"}> : () -> ()
    %cst_37 = arith.constant dense<0.000000e+00> : vector<2x8x8xf32>
    %101 = tpu.matmul %99, %100, %cst_37 {dimension_numbers = #tpu.dot_dimension_numbers<[2], [2], [1], [1], [0, 0, 0, 1, 1, 1], [0], [0]>} : vector<2x8x8xbf16>, vector<2x8x8xbf16>, vector<2x8x8xf32> -> vector<2x8x8xf32>
    "tpu.trace_stop"() : () -> ()
    %102 = arith.addf %101, %0 : vector<2x8x8xf32>
    %cst_38 = arith.constant dense<0xFF800000> : vector<2x8xf32>
    %103 = vector.multi_reduction <maximumf>, %102, %cst_38 [2] : vector<2x8x8xf32> to vector<2x8xf32>
    %104 = vector.shape_cast %103 : vector<2x8xf32> to vector<2x8x1xf32>
    %105 = vector.broadcast %104 : vector<2x8x1xf32> to vector<2x8x8xf32>
    %106 = arith.subf %102, %105 : vector<2x8x8xf32>
    %107 = math.exp %106 : vector<2x8x8xf32>
    %cst_39 = arith.constant dense<0.000000e+00> : vector<2x8xf32>
    %108 = vector.multi_reduction <add>, %107, %cst_39 [2] : vector<2x8x8xf32> to vector<2x8xf32>
    %109 = vector.shape_cast %108 : vector<2x8xf32> to vector<2x8x1xf32>
    %110 = tpu.reciprocal %109 {approx = true} : vector<2x8x1xf32> -> vector<2x8x1xf32>
    %111 = vector.broadcast %110 : vector<2x8x1xf32> to vector<2x8x8xf32>
    %112 = arith.mulf %107, %111 : vector<2x8x8xf32>
    %113 = arith.truncf %112 : vector<2x8x8xf32> to vector<2x8x8xbf16>
    %114 = vector.extract_strided_slice %45 {offsets = [0, 0, 96], sizes = [2, 8, 32], strides = [1, 1, 1]} : vector<2x8x128xbf16> to vector<2x8x32xbf16>
    "tpu.trace_start"() <{level = 10 : i32, message = "bqk,bkd->bqd"}> : () -> ()
    %cst_40 = arith.constant dense<0.000000e+00> : vector<2x8x32xf32>
    %115 = tpu.matmul %113, %114, %cst_40 {dimension_numbers = #tpu.dot_dimension_numbers<[2], [1], [1], [2], [0, 0, 0, 1, 1, 2], [0], [0]>} : vector<2x8x8xbf16>, vector<2x8x32xbf16>, vector<2x8x32xf32> -> vector<2x8x32xf32>
    "tpu.trace_stop"() : () -> ()
    %116 = arith.addf %98, %115 : vector<2x8x32xf32>
    %117 = vector.shape_cast %116 : vector<2x8x32xf32> to vector<16x32xf32>
    %c0_41 = arith.constant 0 : index
    %c0_42 = arith.constant 0 : index
    %c0_43 = arith.constant 0 : index
    %118 = vector.load %arg8[%c0_41, %c0_42, %c0_43] : memref<2x1x32xf32, #tpu.memory_space<vmem>>, vector<1x1x32xf32>
    %119 = vector.shape_cast %118 : vector<1x1x32xf32> to vector<1x32xf32>
    %120 = vector.broadcast %119 : vector<1x32xf32> to vector<16x32xf32>
    %121 = arith.addf %117, %120 : vector<16x32xf32>
    %122 = arith.addf %30, %121 : vector<16x32xf32>
    %c0_44 = arith.constant 0 : index
    %c0_45 = arith.constant 0 : index
    %c0_46 = arith.constant 0 : index
    %123 = vector.load %arg9[%c0_44, %c0_45, %c0_46] : memref<2x1x32xf32, #tpu.memory_space<vmem>>, vector<1x1x32xf32>
    %124 = vector.shape_cast %123 : vector<1x1x32xf32> to vector<1x32xf32>
    %c0_47 = arith.constant 0 : index
    %c0_48 = arith.constant 0 : index
    %c0_49 = arith.constant 0 : index
    %125 = vector.load %arg10[%c0_47, %c0_48, %c0_49] : memref<2x1x32xf32, #tpu.memory_space<vmem>>, vector<1x1x32xf32>
    %126 = vector.shape_cast %125 : vector<1x1x32xf32> to vector<1x32xf32>
    %cst_50 = arith.constant dense<0.000000e+00> : vector<16xf32>
    %127 = vector.multi_reduction <add>, %122, %cst_50 [1] : vector<16x32xf32> to vector<16xf32>
    %128 = vector.shape_cast %127 : vector<16xf32> to vector<16x1xf32>
    %cst_51 = arith.constant 3.200000e+01 : f32
    %129 = vector.broadcast %cst_51 : f32 to vector<16x1xf32>
    %130 = arith.divf %128, %129 : vector<16x1xf32>
    %131 = vector.broadcast %130 : vector<16x1xf32> to vector<16x32xf32>
    %132 = arith.subf %122, %131 : vector<16x32xf32>
    %133 = arith.mulf %132, %132 : vector<16x32xf32>
    %cst_52 = arith.constant dense<0.000000e+00> : vector<16xf32>
    %134 = vector.multi_reduction <add>, %133, %cst_52 [1] : vector<16x32xf32> to vector<16xf32>
    %135 = vector.shape_cast %134 : vector<16xf32> to vector<16x1xf32>
    %cst_53 = arith.constant 3.200000e+01 : f32
    %136 = vector.broadcast %cst_53 : f32 to vector<16x1xf32>
    %137 = arith.divf %135, %136 : vector<16x1xf32>
    %cst_54 = arith.constant 9.99999996E-13 : f32
    %138 = vector.broadcast %cst_54 : f32 to vector<16x1xf32>
    %139 = arith.addf %137, %138 : vector<16x1xf32>
    %140 = math.rsqrt %139 : vector<16x1xf32>
    %141 = vector.broadcast %140 : vector<16x1xf32> to vector<16x32xf32>
    %142 = arith.mulf %132, %141 : vector<16x32xf32>
    %143 = vector.broadcast %124 : vector<1x32xf32> to vector<16x32xf32>
    %144 = arith.mulf %142, %143 : vector<16x32xf32>
    %145 = vector.broadcast %126 : vector<1x32xf32> to vector<16x32xf32>
    %146 = arith.addf %144, %145 : vector<16x32xf32>
    %147 = arith.truncf %146 : vector<16x32xf32> to vector<16x32xbf16>
    %c0_55 = arith.constant 0 : index
    %c0_56 = arith.constant 0 : index
    %c0_57 = arith.constant 0 : index
    %148 = vector.load %arg11[%c0_55, %c0_56, %c0_57] : memref<2x32x128xbf16, #tpu.memory_space<vmem>>, vector<1x32x128xbf16>
    %149 = vector.shape_cast %148 : vector<1x32x128xbf16> to vector<32x128xbf16>
    %cst_58 = arith.constant dense<0.000000e+00> : vector<16x128xf32>
    %150 = tpu.matmul %147, %149, %cst_58 {dimension_numbers = #tpu.dot_dimension_numbers<[1], [0], [0], [1], [0, 0, 1, 1], [], []>} : vector<16x32xbf16>, vector<32x128xbf16>, vector<16x128xf32> -> vector<16x128xf32>
    %c0_59 = arith.constant 0 : index
    %c0_60 = arith.constant 0 : index
    %c0_61 = arith.constant 0 : index
    %151 = vector.load %arg12[%c0_59, %c0_60, %c0_61] : memref<2x1x128xf32, #tpu.memory_space<vmem>>, vector<1x1x128xf32>
    %152 = vector.shape_cast %151 : vector<1x1x128xf32> to vector<1x128xf32>
    %153 = vector.broadcast %152 : vector<1x128xf32> to vector<16x128xf32>
    %154 = arith.addf %150, %153 : vector<16x128xf32>
    %155 = arith.mulf %154, %154 : vector<16x128xf32>
    %156 = arith.mulf %154, %155 : vector<16x128xf32>
    %cst_62 = arith.constant 4.471500e-02 : f32
    %157 = vector.broadcast %cst_62 : f32 to vector<16x128xf32>
    %158 = arith.mulf %157, %156 : vector<16x128xf32>
    %159 = arith.addf %154, %158 : vector<16x128xf32>
    %cst_63 = arith.constant 0.797884583 : f32
    %160 = vector.broadcast %cst_63 : f32 to vector<16x128xf32>
    %161 = arith.mulf %160, %159 : vector<16x128xf32>
    %162 = math.tanh %161 : vector<16x128xf32>
    %cst_64 = arith.constant 1.000000e+00 : f32
    %163 = vector.broadcast %cst_64 : f32 to vector<16x128xf32>
    %164 = arith.addf %163, %162 : vector<16x128xf32>
    %cst_65 = arith.constant 5.000000e-01 : f32
    %165 = vector.broadcast %cst_65 : f32 to vector<16x128xf32>
    %166 = arith.mulf %165, %164 : vector<16x128xf32>
    %167 = arith.mulf %154, %166 : vector<16x128xf32>
    %168 = arith.truncf %167 : vector<16x128xf32> to vector<16x128xbf16>
    %c0_66 = arith.constant 0 : index
    %c0_67 = arith.constant 0 : index
    %c0_68 = arith.constant 0 : index
    %169 = vector.load %arg13[%c0_66, %c0_67, %c0_68] : memref<2x128x32xbf16, #tpu.memory_space<vmem>>, vector<1x128x32xbf16>
    %170 = vector.shape_cast %169 : vector<1x128x32xbf16> to vector<128x32xbf16>
    %cst_69 = arith.constant dense<0.000000e+00> : vector<16x32xf32>
    %171 = tpu.matmul %168, %170, %cst_69 {dimension_numbers = #tpu.dot_dimension_numbers<[1], [0], [0], [1], [0, 0, 1, 1], [], []>} : vector<16x128xbf16>, vector<128x32xbf16>, vector<16x32xf32> -> vector<16x32xf32>
    %c0_70 = arith.constant 0 : index
    %c0_71 = arith.constant 0 : index
    %c0_72 = arith.constant 0 : index
    %172 = vector.load %arg14[%c0_70, %c0_71, %c0_72] : memref<2x1x32xf32, #tpu.memory_space<vmem>>, vector<1x1x32xf32>
    %173 = vector.shape_cast %172 : vector<1x1x32xf32> to vector<1x32xf32>
    %174 = vector.broadcast %173 : vector<1x32xf32> to vector<16x32xf32>
    %175 = arith.addf %171, %174 : vector<16x32xf32>
    %176 = arith.addf %146, %175 : vector<16x32xf32>
    %c0_73 = arith.constant 0 : index
    %c0_74 = arith.constant 0 : index
    %c0_75 = arith.constant 0 : index
    %177 = vector.load %arg15[%c0_73, %c0_74, %c0_75] : memref<2x1x32xf32, #tpu.memory_space<vmem>>, vector<1x1x32xf32>
    %178 = vector.shape_cast %177 : vector<1x1x32xf32> to vector<1x32xf32>
    %c0_76 = arith.constant 0 : index
    %c0_77 = arith.constant 0 : index
    %c0_78 = arith.constant 0 : index
    %179 = vector.load %arg16[%c0_76, %c0_77, %c0_78] : memref<2x1x32xf32, #tpu.memory_space<vmem>>, vector<1x1x32xf32>
    %180 = vector.shape_cast %179 : vector<1x1x32xf32> to vector<1x32xf32>
    %cst_79 = arith.constant dense<0.000000e+00> : vector<16xf32>
    %181 = vector.multi_reduction <add>, %176, %cst_79 [1] : vector<16x32xf32> to vector<16xf32>
    %182 = vector.shape_cast %181 : vector<16xf32> to vector<16x1xf32>
    %cst_80 = arith.constant 3.200000e+01 : f32
    %183 = vector.broadcast %cst_80 : f32 to vector<16x1xf32>
    %184 = arith.divf %182, %183 : vector<16x1xf32>
    %185 = vector.broadcast %184 : vector<16x1xf32> to vector<16x32xf32>
    %186 = arith.subf %176, %185 : vector<16x32xf32>
    %187 = arith.mulf %186, %186 : vector<16x32xf32>
    %cst_81 = arith.constant dense<0.000000e+00> : vector<16xf32>
    %188 = vector.multi_reduction <add>, %187, %cst_81 [1] : vector<16x32xf32> to vector<16xf32>
    %189 = vector.shape_cast %188 : vector<16xf32> to vector<16x1xf32>
    %cst_82 = arith.constant 3.200000e+01 : f32
    %190 = vector.broadcast %cst_82 : f32 to vector<16x1xf32>
    %191 = arith.divf %189, %190 : vector<16x1xf32>
    %cst_83 = arith.constant 9.99999996E-13 : f32
    %192 = vector.broadcast %cst_83 : f32 to vector<16x1xf32>
    %193 = arith.addf %191, %192 : vector<16x1xf32>
    %194 = math.rsqrt %193 : vector<16x1xf32>
    %195 = vector.broadcast %194 : vector<16x1xf32> to vector<16x32xf32>
    %196 = arith.mulf %186, %195 : vector<16x32xf32>
    %197 = vector.broadcast %178 : vector<1x32xf32> to vector<16x32xf32>
    %198 = arith.mulf %196, %197 : vector<16x32xf32>
    %199 = vector.broadcast %180 : vector<1x32xf32> to vector<16x32xf32>
    %200 = arith.addf %198, %199 : vector<16x32xf32>
    %201 = arith.truncf %200 : vector<16x32xf32> to vector<16x32xbf16>
    %c1 = arith.constant 1 : index
    %c0_84 = arith.constant 0 : index
    %c0_85 = arith.constant 0 : index
    %202 = vector.load %arg6[%c1, %c0_84, %c0_85] : memref<2x32x192xbf16, #tpu.memory_space<vmem>>, vector<1x32x192xbf16>
    %203 = vector.shape_cast %202 : vector<1x32x192xbf16> to vector<32x192xbf16>
    %cst_86 = arith.constant dense<0.000000e+00> : vector<16x192xf32>
    %204 = tpu.matmul %201, %203, %cst_86 {dimension_numbers = #tpu.dot_dimension_numbers<[1], [0], [0], [1], [0, 0, 1, 1], [], []>} : vector<16x32xbf16>, vector<32x192xbf16>, vector<16x192xf32> -> vector<16x192xf32>
    %c1_87 = arith.constant 1 : index
    %c0_88 = arith.constant 0 : index
    %c0_89 = arith.constant 0 : index
    %205 = vector.load %arg7[%c1_87, %c0_88, %c0_89] : memref<2x1x192xf32, #tpu.memory_space<vmem>>, vector<1x1x192xf32>
    %206 = vector.shape_cast %205 : vector<1x1x192xf32> to vector<1x192xf32>
    %207 = vector.broadcast %206 : vector<1x192xf32> to vector<16x192xf32>
    %208 = arith.addf %204, %207 : vector<16x192xf32>
    %209 = arith.truncf %208 : vector<16x192xf32> to vector<16x192xbf16>
    %210 = vector.extract_strided_slice %209 {offsets = [0, 0], sizes = [16, 32], strides = [1, 1]} : vector<16x192xbf16> to vector<16x32xbf16>
    %211 = vector.shape_cast %210 : vector<16x32xbf16> to vector<2x8x32xbf16>
    %212 = vector.extract_strided_slice %209 {offsets = [0, 32], sizes = [16, 32], strides = [1, 1]} : vector<16x192xbf16> to vector<16x32xbf16>
    %213 = vector.shape_cast %212 : vector<16x32xbf16> to vector<2x8x32xbf16>
    %214 = vector.extract_strided_slice %209 {offsets = [0, 64], sizes = [16, 128], strides = [1, 1]} : vector<16x192xbf16> to vector<16x128xbf16>
    %215 = vector.shape_cast %214 : vector<16x128xbf16> to vector<2x8x128xbf16>
    %216 = vector.extract_strided_slice %211 {offsets = [0, 0, 0], sizes = [2, 8, 8], strides = [1, 1, 1]} : vector<2x8x32xbf16> to vector<2x8x8xbf16>
    %217 = vector.extract_strided_slice %213 {offsets = [0, 0, 0], sizes = [2, 8, 8], strides = [1, 1, 1]} : vector<2x8x32xbf16> to vector<2x8x8xbf16>
    "tpu.trace_start"() <{level = 10 : i32, message = "bqd,bkd->bqk"}> : () -> ()
    %cst_90 = arith.constant dense<0.000000e+00> : vector<2x8x8xf32>
    %218 = tpu.matmul %216, %217, %cst_90 {dimension_numbers = #tpu.dot_dimension_numbers<[2], [2], [1], [1], [0, 0, 0, 1, 1, 1], [0], [0]>} : vector<2x8x8xbf16>, vector<2x8x8xbf16>, vector<2x8x8xf32> -> vector<2x8x8xf32>
    "tpu.trace_stop"() : () -> ()
    %219 = arith.addf %218, %0 : vector<2x8x8xf32>
    %cst_91 = arith.constant dense<0xFF800000> : vector<2x8xf32>
    %220 = vector.multi_reduction <maximumf>, %219, %cst_91 [2] : vector<2x8x8xf32> to vector<2x8xf32>
    %221 = vector.shape_cast %220 : vector<2x8xf32> to vector<2x8x1xf32>
    %222 = vector.broadcast %221 : vector<2x8x1xf32> to vector<2x8x8xf32>
    %223 = arith.subf %219, %222 : vector<2x8x8xf32>
    %224 = math.exp %223 : vector<2x8x8xf32>
    %cst_92 = arith.constant dense<0.000000e+00> : vector<2x8xf32>
    %225 = vector.multi_reduction <add>, %224, %cst_92 [2] : vector<2x8x8xf32> to vector<2x8xf32>
    %226 = vector.shape_cast %225 : vector<2x8xf32> to vector<2x8x1xf32>
    %227 = tpu.reciprocal %226 {approx = true} : vector<2x8x1xf32> -> vector<2x8x1xf32>
    %228 = vector.broadcast %227 : vector<2x8x1xf32> to vector<2x8x8xf32>
    %229 = arith.mulf %224, %228 : vector<2x8x8xf32>
    %230 = arith.truncf %229 : vector<2x8x8xf32> to vector<2x8x8xbf16>
    %231 = vector.extract_strided_slice %215 {offsets = [0, 0, 0], sizes = [2, 8, 32], strides = [1, 1, 1]} : vector<2x8x128xbf16> to vector<2x8x32xbf16>
    "tpu.trace_start"() <{level = 10 : i32, message = "bqk,bkd->bqd"}> : () -> ()
    %cst_93 = arith.constant dense<0.000000e+00> : vector<2x8x32xf32>
    %232 = tpu.matmul %230, %231, %cst_93 {dimension_numbers = #tpu.dot_dimension_numbers<[2], [1], [1], [2], [0, 0, 0, 1, 1, 2], [0], [0]>} : vector<2x8x8xbf16>, vector<2x8x32xbf16>, vector<2x8x32xf32> -> vector<2x8x32xf32>
    "tpu.trace_stop"() : () -> ()
    %233 = vector.extract_strided_slice %211 {offsets = [0, 0, 8], sizes = [2, 8, 8], strides = [1, 1, 1]} : vector<2x8x32xbf16> to vector<2x8x8xbf16>
    %234 = vector.extract_strided_slice %213 {offsets = [0, 0, 8], sizes = [2, 8, 8], strides = [1, 1, 1]} : vector<2x8x32xbf16> to vector<2x8x8xbf16>
    "tpu.trace_start"() <{level = 10 : i32, message = "bqd,bkd->bqk"}> : () -> ()
    %cst_94 = arith.constant dense<0.000000e+00> : vector<2x8x8xf32>
    %235 = tpu.matmul %233, %234, %cst_94 {dimension_numbers = #tpu.dot_dimension_numbers<[2], [2], [1], [1], [0, 0, 0, 1, 1, 1], [0], [0]>} : vector<2x8x8xbf16>, vector<2x8x8xbf16>, vector<2x8x8xf32> -> vector<2x8x8xf32>
    "tpu.trace_stop"() : () -> ()
    %236 = arith.addf %235, %0 : vector<2x8x8xf32>
    %cst_95 = arith.constant dense<0xFF800000> : vector<2x8xf32>
    %237 = vector.multi_reduction <maximumf>, %236, %cst_95 [2] : vector<2x8x8xf32> to vector<2x8xf32>
    %238 = vector.shape_cast %237 : vector<2x8xf32> to vector<2x8x1xf32>
    %239 = vector.broadcast %238 : vector<2x8x1xf32> to vector<2x8x8xf32>
    %240 = arith.subf %236, %239 : vector<2x8x8xf32>
    %241 = math.exp %240 : vector<2x8x8xf32>
    %cst_96 = arith.constant dense<0.000000e+00> : vector<2x8xf32>
    %242 = vector.multi_reduction <add>, %241, %cst_96 [2] : vector<2x8x8xf32> to vector<2x8xf32>
    %243 = vector.shape_cast %242 : vector<2x8xf32> to vector<2x8x1xf32>
    %244 = tpu.reciprocal %243 {approx = true} : vector<2x8x1xf32> -> vector<2x8x1xf32>
    %245 = vector.broadcast %244 : vector<2x8x1xf32> to vector<2x8x8xf32>
    %246 = arith.mulf %241, %245 : vector<2x8x8xf32>
    %247 = arith.truncf %246 : vector<2x8x8xf32> to vector<2x8x8xbf16>
    %248 = vector.extract_strided_slice %215 {offsets = [0, 0, 32], sizes = [2, 8, 32], strides = [1, 1, 1]} : vector<2x8x128xbf16> to vector<2x8x32xbf16>
    "tpu.trace_start"() <{level = 10 : i32, message = "bqk,bkd->bqd"}> : () -> ()
    %cst_97 = arith.constant dense<0.000000e+00> : vector<2x8x32xf32>
    %249 = tpu.matmul %247, %248, %cst_97 {dimension_numbers = #tpu.dot_dimension_numbers<[2], [1], [1], [2], [0, 0, 0, 1, 1, 2], [0], [0]>} : vector<2x8x8xbf16>, vector<2x8x32xbf16>, vector<2x8x32xf32> -> vector<2x8x32xf32>
    "tpu.trace_stop"() : () -> ()
    %250 = arith.addf %232, %249 : vector<2x8x32xf32>
    %251 = vector.extract_strided_slice %211 {offsets = [0, 0, 16], sizes = [2, 8, 8], strides = [1, 1, 1]} : vector<2x8x32xbf16> to vector<2x8x8xbf16>
    %252 = vector.extract_strided_slice %213 {offsets = [0, 0, 16], sizes = [2, 8, 8], strides = [1, 1, 1]} : vector<2x8x32xbf16> to vector<2x8x8xbf16>
    "tpu.trace_start"() <{level = 10 : i32, message = "bqd,bkd->bqk"}> : () -> ()
    %cst_98 = arith.constant dense<0.000000e+00> : vector<2x8x8xf32>
    %253 = tpu.matmul %251, %252, %cst_98 {dimension_numbers = #tpu.dot_dimension_numbers<[2], [2], [1], [1], [0, 0, 0, 1, 1, 1], [0], [0]>} : vector<2x8x8xbf16>, vector<2x8x8xbf16>, vector<2x8x8xf32> -> vector<2x8x8xf32>
    "tpu.trace_stop"() : () -> ()
    %254 = arith.addf %253, %0 : vector<2x8x8xf32>
    %cst_99 = arith.constant dense<0xFF800000> : vector<2x8xf32>
    %255 = vector.multi_reduction <maximumf>, %254, %cst_99 [2] : vector<2x8x8xf32> to vector<2x8xf32>
    %256 = vector.shape_cast %255 : vector<2x8xf32> to vector<2x8x1xf32>
    %257 = vector.broadcast %256 : vector<2x8x1xf32> to vector<2x8x8xf32>
    %258 = arith.subf %254, %257 : vector<2x8x8xf32>
    %259 = math.exp %258 : vector<2x8x8xf32>
    %cst_100 = arith.constant dense<0.000000e+00> : vector<2x8xf32>
    %260 = vector.multi_reduction <add>, %259, %cst_100 [2] : vector<2x8x8xf32> to vector<2x8xf32>
    %261 = vector.shape_cast %260 : vector<2x8xf32> to vector<2x8x1xf32>
    %262 = tpu.reciprocal %261 {approx = true} : vector<2x8x1xf32> -> vector<2x8x1xf32>
    %263 = vector.broadcast %262 : vector<2x8x1xf32> to vector<2x8x8xf32>
    %264 = arith.mulf %259, %263 : vector<2x8x8xf32>
    %265 = arith.truncf %264 : vector<2x8x8xf32> to vector<2x8x8xbf16>
    %266 = vector.extract_strided_slice %215 {offsets = [0, 0, 64], sizes = [2, 8, 32], strides = [1, 1, 1]} : vector<2x8x128xbf16> to vector<2x8x32xbf16>
    "tpu.trace_start"() <{level = 10 : i32, message = "bqk,bkd->bqd"}> : () -> ()
    %cst_101 = arith.constant dense<0.000000e+00> : vector<2x8x32xf32>
    %267 = tpu.matmul %265, %266, %cst_101 {dimension_numbers = #tpu.dot_dimension_numbers<[2], [1], [1], [2], [0, 0, 0, 1, 1, 2], [0], [0]>} : vector<2x8x8xbf16>, vector<2x8x32xbf16>, vector<2x8x32xf32> -> vector<2x8x32xf32>
    "tpu.trace_stop"() : () -> ()
    %268 = arith.addf %250, %267 : vector<2x8x32xf32>
    %269 = vector.extract_strided_slice %211 {offsets = [0, 0, 24], sizes = [2, 8, 8], strides = [1, 1, 1]} : vector<2x8x32xbf16> to vector<2x8x8xbf16>
    %270 = vector.extract_strided_slice %213 {offsets = [0, 0, 24], sizes = [2, 8, 8], strides = [1, 1, 1]} : vector<2x8x32xbf16> to vector<2x8x8xbf16>
    "tpu.trace_start"() <{level = 10 : i32, message = "bqd,bkd->bqk"}> : () -> ()
    %cst_102 = arith.constant dense<0.000000e+00> : vector<2x8x8xf32>
    %271 = tpu.matmul %269, %270, %cst_102 {dimension_numbers = #tpu.dot_dimension_numbers<[2], [2], [1], [1], [0, 0, 0, 1, 1, 1], [0], [0]>} : vector<2x8x8xbf16>, vector<2x8x8xbf16>, vector<2x8x8xf32> -> vector<2x8x8xf32>
    "tpu.trace_stop"() : () -> ()
    %272 = arith.addf %271, %0 : vector<2x8x8xf32>
    %cst_103 = arith.constant dense<0xFF800000> : vector<2x8xf32>
    %273 = vector.multi_reduction <maximumf>, %272, %cst_103 [2] : vector<2x8x8xf32> to vector<2x8xf32>
    %274 = vector.shape_cast %273 : vector<2x8xf32> to vector<2x8x1xf32>
    %275 = vector.broadcast %274 : vector<2x8x1xf32> to vector<2x8x8xf32>
    %276 = arith.subf %272, %275 : vector<2x8x8xf32>
    %277 = math.exp %276 : vector<2x8x8xf32>
    %cst_104 = arith.constant dense<0.000000e+00> : vector<2x8xf32>
    %278 = vector.multi_reduction <add>, %277, %cst_104 [2] : vector<2x8x8xf32> to vector<2x8xf32>
    %279 = vector.shape_cast %278 : vector<2x8xf32> to vector<2x8x1xf32>
    %280 = tpu.reciprocal %279 {approx = true} : vector<2x8x1xf32> -> vector<2x8x1xf32>
    %281 = vector.broadcast %280 : vector<2x8x1xf32> to vector<2x8x8xf32>
    %282 = arith.mulf %277, %281 : vector<2x8x8xf32>
    %283 = arith.truncf %282 : vector<2x8x8xf32> to vector<2x8x8xbf16>
    %284 = vector.extract_strided_slice %215 {offsets = [0, 0, 96], sizes = [2, 8, 32], strides = [1, 1, 1]} : vector<2x8x128xbf16> to vector<2x8x32xbf16>
    "tpu.trace_start"() <{level = 10 : i32, message = "bqk,bkd->bqd"}> : () -> ()
    %cst_105 = arith.constant dense<0.000000e+00> : vector<2x8x32xf32>
    %285 = tpu.matmul %283, %284, %cst_105 {dimension_numbers = #tpu.dot_dimension_numbers<[2], [1], [1], [2], [0, 0, 0, 1, 1, 2], [0], [0]>} : vector<2x8x8xbf16>, vector<2x8x32xbf16>, vector<2x8x32xf32> -> vector<2x8x32xf32>
    "tpu.trace_stop"() : () -> ()
    %286 = arith.addf %268, %285 : vector<2x8x32xf32>
    %287 = vector.shape_cast %286 : vector<2x8x32xf32> to vector<16x32xf32>
    %c1_106 = arith.constant 1 : index
    %c0_107 = arith.constant 0 : index
    %c0_108 = arith.constant 0 : index
    %288 = vector.load %arg8[%c1_106, %c0_107, %c0_108] : memref<2x1x32xf32, #tpu.memory_space<vmem>>, vector<1x1x32xf32>
    %289 = vector.shape_cast %288 : vector<1x1x32xf32> to vector<1x32xf32>
    %290 = vector.broadcast %289 : vector<1x32xf32> to vector<16x32xf32>
    %291 = arith.addf %287, %290 : vector<16x32xf32>
    %292 = arith.addf %200, %291 : vector<16x32xf32>
    %c1_109 = arith.constant 1 : index
    %c0_110 = arith.constant 0 : index
    %c0_111 = arith.constant 0 : index
    %293 = vector.load %arg9[%c1_109, %c0_110, %c0_111] : memref<2x1x32xf32, #tpu.memory_space<vmem>>, vector<1x1x32xf32>
    %294 = vector.shape_cast %293 : vector<1x1x32xf32> to vector<1x32xf32>
    %c1_112 = arith.constant 1 : index
    %c0_113 = arith.constant 0 : index
    %c0_114 = arith.constant 0 : index
    %295 = vector.load %arg10[%c1_112, %c0_113, %c0_114] : memref<2x1x32xf32, #tpu.memory_space<vmem>>, vector<1x1x32xf32>
    %296 = vector.shape_cast %295 : vector<1x1x32xf32> to vector<1x32xf32>
    %cst_115 = arith.constant dense<0.000000e+00> : vector<16xf32>
    %297 = vector.multi_reduction <add>, %292, %cst_115 [1] : vector<16x32xf32> to vector<16xf32>
    %298 = vector.shape_cast %297 : vector<16xf32> to vector<16x1xf32>
    %cst_116 = arith.constant 3.200000e+01 : f32
    %299 = vector.broadcast %cst_116 : f32 to vector<16x1xf32>
    %300 = arith.divf %298, %299 : vector<16x1xf32>
    %301 = vector.broadcast %300 : vector<16x1xf32> to vector<16x32xf32>
    %302 = arith.subf %292, %301 : vector<16x32xf32>
    %303 = arith.mulf %302, %302 : vector<16x32xf32>
    %cst_117 = arith.constant dense<0.000000e+00> : vector<16xf32>
    %304 = vector.multi_reduction <add>, %303, %cst_117 [1] : vector<16x32xf32> to vector<16xf32>
    %305 = vector.shape_cast %304 : vector<16xf32> to vector<16x1xf32>
    %cst_118 = arith.constant 3.200000e+01 : f32
    %306 = vector.broadcast %cst_118 : f32 to vector<16x1xf32>
    %307 = arith.divf %305, %306 : vector<16x1xf32>
    %cst_119 = arith.constant 9.99999996E-13 : f32
    %308 = vector.broadcast %cst_119 : f32 to vector<16x1xf32>
    %309 = arith.addf %307, %308 : vector<16x1xf32>
    %310 = math.rsqrt %309 : vector<16x1xf32>
    %311 = vector.broadcast %310 : vector<16x1xf32> to vector<16x32xf32>
    %312 = arith.mulf %302, %311 : vector<16x32xf32>
    %313 = vector.broadcast %294 : vector<1x32xf32> to vector<16x32xf32>
    %314 = arith.mulf %312, %313 : vector<16x32xf32>
    %315 = vector.broadcast %296 : vector<1x32xf32> to vector<16x32xf32>
    %316 = arith.addf %314, %315 : vector<16x32xf32>
    %317 = arith.truncf %316 : vector<16x32xf32> to vector<16x32xbf16>
    %c1_120 = arith.constant 1 : index
    %c0_121 = arith.constant 0 : index
    %c0_122 = arith.constant 0 : index
    %318 = vector.load %arg11[%c1_120, %c0_121, %c0_122] : memref<2x32x128xbf16, #tpu.memory_space<vmem>>, vector<1x32x128xbf16>
    %319 = vector.shape_cast %318 : vector<1x32x128xbf16> to vector<32x128xbf16>
    %cst_123 = arith.constant dense<0.000000e+00> : vector<16x128xf32>
    %320 = tpu.matmul %317, %319, %cst_123 {dimension_numbers = #tpu.dot_dimension_numbers<[1], [0], [0], [1], [0, 0, 1, 1], [], []>} : vector<16x32xbf16>, vector<32x128xbf16>, vector<16x128xf32> -> vector<16x128xf32>
    %c1_124 = arith.constant 1 : index
    %c0_125 = arith.constant 0 : index
    %c0_126 = arith.constant 0 : index
    %321 = vector.load %arg12[%c1_124, %c0_125, %c0_126] : memref<2x1x128xf32, #tpu.memory_space<vmem>>, vector<1x1x128xf32>
    %322 = vector.shape_cast %321 : vector<1x1x128xf32> to vector<1x128xf32>
    %323 = vector.broadcast %322 : vector<1x128xf32> to vector<16x128xf32>
    %324 = arith.addf %320, %323 : vector<16x128xf32>
    %325 = arith.mulf %324, %324 : vector<16x128xf32>
    %326 = arith.mulf %324, %325 : vector<16x128xf32>
    %cst_127 = arith.constant 4.471500e-02 : f32
    %327 = vector.broadcast %cst_127 : f32 to vector<16x128xf32>
    %328 = arith.mulf %327, %326 : vector<16x128xf32>
    %329 = arith.addf %324, %328 : vector<16x128xf32>
    %cst_128 = arith.constant 0.797884583 : f32
    %330 = vector.broadcast %cst_128 : f32 to vector<16x128xf32>
    %331 = arith.mulf %330, %329 : vector<16x128xf32>
    %332 = math.tanh %331 : vector<16x128xf32>
    %cst_129 = arith.constant 1.000000e+00 : f32
    %333 = vector.broadcast %cst_129 : f32 to vector<16x128xf32>
    %334 = arith.addf %333, %332 : vector<16x128xf32>
    %cst_130 = arith.constant 5.000000e-01 : f32
    %335 = vector.broadcast %cst_130 : f32 to vector<16x128xf32>
    %336 = arith.mulf %335, %334 : vector<16x128xf32>
    %337 = arith.mulf %324, %336 : vector<16x128xf32>
    %338 = arith.truncf %337 : vector<16x128xf32> to vector<16x128xbf16>
    %c1_131 = arith.constant 1 : index
    %c0_132 = arith.constant 0 : index
    %c0_133 = arith.constant 0 : index
    %339 = vector.load %arg13[%c1_131, %c0_132, %c0_133] : memref<2x128x32xbf16, #tpu.memory_space<vmem>>, vector<1x128x32xbf16>
    %340 = vector.shape_cast %339 : vector<1x128x32xbf16> to vector<128x32xbf16>
    %cst_134 = arith.constant dense<0.000000e+00> : vector<16x32xf32>
    %341 = tpu.matmul %338, %340, %cst_134 {dimension_numbers = #tpu.dot_dimension_numbers<[1], [0], [0], [1], [0, 0, 1, 1], [], []>} : vector<16x128xbf16>, vector<128x32xbf16>, vector<16x32xf32> -> vector<16x32xf32>
    %c1_135 = arith.constant 1 : index
    %c0_136 = arith.constant 0 : index
    %c0_137 = arith.constant 0 : index
    %342 = vector.load %arg14[%c1_135, %c0_136, %c0_137] : memref<2x1x32xf32, #tpu.memory_space<vmem>>, vector<1x1x32xf32>
    %343 = vector.shape_cast %342 : vector<1x1x32xf32> to vector<1x32xf32>
    %344 = vector.broadcast %343 : vector<1x32xf32> to vector<16x32xf32>
    %345 = arith.addf %341, %344 : vector<16x32xf32>
    %346 = arith.addf %316, %345 : vector<16x32xf32>
    %c1_138 = arith.constant 1 : index
    %c0_139 = arith.constant 0 : index
    %c0_140 = arith.constant 0 : index
    %347 = vector.load %arg15[%c1_138, %c0_139, %c0_140] : memref<2x1x32xf32, #tpu.memory_space<vmem>>, vector<1x1x32xf32>
    %348 = vector.shape_cast %347 : vector<1x1x32xf32> to vector<1x32xf32>
    %c1_141 = arith.constant 1 : index
    %c0_142 = arith.constant 0 : index
    %c0_143 = arith.constant 0 : index
    %349 = vector.load %arg16[%c1_141, %c0_142, %c0_143] : memref<2x1x32xf32, #tpu.memory_space<vmem>>, vector<1x1x32xf32>
    %350 = vector.shape_cast %349 : vector<1x1x32xf32> to vector<1x32xf32>
    %cst_144 = arith.constant dense<0.000000e+00> : vector<16xf32>
    %351 = vector.multi_reduction <add>, %346, %cst_144 [1] : vector<16x32xf32> to vector<16xf32>
    %352 = vector.shape_cast %351 : vector<16xf32> to vector<16x1xf32>
    %cst_145 = arith.constant 3.200000e+01 : f32
    %353 = vector.broadcast %cst_145 : f32 to vector<16x1xf32>
    %354 = arith.divf %352, %353 : vector<16x1xf32>
    %355 = vector.broadcast %354 : vector<16x1xf32> to vector<16x32xf32>
    %356 = arith.subf %346, %355 : vector<16x32xf32>
    %357 = arith.mulf %356, %356 : vector<16x32xf32>
    %cst_146 = arith.constant dense<0.000000e+00> : vector<16xf32>
    %358 = vector.multi_reduction <add>, %357, %cst_146 [1] : vector<16x32xf32> to vector<16xf32>
    %359 = vector.shape_cast %358 : vector<16xf32> to vector<16x1xf32>
    %cst_147 = arith.constant 3.200000e+01 : f32
    %360 = vector.broadcast %cst_147 : f32 to vector<16x1xf32>
    %361 = arith.divf %359, %360 : vector<16x1xf32>
    %cst_148 = arith.constant 9.99999996E-13 : f32
    %362 = vector.broadcast %cst_148 : f32 to vector<16x1xf32>
    %363 = arith.addf %361, %362 : vector<16x1xf32>
    %364 = math.rsqrt %363 : vector<16x1xf32>
    %365 = vector.broadcast %364 : vector<16x1xf32> to vector<16x32xf32>
    %366 = arith.mulf %356, %365 : vector<16x32xf32>
    %367 = vector.broadcast %348 : vector<1x32xf32> to vector<16x32xf32>
    %368 = arith.mulf %366, %367 : vector<16x32xf32>
    %369 = vector.broadcast %350 : vector<1x32xf32> to vector<16x32xf32>
    %370 = arith.addf %368, %369 : vector<16x32xf32>
    %371 = vector.shape_cast %370 : vector<16x32xf32> to vector<2x8x32xf32>
    %c0_149 = arith.constant 0 : index
    %c0_150 = arith.constant 0 : index
    %c0_151 = arith.constant 0 : index
    %372 = vector.load %arg17[%c0_149, %c0_150, %c0_151] : memref<2x8x32xf32, #tpu.memory_space<vmem>>, vector<2x8x32xf32>
    tpu.vector_store %arg17[%c0_149, %c0_150, %c0_151], %371 {strides = array<i32>} : memref<2x8x32xf32, #tpu.memory_space<vmem>>, vector<2x8x32xf32>,
    return
  }
}

</mosaic_0001>

<llo_original>
// kernel: bert_common_forward.1
$region0: #{bert_common_forward.1}
  #allocation0 [shape = 'u32[]', space=smem, size = 0x4, offset = 0x4, fixed_abs, tag = 'smem constant byte address 0x4 - core index']
  #allocation1 [shape = 'u32[144,128]{1,0:T(1,128)}', space=vmem, size = 0x12000, scoped, tag = 'internal scratch']
  %s0 = inlined_call_operand.vmem [shape: f32[2,8,32], index: 0, kind: input, shape index: {}]
  %s1 = inlined_call_operand.vmem [shape: f32[8,32], index: 1, kind: input, shape index: {}]
  %s2 = inlined_call_operand.vmem [shape: f32[2,8,32], index: 2, kind: input, shape index: {}]
  %s3 = inlined_call_operand.vmem [shape: f32[2,8,8], index: 3, kind: input, shape index: {}]
  %s4 = inlined_call_operand.vmem [shape: f32[1,32], index: 4, kind: input, shape index: {}]
  %s5 = inlined_call_operand.vmem [shape: f32[1,32], index: 5, kind: input, shape index: {}]
  %s6 = inlined_call_operand.vmem [shape: bf16[2,32,192], index: 6, kind: input, shape index: {}]
  %s7 = inlined_call_operand.vmem [shape: f32[2,1,192], index: 7, kind: input, shape index: {}]
  %s8 = inlined_call_operand.vmem [shape: f32[2,1,32], index: 8, kind: input, shape index: {}]
  %s9 = inlined_call_operand.vmem [shape: f32[2,1,32], index: 9, kind: input, shape index: {}]
  %s10 = inlined_call_operand.vmem [shape: f32[2,1,32], index: 10, kind: input, shape index: {}]
  %s11 = inlined_call_operand.vmem [shape: bf16[2,32,128], index: 11, kind: input, shape index: {}]
  %s12 = inlined_call_operand.vmem [shape: f32[2,1,128], index: 12, kind: input, shape index: {}]
  %s13 = inlined_call_operand.vmem [shape: bf16[2,128,32], index: 13, kind: input, shape index: {}]
  %s14 = inlined_call_operand.vmem [shape: f32[2,1,32], index: 14, kind: input, shape index: {}]
  %s15 = inlined_call_operand.vmem [shape: f32[2,1,32], index: 15, kind: input, shape index: {}]
  %s16 = inlined_call_operand.vmem [shape: f32[2,1,32], index: 16, kind: input, shape index: {}]
  %s17 = inlined_call_operand.hbm [shape: f32[2,8,32], index: 17, kind: output, shape index: {}]
  %s18 = sld [smem:[#allocation0]]
  $region78: #{bert_common_forward.1} parent=0
    _
  %s20 = ssub.s32 1, %s18
  %s21 = scalar_select 0, %s20, %s18
  $region1: #{bert_common_forward.1} parent=0
    #allocation2 [shape = 'u8[8192]{0}', space=vmem, size = 0x2000, scoped, tag = 'output window, operand 0, single buffered']
    #allocation3 [shape = 's32[1]{0}', space=sflag, size = 0x4, scoped, tag = 'scoped memory for bert_common_forward.1']
    %22 = vsyncpa [#allocation3], 0
    // Predicated region
    $region2: #{bert_common_forward.1} parent=1 // pred_check
      _
    $region3: #{bert_common_forward.1} parent=1 // pred_check_branch
      %24 = sbr.rel (0) target = $region5
    $region4: #{bert_common_forward.1} parent=1 // pred_region
      _
    $region5: #{bert_common_forward.1} parent=1 // pred_fallthru
      _
    // Predicated region
    $region6: #{bert_common_forward.1} parent=1 // pred_check
      _
    $region7: #{bert_common_forward.1} parent=1 // pred_check_branch
      %26 = sbr.rel (0) target = $region9
    $region8: #{bert_common_forward.1} parent=1 // pred_region
      _
    $region9: #{bert_common_forward.1} parent=1 // pred_fallthru
      _
    // Predicated region
    $region10: #{bert_common_forward.1} parent=1 // pred_check
      _
    $region11: #{bert_common_forward.1} parent=1 // pred_check_branch
      %28 = sbr.rel (0) target = $region13
    $region12: #{bert_common_forward.1} parent=1 // pred_region
      _
    $region13: #{bert_common_forward.1} parent=1 // pred_fallthru
      _
    // Predicated region
    $region14: #{bert_common_forward.1} parent=1 // pred_check
      _
    $region15: #{bert_common_forward.1} parent=1 // pred_check_branch
      %30 = sbr.rel (0) target = $region17
    $region16: #{bert_common_forward.1} parent=1 // pred_region
      _
    $region17: #{bert_common_forward.1} parent=1 // pred_fallthru
      _
    // Predicated region
    $region18: #{bert_common_forward.1} parent=1 // pred_check
      _
    $region19: #{bert_common_forward.1} parent=1 // pred_check_branch
      %32 = sbr.rel (0) target = $region21
    $region20: #{bert_common_forward.1} parent=1 // pred_region
      _
    $region21: #{bert_common_forward.1} parent=1 // pred_fallthru
      _
    // Predicated region
    $region22: #{bert_common_forward.1} parent=1 // pred_check
      _
    $region23: #{bert_common_forward.1} parent=1 // pred_check_branch
      %34 = sbr.rel (0) target = $region25
    $region24: #{bert_common_forward.1} parent=1 // pred_region
      _
    $region25: #{bert_common_forward.1} parent=1 // pred_fallthru
      _
    // Predicated region
    $region26: #{bert_common_forward.1} parent=1 // pred_check
      _
    $region27: #{bert_common_forward.1} parent=1 // pred_check_branch
      %36 = sbr.rel (0) target = $region29
    $region28: #{bert_common_forward.1} parent=1 // pred_region
      _
    $region29: #{bert_common_forward.1} parent=1 // pred_fallthru
      _
    // Predicated region
    $region30: #{bert_common_forward.1} parent=1 // pred_check
      _
    $region31: #{bert_common_forward.1} parent=1 // pred_check_branch
      %38 = sbr.rel (0) target = $region33
    $region32: #{bert_common_forward.1} parent=1 // pred_region
      _
    $region33: #{bert_common_forward.1} parent=1 // pred_fallthru
      _
    // Predicated region
    $region34: #{bert_common_forward.1} parent=1 // pred_check
      _
    $region35: #{bert_common_forward.1} parent=1 // pred_check_branch
      %40 = sbr.rel (0) target = $region37
    $region36: #{bert_common_forward.1} parent=1 // pred_region
      _
    $region37: #{bert_common_forward.1} parent=1 // pred_fallthru
      _
    // Predicated region
    $region38: #{bert_common_forward.1} parent=1 // pred_check
      _
    $region39: #{bert_common_forward.1} parent=1 // pred_check_branch
      %42 = sbr.rel (0) target = $region41
    $region40: #{bert_common_forward.1} parent=1 // pred_region
      _
    $region41: #{bert_common_forward.1} parent=1 // pred_fallthru
      _
    // Predicated region
    $region42: #{bert_common_forward.1} parent=1 // pred_check
      _
    $region43: #{bert_common_forward.1} parent=1 // pred_check_branch
      %44 = sbr.rel (0) target = $region45
    $region44: #{bert_common_forward.1} parent=1 // pred_region
      _
    $region45: #{bert_common_forward.1} parent=1 // pred_fallthru
      _
    // Predicated region
    $region46: #{bert_common_forward.1} parent=1 // pred_check
      _
    $region47: #{bert_common_forward.1} parent=1 // pred_check_branch
      %46 = sbr.rel (0) target = $region49
    $region48: #{bert_common_forward.1} parent=1 // pred_region
      _
    $region49: #{bert_common_forward.1} parent=1 // pred_fallthru
      _
    // Predicated region
    $region50: #{bert_common_forward.1} parent=1 // pred_check
      _
    $region51: #{bert_common_forward.1} parent=1 // pred_check_branch
      %48 = sbr.rel (0) target = $region53
    $region52: #{bert_common_forward.1} parent=1 // pred_region
      _
    $region53: #{bert_common_forward.1} parent=1 // pred_fallthru
      _
    // Predicated region
    $region54: #{bert_common_forward.1} parent=1 // pred_check
      _
    $region55: #{bert_common_forward.1} parent=1 // pred_check_branch
      %50 = sbr.rel (0) target = $region57
    $region56: #{bert_common_forward.1} parent=1 // pred_region
      _
    $region57: #{bert_common_forward.1} parent=1 // pred_fallthru
      _
    // Predicated region
    $region58: #{bert_common_forward.1} parent=1 // pred_check
      _
    $region59: #{bert_common_forward.1} parent=1 // pred_check_branch
      %52 = sbr.rel (0) target = $region61
    $region60: #{bert_common_forward.1} parent=1 // pred_region
      _
    $region61: #{bert_common_forward.1} parent=1 // pred_fallthru
      _
    // Predicated region
    $region62: #{bert_common_forward.1} parent=1 // pred_check
      _
    $region63: #{bert_common_forward.1} parent=1 // pred_check_branch
      %54 = sbr.rel (0) target = $region65
    $region64: #{bert_common_forward.1} parent=1 // pred_region
      _
    $region65: #{bert_common_forward.1} parent=1 // pred_fallthru
      _
    // Predicated region
    $region66: #{bert_common_forward.1} parent=1 // pred_check
      _
    $region67: #{bert_common_forward.1} parent=1 // pred_check_branch
      %56 = sbr.rel (0) target = $region69
    $region68: #{bert_common_forward.1} parent=1 // pred_region
      _
    $region69: #{bert_common_forward.1} parent=1 // pred_fallthru
      _
    %v58 = vld [vmem:[%s3] sm:$0xff]
    %v59 = vld [vmem:[%s3 + $0x8] sm:$0xff]
    %v60 = vld [vmem:[%s0] sm:$0xff]
    %v61 = vld [vmem:[%s0 + $0x8] sm:$0xff]
    %v62 = vld [vmem:[%s1] sm:$0xff]
    %v63 = vadd.f32 %v60, %v62
    %v64 = vadd.f32 %v61, %v62
    %v65 = vld [vmem:[%s2] sm:$0xff]
    %v66 = vld [vmem:[%s2 + $0x8] sm:$0xff]
    %v67 = vadd.f32 %v63, %v65
    %v68 = vadd.f32 %v64, %v66
    %v69 = vld [vmem:[%s4] sm:$0x1]
    %v70 = vld [vmem:[%s5] sm:$0x1]
    %vm71 = vcmask 261120
    %v72 = vsel %vm71, %v67, 0.0
    %73 = vadd.xlane.f32.xlu0 %v72
    %v74 = vpop.xlane.xlu0 %73
    %v75 = vsel %vm71, %v68, 0.0
    %76 = vadd.xlane.f32.xlu0 %v75
    %v77 = vpop.xlane.xlu0 %76
    %v78 = vrcp.pop 32.0
    %v79 = vmul.f32 %v74, %v78
    %v80 = vmul.f32 %v77, %v78
    %v81 = vsub.f32 %v67, %v79
    %v82 = vsub.f32 %v68, %v80
    %v83 = vmul.f32 %v81, %v81
    %v84 = vmul.f32 %v82, %v82
    %v85 = vsel %vm71, %v83, 0.0
    %86 = vadd.xlane.f32.xlu0 %v85
    %v87 = vpop.xlane.xlu0 %86
    %v88 = vsel %vm71, %v84, 0.0
    %89 = vadd.xlane.f32.xlu0 %v88
    %v90 = vpop.xlane.xlu0 %89
    %v91 = vmul.f32 %v87, %v78
    %v92 = vmul.f32 %v90, %v78
    %v93 = vadd.f32 %v91, 1e-12
    %v94 = vadd.f32 %v92, 1e-12
    %v95 = vrsqrt.pop %v93
    %v96 = vrsqrt.pop %v94
    %v97 = vmul.f32 %v81, %v95
    %v98 = vmul.f32 %v82, %v96
    %v100 = vlaneseq
    %v101 = vshrl.u32 %v100, 7
    %v102 = vsub.s32 0, %v101
    %v103 = vrot.slane %v69, %v102
    %v105 = vmul.f32 %v97, %v103
    %v106 = vmul.f32 %v98, %v103
    %v108 = vlaneseq
    %v109 = vshrl.u32 %v108, 7
    %v110 = vsub.s32 0, %v109
    %v111 = vrot.slane %v70, %v110
    %v113 = vadd.f32 %v105, %v111
    %v114 = vadd.f32 %v106, %v111
    %v115 = vpack.c.bf16 %v114, %v113
    %v116 = vld [vmem:[%s6] sm:$0xff]
    %v117 = vld [vmem:[%s6 + $0x8] sm:$0xff]
    %v118 = vld [vmem:[%s6 + $0x10] sm:$0xff]
    %v119 = vld [vmem:[%s6 + $0x18] sm:$0xff]
    %v120 = vld [vmem:[%s7] sm:$0x3]
    %v122 = vlaneseq
    %v123 = vshrl.u32 %v122, 7
    %v124 = vsub.s32 0, %v123
    %v125 = vrot.slane %v120, %v124
    %v126 = vlaneseq
    %v127 = vshrl.u32 %v126, 7
    %v128 = vsub.s32 1, %v127
    %v129 = vrot.slane %v120, %v128
    %v136 = vunpack.c.l.b16 %v116
    %v137 = vunpack.c.h.b16 %v116
    %v138 = vunpack.c.l.b16 %v117
    %v139 = vunpack.c.h.b16 %v117
    %v140 = vunpack.c.l.b16 %v118
    %v141 = vunpack.c.h.b16 %v118
    %v142 = vunpack.c.l.b16 %v119
    %v143 = vunpack.c.h.b16 %v119
    %v144 = vpack.c.b16 %v138, %v136
    %v145 = vpack.c.b16 %v139, %v137
    %v146 = vpack.c.b16 %v142, %v140
    %v147 = vpack.c.b16 %v143, %v141
    %v153 = vsel %vm71, %v115, 0
    %155 = vmatprep.subr.bf16.mxu0 %v145
    %156 = vmatpush1.bf16.msra.mxu0 %v144
    %157 = vmatprep.subr.bf16.mxu0 %v147
    %158 = vmatpush1.bf16.msra.mxu0 %v146
    %159 = vmatprep.subr.bf16.mxu0 0
    %160 = vmatpush1.bf16.msra.mxu0 0
    %161 = vmatprep.subr.bf16.mxu0 0
    %162 = vmatpush1.bf16.msra.mxu0 0
    %163 = vmatprep.subr.bf16.mxu0 0
    %164 = vmatpush1.bf16.msra.mxu0 0
    %165 = vmatprep.subr.bf16.mxu0 0
    %166 = vmatpush1.bf16.msra.mxu0 0
    %167 = vmatprep.subr.bf16.mxu0 0
    %168 = vmatpush1.bf16.msra.mxu0 0
    %169 = vmatprep.subr.bf16.mxu0 0
    %170 = vmatpush1.bf16.msra.mxu0 0
    %171 = vmatprep.subr.bf16.mxu0 0
    %172 = vmatpush1.bf16.msra.mxu0 0
    %173 = vmatprep.subr.bf16.mxu0 0
    %174 = vmatpush1.bf16.msra.mxu0 0
    %175 = vmatprep.subr.bf16.mxu0 0
    %176 = vmatpush1.bf16.msra.mxu0 0
    %177 = vmatprep.subr.bf16.mxu0 0
    %178 = vmatpush1.bf16.msra.mxu0 0
    %179 = vmatprep.subr.bf16.mxu0 0
    %180 = vmatpush1.bf16.msra.mxu0 0
    %181 = vmatprep.subr.bf16.mxu0 0
    %182 = vmatpush1.bf16.msra.mxu0 0
    %183 = vmatprep.subr.bf16.mxu0 0
    %184 = vmatpush1.bf16.msra.mxu0 0
    %185 = vmatprep.subr.bf16.mxu0 0
    %186 = vmatpush1.bf16.msra.mxu0 0
    %187 = vmatprep.mubr.bf16.mxu0 0
    %188 = vmatmul.mubr.bf16.gmra.mrb[0].mxu0 %v153
    %v189 = vpop.f32.mrb[0].mxu0
    %v190 = vadd.f32 %v125, %v189
    %v191 = vpop.f32.mrb[0].mxu0
    %v192 = vadd.f32 %v129, %v191
    %v193 = vpop.f32.mrb[0].mxu0
    %v194 = vadd.f32 %v125, %v193
    %v195 = vpop.f32.mrb[0].mxu0
    %v196 = vadd.f32 %v129, %v195
    %197 = vdwg.mxu0
    %v198 = vpack.c.bf16 %v194, %v190
    %v199 = vpack.c.bf16 %v196, %v192
    %v201 = vunpack.c.l.b16 %v198
    %v202 = vunpack.c.h.b16 %v198
    %v203 = vpack.c.b16 %v201, %v201
    %v204 = vpack.c.b16 %v202, %v202
    %v206 = vunpack.c.l.b16 %v199
    %v207 = vunpack.c.h.b16 %v199
    %v208 = vpack.c.b16 %v206, %v201
    %v209 = vpack.c.b16 %v207, %v202
    %210 = vrot.lane.b32.xlu0 %v203, 96
    %v211 = vpop.permute.xlu0 %210
    %vm212 = vcmask 64512
    %v214 = vsel %vm212, %v203, 0
    %v217 = vsel %vm212, %v211, 0
    %219 = vmatprep.subr.bf16.mxu0 0
    %220 = vmatpush1.bf16.xpose.msra.mxu0 %v217
    %221 = vmatprep.subr.bf16.mxu0 0
    %222 = vmatpush1.bf16.xpose.msra.mxu0 0
    %223 = vmatprep.subr.bf16.mxu0 0
    %224 = vmatpush1.bf16.xpose.msra.mxu0 0
    %225 = vmatprep.subr.bf16.mxu0 0
    %226 = vmatpush1.bf16.xpose.msra.mxu0 0
    %227 = vmatprep.subr.bf16.mxu0 0
    %228 = vmatpush1.bf16.xpose.msra.mxu0 0
    %229 = vmatprep.subr.bf16.mxu0 0
    %230 = vmatpush1.bf16.xpose.msra.mxu0 0
    %231 = vmatprep.subr.bf16.mxu0 0
    %232 = vmatpush1.bf16.xpose.msra.mxu0 0
    %233 = vmatprep.subr.bf16.mxu0 0
    %234 = vmatpush1.bf16.xpose.msra.mxu0 0
    %235 = vmatprep.subr.bf16.mxu0 0
    %236 = vmatpush1.bf16.xpose.msra.mxu0 0
    %237 = vmatprep.subr.bf16.mxu0 0
    %238 = vmatpush1.bf16.xpose.msra.mxu0 0
    %239 = vmatprep.subr.bf16.mxu0 0
    %240 = vmatpush1.bf16.xpose.msra.mxu0 0
    %241 = vmatprep.subr.bf16.mxu0 0
    %242 = vmatpush1.bf16.xpose.msra.mxu0 0
    %243 = vmatprep.subr.bf16.mxu0 0
    %244 = vmatpush1.bf16.xpose.msra.mxu0 0
    %245 = vmatprep.subr.bf16.mxu0 0
    %246 = vmatpush1.bf16.xpose.msra.mxu0 0
    %247 = vmatprep.subr.bf16.mxu0 0
    %248 = vmatpush1.bf16.xpose.msra.mxu0 0
    %249 = vmatprep.subr.bf16.mxu0 0
    %250 = vmatpush1.bf16.xpose.msra.mxu0 0
    %251 = vmatprep.mubr.bf16.mxu0 0
    %252 = vmatmul.mubr.bf16.gmra.mrb[0].mxu0 %v214
    %v253 = vpop.f32.mrb[0].mxu0
    %v254 = vadd.f32 %v58, %v253
    %v255 = vpop.f32.mrb[0].mxu0
    %v256 = vpop.f32.mrb[0].mxu0
    %v257 = vpop.f32.mrb[0].mxu0
    %258 = vdwg.mxu0
    %259 = vrot.lane.b32.xlu0 %v204, 96
    %v260 = vpop.permute.xlu0 %259
    %v262 = vsel %vm212, %v204, 0
    %v265 = vsel %vm212, %v260, 0
    %267 = vmatprep.subr.bf16.mxu0 0
    %268 = vmatpush1.bf16.xpose.msra.mxu0 %v265
    %269 = vmatprep.subr.bf16.mxu0 0
    %270 = vmatpush1.bf16.xpose.msra.mxu0 0
    %271 = vmatprep.subr.bf16.mxu0 0
    %272 = vmatpush1.bf16.xpose.msra.mxu0 0
    %273 = vmatprep.subr.bf16.mxu0 0
    %274 = vmatpush1.bf16.xpose.msra.mxu0 0
    %275 = vmatprep.subr.bf16.mxu0 0
    %276 = vmatpush1.bf16.xpose.msra.mxu0 0
    %277 = vmatprep.subr.bf16.mxu0 0
    %278 = vmatpush1.bf16.xpose.msra.mxu0 0
    %279 = vmatprep.subr.bf16.mxu0 0
    %280 = vmatpush1.bf16.xpose.msra.mxu0 0
    %281 = vmatprep.subr.bf16.mxu0 0
    %282 = vmatpush1.bf16.xpose.msra.mxu0 0
    %283 = vmatprep.subr.bf16.mxu0 0
    %284 = vmatpush1.bf16.xpose.msra.mxu0 0
    %285 = vmatprep.subr.bf16.mxu0 0
    %286 = vmatpush1.bf16.xpose.msra.mxu0 0
    %287 = vmatprep.subr.bf16.mxu0 0
    %288 = vmatpush1.bf16.xpose.msra.mxu0 0
    %289 = vmatprep.subr.bf16.mxu0 0
    %290 = vmatpush1.bf16.xpose.msra.mxu0 0
    %291 = vmatprep.subr.bf16.mxu0 0
    %292 = vmatpush1.bf16.xpose.msra.mxu0 0
    %293 = vmatprep.subr.bf16.mxu0 0
    %294 = vmatpush1.bf16.xpose.msra.mxu0 0
    %295 = vmatprep.subr.bf16.mxu0 0
    %296 = vmatpush1.bf16.xpose.msra.mxu0 0
    %297 = vmatprep.subr.bf16.mxu0 0
    %298 = vmatpush1.bf16.xpose.msra.mxu0 0
    %299 = vmatprep.mubr.bf16.mxu0 0
    %300 = vmatmul.mubr.bf16.gmra.mrb[0].mxu0 %v262
    %v301 = vpop.f32.mrb[0].mxu0
    %v302 = vadd.f32 %v59, %v301
    %v303 = vpop.f32.mrb[0].mxu0
    %v304 = vpop.f32.mrb[0].mxu0
    %v305 = vpop.f32.mrb[0].mxu0
    %306 = vdwg.mxu0
    %v307 = vsel %vm212, %v254, -inf
    %308 = vmax.xlane.f32.xlu0 %v307
    %v309 = vpop.xlane.xlu0 %308
    %v310 = vsel %vm212, %v302, -inf
    %311 = vmax.xlane.f32.xlu0 %v310
    %v312 = vpop.xlane.xlu0 %311
    %v313 = vsub.f32 %v254, %v309
    %v314 = vsub.f32 %v302, %v312
    %v315 = vmul.f32 %v313, 1.442695
    %v316 = vpow.pop %v315
    %v317 = vmul.f32 %v314, 1.442695
    %v318 = vpow.pop %v317
    %v319 = vsel %vm212, %v316, 0.0
    %320 = vadd.xlane.f32.xlu0 %v319
    %v321 = vpop.xlane.xlu0 %320
    %v322 = vsel %vm212, %v318, 0.0
    %323 = vadd.xlane.f32.xlu0 %v322
    %v324 = vpop.xlane.xlu0 %323
    %v325 = vrcp.pop %v321
    %v326 = vrcp.pop %v324
    %v327 = vmul.f32 %v316, %v325
    %v328 = vmul.f32 %v318, %v326
    %v329 = vpack.c.bf16 %v327, %v327
    %v330 = vpack.c.bf16 %v328, %v328
    %331 = vrot.lane.b32.xlu0 %v203, 120
    %v332 = vpop.permute.xlu0 %331
    %333 = vrot.lane.b32.xlu0 %v203, 88
    %v334 = vpop.permute.xlu0 %333
    %v336 = vsel %vm212, %v332, 0
    %v339 = vsel %vm212, %v334, 0
    %341 = vmatprep.subr.bf16.mxu0 0
    %342 = vmatpush1.bf16.xpose.msra.mxu0 %v339
    %343 = vmatprep.subr.bf16.mxu0 0
    %344 = vmatpush1.bf16.xpose.msra.mxu0 0
    %345 = vmatprep.subr.bf16.mxu0 0
    %346 = vmatpush1.bf16.xpose.msra.mxu0 0
    %347 = vmatprep.subr.bf16.mxu0 0
    %348 = vmatpush1.bf16.xpose.msra.mxu0 0
    %349 = vmatprep.subr.bf16.mxu0 0
    %350 = vmatpush1.bf16.xpose.msra.mxu0 0
    %351 = vmatprep.subr.bf16.mxu0 0
    %352 = vmatpush1.bf16.xpose.msra.mxu0 0
    %353 = vmatprep.subr.bf16.mxu0 0
    %354 = vmatpush1.bf16.xpose.msra.mxu0 0
    %355 = vmatprep.subr.bf16.mxu0 0
    %356 = vmatpush1.bf16.xpose.msra.mxu0 0
    %357 = vmatprep.subr.bf16.mxu0 0
    %358 = vmatpush1.bf16.xpose.msra.mxu0 0
    %359 = vmatprep.subr.bf16.mxu0 0
    %360 = vmatpush1.bf16.xpose.msra.mxu0 0
    %361 = vmatprep.subr.bf16.mxu0 0
    %362 = vmatpush1.bf16.xpose.msra.mxu0 0
    %363 = vmatprep.subr.bf16.mxu0 0
    %364 = vmatpush1.bf16.xpose.msra.mxu0 0
    %365 = vmatprep.subr.bf16.mxu0 0
    %366 = vmatpush1.bf16.xpose.msra.mxu0 0
    %367 = vmatprep.subr.bf16.mxu0 0
    %368 = vmatpush1.bf16.xpose.msra.mxu0 0
    %369 = vmatprep.subr.bf16.mxu0 0
    %370 = vmatpush1.bf16.xpose.msra.mxu0 0
    %371 = vmatprep.subr.bf16.mxu0 0
    %372 = vmatpush1.bf16.xpose.msra.mxu0 0
    %373 = vmatprep.mubr.bf16.mxu0 0
    %374 = vmatmul.mubr.bf16.gmra.mrb[0].mxu0 %v336
    %v375 = vpop.f32.mrb[0].mxu0
    %v376 = vadd.f32 %v58, %v375
    %v377 = vpop.f32.mrb[0].mxu0
    %v378 = vpop.f32.mrb[0].mxu0
    %v379 = vpop.f32.mrb[0].mxu0
    %380 = vdwg.mxu0
    %381 = vrot.lane.b32.xlu0 %v204, 120
    %v382 = vpop.permute.xlu0 %381
    %383 = vrot.lane.b32.xlu0 %v204, 88
    %v384 = vpop.permute.xlu0 %383
    %v386 = vsel %vm212, %v382, 0
    %v389 = vsel %vm212, %v384, 0
    %391 = vmatprep.subr.bf16.mxu0 0
    %392 = vmatpush1.bf16.xpose.msra.mxu0 %v389
    %393 = vmatprep.subr.bf16.mxu0 0
    %394 = vmatpush1.bf16.xpose.msra.mxu0 0
    %395 = vmatprep.subr.bf16.mxu0 0
    %396 = vmatpush1.bf16.xpose.msra.mxu0 0
    %397 = vmatprep.subr.bf16.mxu0 0
    %398 = vmatpush1.bf16.xpose.msra.mxu0 0
    %399 = vmatprep.subr.bf16.mxu0 0
    %400 = vmatpush1.bf16.xpose.msra.mxu0 0
    %401 = vmatprep.subr.bf16.mxu0 0
    %402 = vmatpush1.bf16.xpose.msra.mxu0 0
    %403 = vmatprep.subr.bf16.mxu0 0
    %404 = vmatpush1.bf16.xpose.msra.mxu0 0
    %405 = vmatprep.subr.bf16.mxu0 0
    %406 = vmatpush1.bf16.xpose.msra.mxu0 0
    %407 = vmatprep.subr.bf16.mxu0 0
    %408 = vmatpush1.bf16.xpose.msra.mxu0 0
    %409 = vmatprep.subr.bf16.mxu0 0
    %410 = vmatpush1.bf16.xpose.msra.mxu0 0
    %411 = vmatprep.subr.bf16.mxu0 0
    %412 = vmatpush1.bf16.xpose.msra.mxu0 0
    %413 = vmatprep.subr.bf16.mxu0 0
    %414 = vmatpush1.bf16.xpose.msra.mxu0 0
    %415 = vmatprep.subr.bf16.mxu0 0
    %416 = vmatpush1.bf16.xpose.msra.mxu0 0
    %417 = vmatprep.subr.bf16.mxu0 0
    %418 = vmatpush1.bf16.xpose.msra.mxu0 0
    %419 = vmatprep.subr.bf16.mxu0 0
    %420 = vmatpush1.bf16.xpose.msra.mxu0 0
    %421 = vmatprep.subr.bf16.mxu0 0
    %422 = vmatpush1.bf16.xpose.msra.mxu0 0
    %423 = vmatprep.mubr.bf16.mxu0 0
    %424 = vmatmul.mubr.bf16.gmra.mrb[0].mxu0 %v386
    %v425 = vpop.f32.mrb[0].mxu0
    %v426 = vadd.f32 %v59, %v425
    %v427 = vpop.f32.mrb[0].mxu0
    %v428 = vpop.f32.mrb[0].mxu0
    %v429 = vpop.f32.mrb[0].mxu0
    %430 = vdwg.mxu0
    %v431 = vsel %vm212, %v376, -inf
    %432 = vmax.xlane.f32.xlu0 %v431
    %v433 = vpop.xlane.xlu0 %432
    %v434 = vsel %vm212, %v426, -inf
    %435 = vmax.xlane.f32.xlu0 %v434
    %v436 = vpop.xlane.xlu0 %435
    %v437 = vsub.f32 %v376, %v433
    %v438 = vsub.f32 %v426, %v436
    %v439 = vmul.f32 %v437, 1.442695
    %v440 = vpow.pop %v439
    %v441 = vmul.f32 %v438, 1.442695
    %v442 = vpow.pop %v441
    %v443 = vsel %vm212, %v440, 0.0
    %444 = vadd.xlane.f32.xlu0 %v443
    %v445 = vpop.xlane.xlu0 %444
    %v446 = vsel %vm212, %v442, 0.0
    %447 = vadd.xlane.f32.xlu0 %v446
    %v448 = vpop.xlane.xlu0 %447
    %v449 = vrcp.pop %v445
    %v450 = vrcp.pop %v448
    %v451 = vmul.f32 %v440, %v449
    %v452 = vmul.f32 %v442, %v450
    %v453 = vpack.c.bf16 %v451, %v451
    %v454 = vpack.c.bf16 %v452, %v452
    %455 = vrot.lane.b32.xlu0 %v203, 32
    %v456 = vpop.permute.xlu0 %455
    %v458 = vsel %vm212, %v453, 0
    %vm460 = vcmask 1043456
    %v462 = vsel %vm460, %v456, 0
    %464 = vmatprep.subr.bf16.mxu0 0
    %465 = vmatpush1.bf16.msra.mxu0 %v462
    %466 = vmatprep.subr.bf16.mxu0 0
    %467 = vmatpush1.bf16.msra.mxu0 0
    %468 = vmatprep.subr.bf16.mxu0 0
    %469 = vmatpush1.bf16.msra.mxu0 0
    %470 = vmatprep.subr.bf16.mxu0 0
    %471 = vmatpush1.bf16.msra.mxu0 0
    %472 = vmatprep.subr.bf16.mxu0 0
    %473 = vmatpush1.bf16.msra.mxu0 0
    %474 = vmatprep.subr.bf16.mxu0 0
    %475 = vmatpush1.bf16.msra.mxu0 0
    %476 = vmatprep.subr.bf16.mxu0 0
    %477 = vmatpush1.bf16.msra.mxu0 0
    %478 = vmatprep.subr.bf16.mxu0 0
    %479 = vmatpush1.bf16.msra.mxu0 0
    %480 = vmatprep.subr.bf16.mxu0 0
    %481 = vmatpush1.bf16.msra.mxu0 0
    %482 = vmatprep.subr.bf16.mxu0 0
    %483 = vmatpush1.bf16.msra.mxu0 0
    %484 = vmatprep.subr.bf16.mxu0 0
    %485 = vmatpush1.bf16.msra.mxu0 0
    %486 = vmatprep.subr.bf16.mxu0 0
    %487 = vmatpush1.bf16.msra.mxu0 0
    %488 = vmatprep.subr.bf16.mxu0 0
    %489 = vmatpush1.bf16.msra.mxu0 0
    %490 = vmatprep.subr.bf16.mxu0 0
    %491 = vmatpush1.bf16.msra.mxu0 0
    %492 = vmatprep.subr.bf16.mxu0 0
    %493 = vmatpush1.bf16.msra.mxu0 0
    %494 = vmatprep.subr.bf16.mxu0 0
    %495 = vmatpush1.bf16.msra.mxu0 0
    %496 = vmatprep.mubr.bf16.mxu0 0
    %497 = vmatmul.mubr.bf16.gmra.mrb[0].mxu0 %v458
    %v498 = vpop.f32.mrb[0].mxu0
    %v499 = vadd.f32 0.0, %v498
    %v500 = vpop.f32.mrb[0].mxu0
    %v501 = vpop.f32.mrb[0].mxu0
    %v502 = vpop.f32.mrb[0].mxu0
    %503 = vdwg.mxu0
    %504 = vrot.lane.b32.xlu0 %v204, 32
    %v505 = vpop.permute.xlu0 %504
    %v507 = vsel %vm212, %v454, 0
    %v510 = vsel %vm460, %v505, 0
    %512 = vmatprep.subr.bf16.mxu0 0
    %513 = vmatpush1.bf16.msra.mxu0 %v510
    %514 = vmatprep.subr.bf16.mxu0 0
    %515 = vmatpush1.bf16.msra.mxu0 0
    %516 = vmatprep.subr.bf16.mxu0 0
    %517 = vmatpush1.bf16.msra.mxu0 0
    %518 = vmatprep.subr.bf16.mxu0 0
    %519 = vmatpush1.bf16.msra.mxu0 0
    %520 = vmatprep.subr.bf16.mxu0 0
    %521 = vmatpush1.bf16.msra.mxu0 0
    %522 = vmatprep.subr.bf16.mxu0 0
    %523 = vmatpush1.bf16.msra.mxu0 0
    %524 = vmatprep.subr.bf16.mxu0 0
    %525 = vmatpush1.bf16.msra.mxu0 0
    %526 = vmatprep.subr.bf16.mxu0 0
    %527 = vmatpush1.bf16.msra.mxu0 0
    %528 = vmatprep.subr.bf16.mxu0 0
    %529 = vmatpush1.bf16.msra.mxu0 0
    %530 = vmatprep.subr.bf16.mxu0 0
    %531 = vmatpush1.bf16.msra.mxu0 0
    %532 = vmatprep.subr.bf16.mxu0 0
    %533 = vmatpush1.bf16.msra.mxu0 0
    %534 = vmatprep.subr.bf16.mxu0 0
    %535 = vmatpush1.bf16.msra.mxu0 0
    %536 = vmatprep.subr.bf16.mxu0 0
    %537 = vmatpush1.bf16.msra.mxu0 0
    %538 = vmatprep.subr.bf16.mxu0 0
    %539 = vmatpush1.bf16.msra.mxu0 0
    %540 = vmatprep.subr.bf16.mxu0 0
    %541 = vmatpush1.bf16.msra.mxu0 0
    %542 = vmatprep.subr.bf16.mxu0 0
    %543 = vmatpush1.bf16.msra.mxu0 0
    %544 = vmatprep.mubr.bf16.mxu0 0
    %545 = vmatmul.mubr.bf16.gmra.mrb[0].mxu0 %v507
    %v546 = vpop.f32.mrb[0].mxu0
    %v547 = vadd.f32 0.0, %v546
    %v548 = vpop.f32.mrb[0].mxu0
    %v549 = vpop.f32.mrb[0].mxu0
    %v550 = vpop.f32.mrb[0].mxu0
    %551 = vdwg.mxu0
    %552 = vrot.lane.b32.xlu0 %v203, 64
    %v553 = vpop.permute.xlu0 %552
    %v555 = vsel %vm212, %v329, 0
    %v558 = vsel %vm460, %v553, 0
    %560 = vmatprep.subr.bf16.mxu0 0
    %561 = vmatpush1.bf16.msra.mxu0 %v558
    %562 = vmatprep.subr.bf16.mxu0 0
    %563 = vmatpush1.bf16.msra.mxu0 0
    %564 = vmatprep.subr.bf16.mxu0 0
    %565 = vmatpush1.bf16.msra.mxu0 0
    %566 = vmatprep.subr.bf16.mxu0 0
    %567 = vmatpush1.bf16.msra.mxu0 0
    %568 = vmatprep.subr.bf16.mxu0 0
    %569 = vmatpush1.bf16.msra.mxu0 0
    %570 = vmatprep.subr.bf16.mxu0 0
    %571 = vmatpush1.bf16.msra.mxu0 0
    %572 = vmatprep.subr.bf16.mxu0 0
    %573 = vmatpush1.bf16.msra.mxu0 0
    %574 = vmatprep.subr.bf16.mxu0 0
    %575 = vmatpush1.bf16.msra.mxu0 0
    %576 = vmatprep.subr.bf16.mxu0 0
    %577 = vmatpush1.bf16.msra.mxu0 0
    %578 = vmatprep.subr.bf16.mxu0 0
    %579 = vmatpush1.bf16.msra.mxu0 0
    %580 = vmatprep.subr.bf16.mxu0 0
    %581 = vmatpush1.bf16.msra.mxu0 0
    %582 = vmatprep.subr.bf16.mxu0 0
    %583 = vmatpush1.bf16.msra.mxu0 0
    %584 = vmatprep.subr.bf16.mxu0 0
    %585 = vmatpush1.bf16.msra.mxu0 0
    %586 = vmatprep.subr.bf16.mxu0 0
    %587 = vmatpush1.bf16.msra.mxu0 0
    %588 = vmatprep.subr.bf16.mxu0 0
    %589 = vmatpush1.bf16.msra.mxu0 0
    %590 = vmatprep.subr.bf16.mxu0 0
    %591 = vmatpush1.bf16.msra.mxu0 0
    %592 = vmatprep.mubr.bf16.mxu0 0
    %593 = vmatmul.mubr.bf16.gmra.mrb[0].mxu0 %v555
    %v594 = vpop.f32.mrb[0].mxu0
    %v595 = vadd.f32 %v499, %v594
    %v596 = vpop.f32.mrb[0].mxu0
    %v597 = vpop.f32.mrb[0].mxu0
    %v598 = vpop.f32.mrb[0].mxu0
    %599 = vdwg.mxu0
    %600 = vrot.lane.b32.xlu0 %v204, 64
    %v601 = vpop.permute.xlu0 %600
    %v603 = vsel %vm212, %v330, 0
    %v606 = vsel %vm460, %v601, 0
    %608 = vmatprep.subr.bf16.mxu0 0
    %609 = vmatpush1.bf16.msra.mxu0 %v606
    %610 = vmatprep.subr.bf16.mxu0 0
    %611 = vmatpush1.bf16.msra.mxu0 0
    %612 = vmatprep.subr.bf16.mxu0 0
    %613 = vmatpush1.bf16.msra.mxu0 0
    %614 = vmatprep.subr.bf16.mxu0 0
    %615 = vmatpush1.bf16.msra.mxu0 0
    %616 = vmatprep.subr.bf16.mxu0 0
    %617 = vmatpush1.bf16.msra.mxu0 0
    %618 = vmatprep.subr.bf16.mxu0 0
    %619 = vmatpush1.bf16.msra.mxu0 0
    %620 = vmatprep.subr.bf16.mxu0 0
    %621 = vmatpush1.bf16.msra.mxu0 0
    %622 = vmatprep.subr.bf16.mxu0 0
    %623 = vmatpush1.bf16.msra.mxu0 0
    %624 = vmatprep.subr.bf16.mxu0 0
    %625 = vmatpush1.bf16.msra.mxu0 0
    %626 = vmatprep.subr.bf16.mxu0 0
    %627 = vmatpush1.bf16.msra.mxu0 0
    %628 = vmatprep.subr.bf16.mxu0 0
    %629 = vmatpush1.bf16.msra.mxu0 0
    %630 = vmatprep.subr.bf16.mxu0 0
    %631 = vmatpush1.bf16.msra.mxu0 0
    %632 = vmatprep.subr.bf16.mxu0 0
    %633 = vmatpush1.bf16.msra.mxu0 0
    %634 = vmatprep.subr.bf16.mxu0 0
    %635 = vmatpush1.bf16.msra.mxu0 0
    %636 = vmatprep.subr.bf16.mxu0 0
    %637 = vmatpush1.bf16.msra.mxu0 0
    %638 = vmatprep.subr.bf16.mxu0 0
    %639 = vmatpush1.bf16.msra.mxu0 0
    %640 = vmatprep.mubr.bf16.mxu0 0
    %641 = vmatmul.mubr.bf16.gmra.mrb[0].mxu0 %v603
    %v642 = vpop.f32.mrb[0].mxu0
    %v643 = vadd.f32 %v547, %v642
    %v644 = vpop.f32.mrb[0].mxu0
    %v645 = vpop.f32.mrb[0].mxu0
    %v646 = vpop.f32.mrb[0].mxu0
    %647 = vdwg.mxu0
    %648 = vrot.lane.b32.xlu0 %v203, 112
    %v649 = vpop.permute.xlu0 %648
    %650 = vrot.lane.b32.xlu0 %v203, 80
    %v651 = vpop.permute.xlu0 %650
    %v653 = vsel %vm212, %v649, 0
    %v656 = vsel %vm212, %v651, 0
    %658 = vmatprep.subr.bf16.mxu0 0
    %659 = vmatpush1.bf16.xpose.msra.mxu0 %v656
    %660 = vmatprep.subr.bf16.mxu0 0
    %661 = vmatpush1.bf16.xpose.msra.mxu0 0
    %662 = vmatprep.subr.bf16.mxu0 0
    %663 = vmatpush1.bf16.xpose.msra.mxu0 0
    %664 = vmatprep.subr.bf16.mxu0 0
    %665 = vmatpush1.bf16.xpose.msra.mxu0 0
    %666 = vmatprep.subr.bf16.mxu0 0
    %667 = vmatpush1.bf16.xpose.msra.mxu0 0
    %668 = vmatprep.subr.bf16.mxu0 0
    %669 = vmatpush1.bf16.xpose.msra.mxu0 0
    %670 = vmatprep.subr.bf16.mxu0 0
    %671 = vmatpush1.bf16.xpose.msra.mxu0 0
    %672 = vmatprep.subr.bf16.mxu0 0
    %673 = vmatpush1.bf16.xpose.msra.mxu0 0
    %674 = vmatprep.subr.bf16.mxu0 0
    %675 = vmatpush1.bf16.xpose.msra.mxu0 0
    %676 = vmatprep.subr.bf16.mxu0 0
    %677 = vmatpush1.bf16.xpose.msra.mxu0 0
    %678 = vmatprep.subr.bf16.mxu0 0
    %679 = vmatpush1.bf16.xpose.msra.mxu0 0
    %680 = vmatprep.subr.bf16.mxu0 0
    %681 = vmatpush1.bf16.xpose.msra.mxu0 0
    %682 = vmatprep.subr.bf16.mxu0 0
    %683 = vmatpush1.bf16.xpose.msra.mxu0 0
    %684 = vmatprep.subr.bf16.mxu0 0
    %685 = vmatpush1.bf16.xpose.msra.mxu0 0
    %686 = vmatprep.subr.bf16.mxu0 0
    %687 = vmatpush1.bf16.xpose.msra.mxu0 0
    %688 = vmatprep.subr.bf16.mxu0 0
    %689 = vmatpush1.bf16.xpose.msra.mxu0 0
    %690 = vmatprep.mubr.bf16.mxu0 0
    %691 = vmatmul.mubr.bf16.gmra.mrb[0].mxu0 %v653
    %v692 = vpop.f32.mrb[0].mxu0
    %v693 = vadd.f32 %v58, %v692
    %v694 = vpop.f32.mrb[0].mxu0
    %v695 = vpop.f32.mrb[0].mxu0
    %v696 = vpop.f32.mrb[0].mxu0
    %697 = vdwg.mxu0
    %698 = vrot.lane.b32.xlu0 %v204, 112
    %v699 = vpop.permute.xlu0 %698
    %700 = vrot.lane.b32.xlu0 %v204, 80
    %v701 = vpop.permute.xlu0 %700
    %v703 = vsel %vm212, %v699, 0
    %v706 = vsel %vm212, %v701, 0
    %708 = vmatprep.subr.bf16.mxu0 0
    %709 = vmatpush1.bf16.xpose.msra.mxu0 %v706
    %710 = vmatprep.subr.bf16.mxu0 0
    %711 = vmatpush1.bf16.xpose.msra.mxu0 0
    %712 = vmatprep.subr.bf16.mxu0 0
    %713 = vmatpush1.bf16.xpose.msra.mxu0 0
    %714 = vmatprep.subr.bf16.mxu0 0
    %715 = vmatpush1.bf16.xpose.msra.mxu0 0
    %716 = vmatprep.subr.bf16.mxu0 0
    %717 = vmatpush1.bf16.xpose.msra.mxu0 0
    %718 = vmatprep.subr.bf16.mxu0 0
    %719 = vmatpush1.bf16.xpose.msra.mxu0 0
    %720 = vmatprep.subr.bf16.mxu0 0
    %721 = vmatpush1.bf16.xpose.msra.mxu0 0
    %722 = vmatprep.subr.bf16.mxu0 0
    %723 = vmatpush1.bf16.xpose.msra.mxu0 0
    %724 = vmatprep.subr.bf16.mxu0 0
    %725 = vmatpush1.bf16.xpose.msra.mxu0 0
    %726 = vmatprep.subr.bf16.mxu0 0
    %727 = vmatpush1.bf16.xpose.msra.mxu0 0
    %728 = vmatprep.subr.bf16.mxu0 0
    %729 = vmatpush1.bf16.xpose.msra.mxu0 0
    %730 = vmatprep.subr.bf16.mxu0 0
    %731 = vmatpush1.bf16.xpose.msra.mxu0 0
    %732 = vmatprep.subr.bf16.mxu0 0
    %733 = vmatpush1.bf16.xpose.msra.mxu0 0
    %734 = vmatprep.subr.bf16.mxu0 0
    %735 = vmatpush1.bf16.xpose.msra.mxu0 0
    %736 = vmatprep.subr.bf16.mxu0 0
    %737 = vmatpush1.bf16.xpose.msra.mxu0 0
    %738 = vmatprep.subr.bf16.mxu0 0
    %739 = vmatpush1.bf16.xpose.msra.mxu0 0
    %740 = vmatprep.mubr.bf16.mxu0 0
    %741 = vmatmul.mubr.bf16.gmra.mrb[0].mxu0 %v703
    %v742 = vpop.f32.mrb[0].mxu0
    %v743 = vadd.f32 %v59, %v742
    %v744 = vpop.f32.mrb[0].mxu0
    %v745 = vpop.f32.mrb[0].mxu0
    %v746 = vpop.f32.mrb[0].mxu0
    %747 = vdwg.mxu0
    %v748 = vsel %vm212, %v693, -inf
    %749 = vmax.xlane.f32.xlu0 %v748
    %v750 = vpop.xlane.xlu0 %749
    %v751 = vsel %vm212, %v743, -inf
    %752 = vmax.xlane.f32.xlu0 %v751
    %v753 = vpop.xlane.xlu0 %752
    %v754 = vsub.f32 %v693, %v750
    %v755 = vsub.f32 %v743, %v753
    %v756 = vmul.f32 %v754, 1.442695
    %v757 = vpow.pop %v756
    %v758 = vmul.f32 %v755, 1.442695
    %v759 = vpow.pop %v758
    %v760 = vsel %vm212, %v757, 0.0
    %761 = vadd.xlane.f32.xlu0 %v760
    %v762 = vpop.xlane.xlu0 %761
    %v763 = vsel %vm212, %v759, 0.0
    %764 = vadd.xlane.f32.xlu0 %v763
    %v765 = vpop.xlane.xlu0 %764
    %v766 = vrcp.pop %v762
    %v767 = vrcp.pop %v765
    %v768 = vmul.f32 %v757, %v766
    %v769 = vmul.f32 %v759, %v767
    %v770 = vpack.c.bf16 %v768, %v768
    %v771 = vpack.c.bf16 %v769, %v769
    %v772 = vrot.slane %v208, 4
    %v774 = vsel %vm212, %v770, 0
    %v777 = vsel %vm460, %v772, 0
    %779 = vmatprep.subr.bf16.mxu0 0
    %780 = vmatpush1.bf16.msra.mxu0 %v777
    %781 = vmatprep.subr.bf16.mxu0 0
    %782 = vmatpush1.bf16.msra.mxu0 0
    %783 = vmatprep.subr.bf16.mxu0 0
    %784 = vmatpush1.bf16.msra.mxu0 0
    %785 = vmatprep.subr.bf16.mxu0 0
    %786 = vmatpush1.bf16.msra.mxu0 0
    %787 = vmatprep.subr.bf16.mxu0 0
    %788 = vmatpush1.bf16.msra.mxu0 0
    %789 = vmatprep.subr.bf16.mxu0 0
    %790 = vmatpush1.bf16.msra.mxu0 0
    %791 = vmatprep.subr.bf16.mxu0 0
    %792 = vmatpush1.bf16.msra.mxu0 0
    %793 = vmatprep.subr.bf16.mxu0 0
    %794 = vmatpush1.bf16.msra.mxu0 0
    %795 = vmatprep.subr.bf16.mxu0 0
    %796 = vmatpush1.bf16.msra.mxu0 0
    %797 = vmatprep.subr.bf16.mxu0 0
    %798 = vmatpush1.bf16.msra.mxu0 0
    %799 = vmatprep.subr.bf16.mxu0 0
    %800 = vmatpush1.bf16.msra.mxu0 0
    %801 = vmatprep.subr.bf16.mxu0 0
    %802 = vmatpush1.bf16.msra.mxu0 0
    %803 = vmatprep.subr.bf16.mxu0 0
    %804 = vmatpush1.bf16.msra.mxu0 0
    %805 = vmatprep.subr.bf16.mxu0 0
    %806 = vmatpush1.bf16.msra.mxu0 0
    %807 = vmatprep.subr.bf16.mxu0 0
    %808 = vmatpush1.bf16.msra.mxu0 0
    %809 = vmatprep.subr.bf16.mxu0 0
    %810 = vmatpush1.bf16.msra.mxu0 0
    %811 = vmatprep.mubr.bf16.mxu0 0
    %812 = vmatmul.mubr.bf16.gmra.mrb[0].mxu0 %v774
    %v813 = vpop.f32.mrb[0].mxu0
    %v814 = vadd.f32 0.0, %v813
    %v815 = vpop.f32.mrb[0].mxu0
    %v816 = vpop.f32.mrb[0].mxu0
    %v817 = vpop.f32.mrb[0].mxu0
    %818 = vdwg.mxu0
    %v819 = vrot.slane %v209, 4
    %v821 = vsel %vm212, %v771, 0
    %v824 = vsel %vm460, %v819, 0
    %826 = vmatprep.subr.bf16.mxu0 0
    %827 = vmatpush1.bf16.msra.mxu0 %v824
    %828 = vmatprep.subr.bf16.mxu0 0
    %829 = vmatpush1.bf16.msra.mxu0 0
    %830 = vmatprep.subr.bf16.mxu0 0
    %831 = vmatpush1.bf16.msra.mxu0 0
    %832 = vmatprep.subr.bf16.mxu0 0
    %833 = vmatpush1.bf16.msra.mxu0 0
    %834 = vmatprep.subr.bf16.mxu0 0
    %835 = vmatpush1.bf16.msra.mxu0 0
    %836 = vmatprep.subr.bf16.mxu0 0
    %837 = vmatpush1.bf16.msra.mxu0 0
    %838 = vmatprep.subr.bf16.mxu0 0
    %839 = vmatpush1.bf16.msra.mxu0 0
    %840 = vmatprep.subr.bf16.mxu0 0
    %841 = vmatpush1.bf16.msra.mxu0 0
    %842 = vmatprep.subr.bf16.mxu0 0
    %843 = vmatpush1.bf16.msra.mxu0 0
    %844 = vmatprep.subr.bf16.mxu0 0
    %845 = vmatpush1.bf16.msra.mxu0 0
    %846 = vmatprep.subr.bf16.mxu0 0
    %847 = vmatpush1.bf16.msra.mxu0 0
    %848 = vmatprep.subr.bf16.mxu0 0
    %849 = vmatpush1.bf16.msra.mxu0 0
    %850 = vmatprep.subr.bf16.mxu0 0
    %851 = vmatpush1.bf16.msra.mxu0 0
    %852 = vmatprep.subr.bf16.mxu0 0
    %853 = vmatpush1.bf16.msra.mxu0 0
    %854 = vmatprep.subr.bf16.mxu0 0
    %855 = vmatpush1.bf16.msra.mxu0 0
    %856 = vmatprep.subr.bf16.mxu0 0
    %857 = vmatpush1.bf16.msra.mxu0 0
    %858 = vmatprep.mubr.bf16.mxu0 0
    %859 = vmatmul.mubr.bf16.gmra.mrb[0].mxu0 %v821
    %v860 = vpop.f32.mrb[0].mxu0
    %v861 = vadd.f32 0.0, %v860
    %v862 = vpop.f32.mrb[0].mxu0
    %v863 = vpop.f32.mrb[0].mxu0
    %v864 = vpop.f32.mrb[0].mxu0
    %865 = vdwg.mxu0
    %v866 = vadd.f32 %v595, %v814
    %v867 = vadd.f32 %v643, %v861
    %868 = vrot.lane.b32.xlu0 %v203, 104
    %v869 = vpop.permute.xlu0 %868
    %870 = vrot.lane.b32.xlu0 %v203, 72
    %v871 = vpop.permute.xlu0 %870
    %v873 = vsel %vm212, %v869, 0
    %v876 = vsel %vm212, %v871, 0
    %878 = vmatprep.subr.bf16.mxu0 0
    %879 = vmatpush1.bf16.xpose.msra.mxu0 %v876
    %880 = vmatprep.subr.bf16.mxu0 0
    %881 = vmatpush1.bf16.xpose.msra.mxu0 0
    %882 = vmatprep.subr.bf16.mxu0 0
    %883 = vmatpush1.bf16.xpose.msra.mxu0 0
    %884 = vmatprep.subr.bf16.mxu0 0
    %885 = vmatpush1.bf16.xpose.msra.mxu0 0
    %886 = vmatprep.subr.bf16.mxu0 0
    %887 = vmatpush1.bf16.xpose.msra.mxu0 0
    %888 = vmatprep.subr.bf16.mxu0 0
    %889 = vmatpush1.bf16.xpose.msra.mxu0 0
    %890 = vmatprep.subr.bf16.mxu0 0
    %891 = vmatpush1.bf16.xpose.msra.mxu0 0
    %892 = vmatprep.subr.bf16.mxu0 0
    %893 = vmatpush1.bf16.xpose.msra.mxu0 0
    %894 = vmatprep.subr.bf16.mxu0 0
    %895 = vmatpush1.bf16.xpose.msra.mxu0 0
    %896 = vmatprep.subr.bf16.mxu0 0
    %897 = vmatpush1.bf16.xpose.msra.mxu0 0
    %898 = vmatprep.subr.bf16.mxu0 0
    %899 = vmatpush1.bf16.xpose.msra.mxu0 0
    %900 = vmatprep.subr.bf16.mxu0 0
    %901 = vmatpush1.bf16.xpose.msra.mxu0 0
    %902 = vmatprep.subr.bf16.mxu0 0
    %903 = vmatpush1.bf16.xpose.msra.mxu0 0
    %904 = vmatprep.subr.bf16.mxu0 0
    %905 = vmatpush1.bf16.xpose.msra.mxu0 0
    %906 = vmatprep.subr.bf16.mxu0 0
    %907 = vmatpush1.bf16.xpose.msra.mxu0 0
    %908 = vmatprep.subr.bf16.mxu0 0
    %909 = vmatpush1.bf16.xpose.msra.mxu0 0
    %910 = vmatprep.mubr.bf16.mxu0 0
    %911 = vmatmul.mubr.bf16.gmra.mrb[0].mxu0 %v873
    %v912 = vpop.f32.mrb[0].mxu0
    %v913 = vadd.f32 %v58, %v912
    %v914 = vpop.f32.mrb[0].mxu0
    %v915 = vpop.f32.mrb[0].mxu0
    %v916 = vpop.f32.mrb[0].mxu0
    %917 = vdwg.mxu0
    %918 = vrot.lane.b32.xlu0 %v204, 104
    %v919 = vpop.permute.xlu0 %918
    %920 = vrot.lane.b32.xlu0 %v204, 72
    %v921 = vpop.permute.xlu0 %920
    %v923 = vsel %vm212, %v919, 0
    %v926 = vsel %vm212, %v921, 0
    %928 = vmatprep.subr.bf16.mxu0 0
    %929 = vmatpush1.bf16.xpose.msra.mxu0 %v926
    %930 = vmatprep.subr.bf16.mxu0 0
    %931 = vmatpush1.bf16.xpose.msra.mxu0 0
    %932 = vmatprep.subr.bf16.mxu0 0
    %933 = vmatpush1.bf16.xpose.msra.mxu0 0
    %934 = vmatprep.subr.bf16.mxu0 0
    %935 = vmatpush1.bf16.xpose.msra.mxu0 0
    %936 = vmatprep.subr.bf16.mxu0 0
    %937 = vmatpush1.bf16.xpose.msra.mxu0 0
    %938 = vmatprep.subr.bf16.mxu0 0
    %939 = vmatpush1.bf16.xpose.msra.mxu0 0
    %940 = vmatprep.subr.bf16.mxu0 0
    %941 = vmatpush1.bf16.xpose.msra.mxu0 0
    %942 = vmatprep.subr.bf16.mxu0 0
    %943 = vmatpush1.bf16.xpose.msra.mxu0 0
    %944 = vmatprep.subr.bf16.mxu0 0
    %945 = vmatpush1.bf16.xpose.msra.mxu0 0
    %946 = vmatprep.subr.bf16.mxu0 0
    %947 = vmatpush1.bf16.xpose.msra.mxu0 0
    %948 = vmatprep.subr.bf16.mxu0 0
    %949 = vmatpush1.bf16.xpose.msra.mxu0 0
    %950 = vmatprep.subr.bf16.mxu0 0
    %951 = vmatpush1.bf16.xpose.msra.mxu0 0
    %952 = vmatprep.subr.bf16.mxu0 0
    %953 = vmatpush1.bf16.xpose.msra.mxu0 0
    %954 = vmatprep.subr.bf16.mxu0 0
    %955 = vmatpush1.bf16.xpose.msra.mxu0 0
    %956 = vmatprep.subr.bf16.mxu0 0
    %957 = vmatpush1.bf16.xpose.msra.mxu0 0
    %958 = vmatprep.subr.bf16.mxu0 0
    %959 = vmatpush1.bf16.xpose.msra.mxu0 0
    %960 = vmatprep.mubr.bf16.mxu0 0
    %961 = vmatmul.mubr.bf16.gmra.mrb[0].mxu0 %v923
    %v962 = vpop.f32.mrb[0].mxu0
    %v963 = vadd.f32 %v59, %v962
    %v964 = vpop.f32.mrb[0].mxu0
    %v965 = vpop.f32.mrb[0].mxu0
    %v966 = vpop.f32.mrb[0].mxu0
    %967 = vdwg.mxu0
    %v968 = vsel %vm212, %v913, -inf
    %969 = vmax.xlane.f32.xlu0 %v968
    %v970 = vpop.xlane.xlu0 %969
    %v971 = vsel %vm212, %v963, -inf
    %972 = vmax.xlane.f32.xlu0 %v971
    %v973 = vpop.xlane.xlu0 %972
    %v974 = vsub.f32 %v913, %v970
    %v975 = vsub.f32 %v963, %v973
    %v976 = vmul.f32 %v974, 1.442695
    %v977 = vpow.pop %v976
    %v978 = vmul.f32 %v975, 1.442695
    %v979 = vpow.pop %v978
    %v980 = vsel %vm212, %v977, 0.0
    %981 = vadd.xlane.f32.xlu0 %v980
    %v982 = vpop.xlane.xlu0 %981
    %v983 = vsel %vm212, %v979, 0.0
    %984 = vadd.xlane.f32.xlu0 %v983
    %v985 = vpop.xlane.xlu0 %984
    %v986 = vrcp.pop %v982
    %v987 = vrcp.pop %v985
    %v988 = vmul.f32 %v977, %v986
    %v989 = vmul.f32 %v979, %v987
    %v990 = vpack.c.bf16 %v988, %v988
    %v991 = vpack.c.bf16 %v989, %v989
    %992 = vrot.lane.b32.xlu0 %v208, 96
    %v993 = vpop.permute.xlu0 %992
    %v994 = vrot.slane %v993, 4
    %v996 = vsel %vm212, %v990, 0
    %v999 = vsel %vm460, %v994, 0
    %1001 = vmatprep.subr.bf16.mxu0 0
    %1002 = vmatpush1.bf16.msra.mxu0 %v999
    %1003 = vmatprep.subr.bf16.mxu0 0
    %1004 = vmatpush1.bf16.msra.mxu0 0
    %1005 = vmatprep.subr.bf16.mxu0 0
    %1006 = vmatpush1.bf16.msra.mxu0 0
    %1007 = vmatprep.subr.bf16.mxu0 0
    %1008 = vmatpush1.bf16.msra.mxu0 0
    %1009 = vmatprep.subr.bf16.mxu0 0
    %1010 = vmatpush1.bf16.msra.mxu0 0
    %1011 = vmatprep.subr.bf16.mxu0 0
    %1012 = vmatpush1.bf16.msra.mxu0 0
    %1013 = vmatprep.subr.bf16.mxu0 0
    %1014 = vmatpush1.bf16.msra.mxu0 0
    %1015 = vmatprep.subr.bf16.mxu0 0
    %1016 = vmatpush1.bf16.msra.mxu0 0
    %1017 = vmatprep.subr.bf16.mxu0 0
    %1018 = vmatpush1.bf16.msra.mxu0 0
    %1019 = vmatprep.subr.bf16.mxu0 0
    %1020 = vmatpush1.bf16.msra.mxu0 0
    %1021 = vmatprep.subr.bf16.mxu0 0
    %1022 = vmatpush1.bf16.msra.mxu0 0
    %1023 = vmatprep.subr.bf16.mxu0 0
    %1024 = vmatpush1.bf16.msra.mxu0 0
    %1025 = vmatprep.subr.bf16.mxu0 0
    %1026 = vmatpush1.bf16.msra.mxu0 0
    %1027 = vmatprep.subr.bf16.mxu0 0
    %1028 = vmatpush1.bf16.msra.mxu0 0
    %1029 = vmatprep.subr.bf16.mxu0 0
    %1030 = vmatpush1.bf16.msra.mxu0 0
    %1031 = vmatprep.subr.bf16.mxu0 0
    %1032 = vmatpush1.bf16.msra.mxu0 0
    %1033 = vmatprep.mubr.bf16.mxu0 0
    %1034 = vmatmul.mubr.bf16.gmra.mrb[0].mxu0 %v996
    %v1035 = vpop.f32.mrb[0].mxu0
    %v1036 = vadd.f32 0.0, %v1035
    %v1037 = vpop.f32.mrb[0].mxu0
    %v1038 = vpop.f32.mrb[0].mxu0
    %v1039 = vpop.f32.mrb[0].mxu0
    %1040 = vdwg.mxu0
    %1041 = vrot.lane.b32.xlu0 %v209, 96
    %v1042 = vpop.permute.xlu0 %1041
    %v1043 = vrot.slane %v1042, 4
    %v1045 = vsel %vm212, %v991, 0
    %v1048 = vsel %vm460, %v1043, 0
    %1050 = vmatprep.subr.bf16.mxu0 0
    %1051 = vmatpush1.bf16.msra.mxu0 %v1048
    %1052 = vmatprep.subr.bf16.mxu0 0
    %1053 = vmatpush1.bf16.msra.mxu0 0
    %1054 = vmatprep.subr.bf16.mxu0 0
    %1055 = vmatpush1.bf16.msra.mxu0 0
    %1056 = vmatprep.subr.bf16.mxu0 0
    %1057 = vmatpush1.bf16.msra.mxu0 0
    %1058 = vmatprep.subr.bf16.mxu0 0
    %1059 = vmatpush1.bf16.msra.mxu0 0
    %1060 = vmatprep.subr.bf16.mxu0 0
    %1061 = vmatpush1.bf16.msra.mxu0 0
    %1062 = vmatprep.subr.bf16.mxu0 0
    %1063 = vmatpush1.bf16.msra.mxu0 0
    %1064 = vmatprep.subr.bf16.mxu0 0
    %1065 = vmatpush1.bf16.msra.mxu0 0
    %1066 = vmatprep.subr.bf16.mxu0 0
    %1067 = vmatpush1.bf16.msra.mxu0 0
    %1068 = vmatprep.subr.bf16.mxu0 0
    %1069 = vmatpush1.bf16.msra.mxu0 0
    %1070 = vmatprep.subr.bf16.mxu0 0
    %1071 = vmatpush1.bf16.msra.mxu0 0
    %1072 = vmatprep.subr.bf16.mxu0 0
    %1073 = vmatpush1.bf16.msra.mxu0 0
    %1074 = vmatprep.subr.bf16.mxu0 0
    %1075 = vmatpush1.bf16.msra.mxu0 0
    %1076 = vmatprep.subr.bf16.mxu0 0
    %1077 = vmatpush1.bf16.msra.mxu0 0
    %1078 = vmatprep.subr.bf16.mxu0 0
    %1079 = vmatpush1.bf16.msra.mxu0 0
    %1080 = vmatprep.subr.bf16.mxu0 0
    %1081 = vmatpush1.bf16.msra.mxu0 0
    %1082 = vmatprep.mubr.bf16.mxu0 0
    %1083 = vmatmul.mubr.bf16.gmra.mrb[0].mxu0 %v1045
    %v1084 = vpop.f32.mrb[0].mxu0
    %v1085 = vadd.f32 0.0, %v1084
    %v1086 = vpop.f32.mrb[0].mxu0
    %v1087 = vpop.f32.mrb[0].mxu0
    %v1088 = vpop.f32.mrb[0].mxu0
    %1089 = vdwg.mxu0
    %v1090 = vadd.f32 %v866, %v1036
    %v1091 = vadd.f32 %v867, %v1085
    %v1092 = vld [vmem:[%s8] sm:$0x1]
    %v1094 = vlaneseq
    %v1095 = vshrl.u32 %v1094, 7
    %v1096 = vsub.s32 0, %v1095
    %v1097 = vrot.slane %v1092, %v1096
    %v1099 = vadd.f32 %v1090, %v1097
    %v1100 = vadd.f32 %v1091, %v1097
    %v1101 = vadd.f32 %v113, %v1099
    %v1102 = vadd.f32 %v114, %v1100
    %v1103 = vld [vmem:[%s9] sm:$0x1]
    %v1104 = vld [vmem:[%s10] sm:$0x1]
    %v1105 = vsel %vm71, %v1101, 0.0
    %1106 = vadd.xlane.f32.xlu0 %v1105
    %v1107 = vpop.xlane.xlu0 %1106
    %v1108 = vsel %vm71, %v1102, 0.0
    %1109 = vadd.xlane.f32.xlu0 %v1108
    %v1110 = vpop.xlane.xlu0 %1109
    %v1111 = vmul.f32 %v1107, %v78
    %v1112 = vmul.f32 %v1110, %v78
    %v1113 = vsub.f32 %v1101, %v1111
    %v1114 = vsub.f32 %v1102, %v1112
    %v1115 = vmul.f32 %v1113, %v1113
    %v1116 = vmul.f32 %v1114, %v1114
    %v1117 = vsel %vm71, %v1115, 0.0
    %1118 = vadd.xlane.f32.xlu0 %v1117
    %v1119 = vpop.xlane.xlu0 %1118
    %v1120 = vsel %vm71, %v1116, 0.0
    %1121 = vadd.xlane.f32.xlu0 %v1120
    %v1122 = vpop.xlane.xlu0 %1121
    %v1123 = vmul.f32 %v1119, %v78
    %v1124 = vmul.f32 %v1122, %v78
    %v1125 = vadd.f32 %v1123, 1e-12
    %v1126 = vadd.f32 %v1124, 1e-12
    %v1127 = vrsqrt.pop %v1125
    %v1128 = vrsqrt.pop %v1126
    %v1129 = vmul.f32 %v1113, %v1127
    %v1130 = vmul.f32 %v1114, %v1128
    %v1132 = vlaneseq
    %v1133 = vshrl.u32 %v1132, 7
    %v1134 = vsub.s32 0, %v1133
    %v1135 = vrot.slane %v1103, %v1134
    %v1137 = vmul.f32 %v1129, %v1135
    %v1138 = vmul.f32 %v1130, %v1135
    %v1140 = vlaneseq
    %v1141 = vshrl.u32 %v1140, 7
    %v1142 = vsub.s32 0, %v1141
    %v1143 = vrot.slane %v1104, %v1142
    %v1145 = vadd.f32 %v1137, %v1143
    %v1146 = vadd.f32 %v1138, %v1143
    %v1147 = vpack.c.bf16 %v1146, %v1145
    %v1148 = vld [vmem:[%s11] sm:$0xf]
    %v1149 = vld [vmem:[%s11 + $0x4] sm:$0xf]
    %v1150 = vld [vmem:[%s11 + $0x8] sm:$0xf]
    %v1151 = vld [vmem:[%s11 + $0xc] sm:$0xf]
    %v1152 = vld [vmem:[%s12] sm:$0x1]
    %v1154 = vlaneseq
    %v1155 = vshrl.u32 %v1154, 7
    %v1156 = vsub.s32 0, %v1155
    %v1157 = vrot.slane %v1152, %v1156
    %v1163 = vunpack.c.l.b16 %v1148
    %v1164 = vunpack.c.l.b16 %v1149
    %v1165 = vunpack.c.l.b16 %v1150
    %v1166 = vunpack.c.l.b16 %v1151
    %v1167 = vpack.c.b16 %v1164, %v1163
    %v1168 = vpack.c.b16 %v1166, %v1165
    %v1172 = vsel %vm71, %v1147, 0
    %1174 = vmatprep.subr.bf16.mxu0 0
    %1175 = vmatpush1.bf16.msra.mxu0 %v1167
    %1176 = vmatprep.subr.bf16.mxu0 0
    %1177 = vmatpush1.bf16.msra.mxu0 %v1168
    %1178 = vmatprep.subr.bf16.mxu0 0
    %1179 = vmatpush1.bf16.msra.mxu0 0
    %1180 = vmatprep.subr.bf16.mxu0 0
    %1181 = vmatpush1.bf16.msra.mxu0 0
    %1182 = vmatprep.subr.bf16.mxu0 0
    %1183 = vmatpush1.bf16.msra.mxu0 0
    %1184 = vmatprep.subr.bf16.mxu0 0
    %1185 = vmatpush1.bf16.msra.mxu0 0
    %1186 = vmatprep.subr.bf16.mxu0 0
    %1187 = vmatpush1.bf16.msra.mxu0 0
    %1188 = vmatprep.subr.bf16.mxu0 0
    %1189 = vmatpush1.bf16.msra.mxu0 0
    %1190 = vmatprep.subr.bf16.mxu0 0
    %1191 = vmatpush1.bf16.msra.mxu0 0
    %1192 = vmatprep.subr.bf16.mxu0 0
    %1193 = vmatpush1.bf16.msra.mxu0 0
    %1194 = vmatprep.subr.bf16.mxu0 0
    %1195 = vmatpush1.bf16.msra.mxu0 0
    %1196 = vmatprep.subr.bf16.mxu0 0
    %1197 = vmatpush1.bf16.msra.mxu0 0
    %1198 = vmatprep.subr.bf16.mxu0 0
    %1199 = vmatpush1.bf16.msra.mxu0 0
    %1200 = vmatprep.subr.bf16.mxu0 0
    %1201 = vmatpush1.bf16.msra.mxu0 0
    %1202 = vmatprep.subr.bf16.mxu0 0
    %1203 = vmatpush1.bf16.msra.mxu0 0
    %1204 = vmatprep.subr.bf16.mxu0 0
    %1205 = vmatpush1.bf16.msra.mxu0 0
    %1206 = vmatprep.mubr.bf16.mxu0 0
    %1207 = vmatmul.mubr.bf16.gmra.mrb[0].mxu0 %v1172
    %v1208 = vpop.f32.mrb[0].mxu0
    %v1209 = vadd.f32 %v1157, %v1208
    %v1210 = vpop.f32.mrb[0].mxu0
    %v1211 = vpop.f32.mrb[0].mxu0
    %v1212 = vadd.f32 %v1157, %v1211
    %v1213 = vpop.f32.mrb[0].mxu0
    %1214 = vdwg.mxu0
    %v1215 = vmul.f32 %v1209, %v1209
    %v1216 = vmul.f32 %v1212, %v1212
    %v1217 = vmul.f32 %v1209, %v1215
    %v1218 = vmul.f32 %v1212, %v1216
    %v1219 = vmul.f32 %v1217, 0.044715
    %v1220 = vmul.f32 %v1218, 0.044715
    %v1221 = vadd.f32 %v1209, %v1219
    %v1222 = vadd.f32 %v1212, %v1220
    %v1223 = vmul.f32 %v1221, 0.7978846
    %v1224 = vmul.f32 %v1222, 0.7978846
    %v1225 = vtanh.pop %v1223
    %v1226 = vtanh.pop %v1224
    %v1227 = vadd.f32 %v1225, 1.0
    %v1228 = vadd.f32 %v1226, 1.0
    %v1229 = vmul.f32 %v1227, 0.5
    %v1230 = vmul.f32 %v1228, 0.5
    %v1231 = vmul.f32 %v1209, %v1229
    %v1232 = vmul.f32 %v1212, %v1230
    %v1233 = vpack.c.bf16 %v1232, %v1231
    %v1234 = vld [vmem:[%s13] sm:$0xf]
    %v1235 = vld [vmem:[%s13 + $0x4] sm:$0xf]
    %v1236 = vld [vmem:[%s13 + $0x8] sm:$0xf]
    %v1237 = vld [vmem:[%s13 + $0xc] sm:$0xf]
    %v1238 = vld [vmem:[%s13 + $0x10] sm:$0xf]
    %v1239 = vld [vmem:[%s13 + $0x14] sm:$0xf]
    %v1240 = vld [vmem:[%s13 + $0x18] sm:$0xf]
    %v1241 = vld [vmem:[%s13 + $0x1c] sm:$0xf]
    %v1242 = vld [vmem:[%s13 + $0x20] sm:$0xf]
    %v1243 = vld [vmem:[%s13 + $0x24] sm:$0xf]
    %v1244 = vld [vmem:[%s13 + $0x28] sm:$0xf]
    %v1245 = vld [vmem:[%s13 + $0x2c] sm:$0xf]
    %v1246 = vld [vmem:[%s13 + $0x30] sm:$0xf]
    %v1247 = vld [vmem:[%s13 + $0x34] sm:$0xf]
    %v1248 = vld [vmem:[%s13 + $0x38] sm:$0xf]
    %v1249 = vld [vmem:[%s13 + $0x3c] sm:$0xf]
    %v1250 = vld [vmem:[%s14] sm:$0x1]
    %v1252 = vlaneseq
    %v1253 = vshrl.u32 %v1252, 7
    %v1254 = vsub.s32 0, %v1253
    %v1255 = vrot.slane %v1250, %v1254
    %v1273 = vunpack.c.l.b16 %v1234
    %v1274 = vunpack.c.l.b16 %v1235
    %v1275 = vunpack.c.l.b16 %v1236
    %v1276 = vunpack.c.l.b16 %v1237
    %v1277 = vunpack.c.l.b16 %v1238
    %v1278 = vunpack.c.l.b16 %v1239
    %v1279 = vunpack.c.l.b16 %v1240
    %v1280 = vunpack.c.l.b16 %v1241
    %v1281 = vunpack.c.l.b16 %v1242
    %v1282 = vunpack.c.l.b16 %v1243
    %v1283 = vunpack.c.l.b16 %v1244
    %v1284 = vunpack.c.l.b16 %v1245
    %v1285 = vunpack.c.l.b16 %v1246
    %v1286 = vunpack.c.l.b16 %v1247
    %v1287 = vunpack.c.l.b16 %v1248
    %v1288 = vunpack.c.l.b16 %v1249
    %v1289 = vpack.c.b16 %v1274, %v1273
    %v1290 = vpack.c.b16 %v1276, %v1275
    %v1291 = vpack.c.b16 %v1278, %v1277
    %v1292 = vpack.c.b16 %v1280, %v1279
    %v1293 = vpack.c.b16 %v1282, %v1281
    %v1294 = vpack.c.b16 %v1284, %v1283
    %v1295 = vpack.c.b16 %v1286, %v1285
    %v1296 = vpack.c.b16 %v1288, %v1287
    %1305 = vmatprep.subr.bf16.mxu0 0
    %1306 = vmatpush1.bf16.msra.mxu0 %v1289
    %1307 = vmatprep.subr.bf16.mxu0 0
    %1308 = vmatpush1.bf16.msra.mxu0 %v1290
    %1309 = vmatprep.subr.bf16.mxu0 0
    %1310 = vmatpush1.bf16.msra.mxu0 %v1291
    %1311 = vmatprep.subr.bf16.mxu0 0
    %1312 = vmatpush1.bf16.msra.mxu0 %v1292
    %1313 = vmatprep.subr.bf16.mxu0 0
    %1314 = vmatpush1.bf16.msra.mxu0 %v1293
    %1315 = vmatprep.subr.bf16.mxu0 0
    %1316 = vmatpush1.bf16.msra.mxu0 %v1294
    %1317 = vmatprep.subr.bf16.mxu0 0
    %1318 = vmatpush1.bf16.msra.mxu0 %v1295
    %1319 = vmatprep.subr.bf16.mxu0 0
    %1320 = vmatpush1.bf16.msra.mxu0 %v1296
    %1321 = vmatprep.subr.bf16.mxu0 0
    %1322 = vmatpush1.bf16.msra.mxu0 0
    %1323 = vmatprep.subr.bf16.mxu0 0
    %1324 = vmatpush1.bf16.msra.mxu0 0
    %1325 = vmatprep.subr.bf16.mxu0 0
    %1326 = vmatpush1.bf16.msra.mxu0 0
    %1327 = vmatprep.subr.bf16.mxu0 0
    %1328 = vmatpush1.bf16.msra.mxu0 0
    %1329 = vmatprep.subr.bf16.mxu0 0
    %1330 = vmatpush1.bf16.msra.mxu0 0
    %1331 = vmatprep.subr.bf16.mxu0 0
    %1332 = vmatpush1.bf16.msra.mxu0 0
    %1333 = vmatprep.subr.bf16.mxu0 0
    %1334 = vmatpush1.bf16.msra.mxu0 0
    %1335 = vmatprep.subr.bf16.mxu0 0
    %1336 = vmatpush1.bf16.msra.mxu0 0
    %1337 = vmatprep.mubr.bf16.mxu0 0
    %1338 = vmatmul.mubr.bf16.gmra.mrb[0].mxu0 %v1233
    %v1339 = vpop.f32.mrb[0].mxu0
    %v1340 = vadd.f32 %v1255, %v1339
    %v1341 = vpop.f32.mrb[0].mxu0
    %v1342 = vpop.f32.mrb[0].mxu0
    %v1343 = vadd.f32 %v1255, %v1342
    %v1344 = vpop.f32.mrb[0].mxu0
    %1345 = vdwg.mxu0
    %v1346 = vadd.f32 %v1145, %v1340
    %v1347 = vadd.f32 %v1146, %v1343
    %v1348 = vld [vmem:[%s15] sm:$0x1]
    %v1349 = vld [vmem:[%s16] sm:$0x1]
    %v1350 = vsel %vm71, %v1346, 0.0
    %1351 = vadd.xlane.f32.xlu0 %v1350
    %v1352 = vpop.xlane.xlu0 %1351
    %v1353 = vsel %vm71, %v1347, 0.0
    %1354 = vadd.xlane.f32.xlu0 %v1353
    %v1355 = vpop.xlane.xlu0 %1354
    %v1356 = vmul.f32 %v1352, %v78
    %v1357 = vmul.f32 %v1355, %v78
    %v1358 = vsub.f32 %v1346, %v1356
    %v1359 = vsub.f32 %v1347, %v1357
    %v1360 = vmul.f32 %v1358, %v1358
    %v1361 = vmul.f32 %v1359, %v1359
    %v1362 = vsel %vm71, %v1360, 0.0
    %1363 = vadd.xlane.f32.xlu0 %v1362
    %v1364 = vpop.xlane.xlu0 %1363
    %v1365 = vsel %vm71, %v1361, 0.0
    %1366 = vadd.xlane.f32.xlu0 %v1365
    %v1367 = vpop.xlane.xlu0 %1366
    %v1368 = vmul.f32 %v1364, %v78
    %v1369 = vmul.f32 %v1367, %v78
    %v1370 = vadd.f32 %v1368, 1e-12
    %v1371 = vadd.f32 %v1369, 1e-12
    %v1372 = vrsqrt.pop %v1370
    %v1373 = vrsqrt.pop %v1371
    %v1374 = vmul.f32 %v1358, %v1372
    %v1375 = vmul.f32 %v1359, %v1373
    %v1377 = vlaneseq
    %v1378 = vshrl.u32 %v1377, 7
    %v1379 = vsub.s32 0, %v1378
    %v1380 = vrot.slane %v1348, %v1379
    %v1382 = vmul.f32 %v1374, %v1380
    %v1383 = vmul.f32 %v1375, %v1380
    %v1385 = vlaneseq
    %v1386 = vshrl.u32 %v1385, 7
    %v1387 = vsub.s32 0, %v1386
    %v1388 = vrot.slane %v1349, %v1387
    %v1390 = vadd.f32 %v1382, %v1388
    %v1391 = vadd.f32 %v1383, %v1388
    %v1392 = vpack.c.bf16 %v1391, %v1390
    %s1393 = scalar_lea.vmem %s6, 32
    %v1394 = vld [vmem:[%s1393] sm:$0xff]
    %v1395 = vld [vmem:[%s1393 + $0x8] sm:$0xff]
    %v1396 = vld [vmem:[%s1393 + $0x10] sm:$0xff]
    %v1397 = vld [vmem:[%s1393 + $0x18] sm:$0xff]
    %s1398 = scalar_lea.vmem %s7, 2
    %v1399 = vld [vmem:[%s1398] sm:$0x3]
    %v1401 = vlaneseq
    %v1402 = vshrl.u32 %v1401, 7
    %v1403 = vsub.s32 0, %v1402
    %v1404 = vrot.slane %v1399, %v1403
    %v1405 = vlaneseq
    %v1406 = vshrl.u32 %v1405, 7
    %v1407 = vsub.s32 1, %v1406
    %v1408 = vrot.slane %v1399, %v1407
    %v1415 = vunpack.c.l.b16 %v1394
    %v1416 = vunpack.c.h.b16 %v1394
    %v1417 = vunpack.c.l.b16 %v1395
    %v1418 = vunpack.c.h.b16 %v1395
    %v1419 = vunpack.c.l.b16 %v1396
    %v1420 = vunpack.c.h.b16 %v1396
    %v1421 = vunpack.c.l.b16 %v1397
    %v1422 = vunpack.c.h.b16 %v1397
    %v1423 = vpack.c.b16 %v1417, %v1415
    %v1424 = vpack.c.b16 %v1418, %v1416
    %v1425 = vpack.c.b16 %v1421, %v1419
    %v1426 = vpack.c.b16 %v1422, %v1420
    %v1432 = vsel %vm71, %v1392, 0
    %1434 = vmatprep.subr.bf16.mxu0 %v1424
    %1435 = vmatpush1.bf16.msra.mxu0 %v1423
    %1436 = vmatprep.subr.bf16.mxu0 %v1426
    %1437 = vmatpush1.bf16.msra.mxu0 %v1425
    %1438 = vmatprep.subr.bf16.mxu0 0
    %1439 = vmatpush1.bf16.msra.mxu0 0
    %1440 = vmatprep.subr.bf16.mxu0 0
    %1441 = vmatpush1.bf16.msra.mxu0 0
    %1442 = vmatprep.subr.bf16.mxu0 0
    %1443 = vmatpush1.bf16.msra.mxu0 0
    %1444 = vmatprep.subr.bf16.mxu0 0
    %1445 = vmatpush1.bf16.msra.mxu0 0
    %1446 = vmatprep.subr.bf16.mxu0 0
    %1447 = vmatpush1.bf16.msra.mxu0 0
    %1448 = vmatprep.subr.bf16.mxu0 0
    %1449 = vmatpush1.bf16.msra.mxu0 0
    %1450 = vmatprep.subr.bf16.mxu0 0
    %1451 = vmatpush1.bf16.msra.mxu0 0
    %1452 = vmatprep.subr.bf16.mxu0 0
    %1453 = vmatpush1.bf16.msra.mxu0 0
    %1454 = vmatprep.subr.bf16.mxu0 0
    %1455 = vmatpush1.bf16.msra.mxu0 0
    %1456 = vmatprep.subr.bf16.mxu0 0
    %1457 = vmatpush1.bf16.msra.mxu0 0
    %1458 = vmatprep.subr.bf16.mxu0 0
    %1459 = vmatpush1.bf16.msra.mxu0 0
    %1460 = vmatprep.subr.bf16.mxu0 0
    %1461 = vmatpush1.bf16.msra.mxu0 0
    %1462 = vmatprep.subr.bf16.mxu0 0
    %1463 = vmatpush1.bf16.msra.mxu0 0
    %1464 = vmatprep.subr.bf16.mxu0 0
    %1465 = vmatpush1.bf16.msra.mxu0 0
    %1466 = vmatprep.mubr.bf16.mxu0 0
    %1467 = vmatmul.mubr.bf16.gmra.mrb[0].mxu0 %v1432
    %v1468 = vpop.f32.mrb[0].mxu0
    %v1469 = vadd.f32 %v1404, %v1468
    %v1470 = vpop.f32.mrb[0].mxu0
    %v1471 = vadd.f32 %v1408, %v1470
    %v1472 = vpop.f32.mrb[0].mxu0
    %v1473 = vadd.f32 %v1404, %v1472
    %v1474 = vpop.f32.mrb[0].mxu0
    %v1475 = vadd.f32 %v1408, %v1474
    %1476 = vdwg.mxu0
    %v1477 = vpack.c.bf16 %v1473, %v1469
    %v1478 = vpack.c.bf16 %v1475, %v1471
    %v1480 = vunpack.c.l.b16 %v1477
    %v1481 = vunpack.c.h.b16 %v1477
    %v1482 = vpack.c.b16 %v1480, %v1480
    %v1483 = vpack.c.b16 %v1481, %v1481
    %v1485 = vunpack.c.l.b16 %v1478
    %v1486 = vunpack.c.h.b16 %v1478
    %v1487 = vpack.c.b16 %v1485, %v1480
    %v1488 = vpack.c.b16 %v1486, %v1481
    %1489 = vrot.lane.b32.xlu0 %v1482, 96
    %v1490 = vpop.permute.xlu0 %1489
    %v1492 = vsel %vm212, %v1482, 0
    %v1495 = vsel %vm212, %v1490, 0
    %1497 = vmatprep.subr.bf16.mxu0 0
    %1498 = vmatpush1.bf16.xpose.msra.mxu0 %v1495
    %1499 = vmatprep.subr.bf16.mxu0 0
    %1500 = vmatpush1.bf16.xpose.msra.mxu0 0
    %1501 = vmatprep.subr.bf16.mxu0 0
    %1502 = vmatpush1.bf16.xpose.msra.mxu0 0
    %1503 = vmatprep.subr.bf16.mxu0 0
    %1504 = vmatpush1.bf16.xpose.msra.mxu0 0
    %1505 = vmatprep.subr.bf16.mxu0 0
    %1506 = vmatpush1.bf16.xpose.msra.mxu0 0
    %1507 = vmatprep.subr.bf16.mxu0 0
    %1508 = vmatpush1.bf16.xpose.msra.mxu0 0
    %1509 = vmatprep.subr.bf16.mxu0 0
    %1510 = vmatpush1.bf16.xpose.msra.mxu0 0
    %1511 = vmatprep.subr.bf16.mxu0 0
    %1512 = vmatpush1.bf16.xpose.msra.mxu0 0
    %1513 = vmatprep.subr.bf16.mxu0 0
    %1514 = vmatpush1.bf16.xpose.msra.mxu0 0
    %1515 = vmatprep.subr.bf16.mxu0 0
    %1516 = vmatpush1.bf16.xpose.msra.mxu0 0
    %1517 = vmatprep.subr.bf16.mxu0 0
    %1518 = vmatpush1.bf16.xpose.msra.mxu0 0
    %1519 = vmatprep.subr.bf16.mxu0 0
    %1520 = vmatpush1.bf16.xpose.msra.mxu0 0
    %1521 = vmatprep.subr.bf16.mxu0 0
    %1522 = vmatpush1.bf16.xpose.msra.mxu0 0
    %1523 = vmatprep.subr.bf16.mxu0 0
    %1524 = vmatpush1.bf16.xpose.msra.mxu0 0
    %1525 = vmatprep.subr.bf16.mxu0 0
    %1526 = vmatpush1.bf16.xpose.msra.mxu0 0
    %1527 = vmatprep.subr.bf16.mxu0 0
    %1528 = vmatpush1.bf16.xpose.msra.mxu0 0
    %1529 = vmatprep.mubr.bf16.mxu0 0
    %1530 = vmatmul.mubr.bf16.gmra.mrb[0].mxu0 %v1492
    %v1531 = vpop.f32.mrb[0].mxu0
    %v1532 = vadd.f32 %v58, %v1531
    %v1533 = vpop.f32.mrb[0].mxu0
    %v1534 = vpop.f32.mrb[0].mxu0
    %v1535 = vpop.f32.mrb[0].mxu0
    %1536 = vdwg.mxu0
    %1537 = vrot.lane.b32.xlu0 %v1483, 96
    %v1538 = vpop.permute.xlu0 %1537
    %v1540 = vsel %vm212, %v1483, 0
    %v1543 = vsel %vm212, %v1538, 0
    %1545 = vmatprep.subr.bf16.mxu0 0
    %1546 = vmatpush1.bf16.xpose.msra.mxu0 %v1543
    %1547 = vmatprep.subr.bf16.mxu0 0
    %1548 = vmatpush1.bf16.xpose.msra.mxu0 0
    %1549 = vmatprep.subr.bf16.mxu0 0
    %1550 = vmatpush1.bf16.xpose.msra.mxu0 0
    %1551 = vmatprep.subr.bf16.mxu0 0
    %1552 = vmatpush1.bf16.xpose.msra.mxu0 0
    %1553 = vmatprep.subr.bf16.mxu0 0
    %1554 = vmatpush1.bf16.xpose.msra.mxu0 0
    %1555 = vmatprep.subr.bf16.mxu0 0
    %1556 = vmatpush1.bf16.xpose.msra.mxu0 0
    %1557 = vmatprep.subr.bf16.mxu0 0
    %1558 = vmatpush1.bf16.xpose.msra.mxu0 0
    %1559 = vmatprep.subr.bf16.mxu0 0
    %1560 = vmatpush1.bf16.xpose.msra.mxu0 0
    %1561 = vmatprep.subr.bf16.mxu0 0
    %1562 = vmatpush1.bf16.xpose.msra.mxu0 0
    %1563 = vmatprep.subr.bf16.mxu0 0
    %1564 = vmatpush1.bf16.xpose.msra.mxu0 0
    %1565 = vmatprep.subr.bf16.mxu0 0
    %1566 = vmatpush1.bf16.xpose.msra.mxu0 0
    %1567 = vmatprep.subr.bf16.mxu0 0
    %1568 = vmatpush1.bf16.xpose.msra.mxu0 0
    %1569 = vmatprep.subr.bf16.mxu0 0
    %1570 = vmatpush1.bf16.xpose.msra.mxu0 0
    %1571 = vmatprep.subr.bf16.mxu0 0
    %1572 = vmatpush1.bf16.xpose.msra.mxu0 0
    %1573 = vmatprep.subr.bf16.mxu0 0
    %1574 = vmatpush1.bf16.xpose.msra.mxu0 0
    %1575 = vmatprep.subr.bf16.mxu0 0
    %1576 = vmatpush1.bf16.xpose.msra.mxu0 0
    %1577 = vmatprep.mubr.bf16.mxu0 0
    %1578 = vmatmul.mubr.bf16.gmra.mrb[0].mxu0 %v1540
    %v1579 = vpop.f32.mrb[0].mxu0
    %v1580 = vadd.f32 %v59, %v1579
    %v1581 = vpop.f32.mrb[0].mxu0
    %v1582 = vpop.f32.mrb[0].mxu0
    %v1583 = vpop.f32.mrb[0].mxu0
    %1584 = vdwg.mxu0
    %v1585 = vsel %vm212, %v1532, -inf
    %1586 = vmax.xlane.f32.xlu0 %v1585
    %v1587 = vpop.xlane.xlu0 %1586
    %v1588 = vsel %vm212, %v1580, -inf
    %1589 = vmax.xlane.f32.xlu0 %v1588
    %v1590 = vpop.xlane.xlu0 %1589
    %v1591 = vsub.f32 %v1532, %v1587
    %v1592 = vsub.f32 %v1580, %v1590
    %v1593 = vmul.f32 %v1591, 1.442695
    %v1594 = vpow.pop %v1593
    %v1595 = vmul.f32 %v1592, 1.442695
    %v1596 = vpow.pop %v1595
    %v1597 = vsel %vm212, %v1594, 0.0
    %1598 = vadd.xlane.f32.xlu0 %v1597
    %v1599 = vpop.xlane.xlu0 %1598
    %v1600 = vsel %vm212, %v1596, 0.0
    %1601 = vadd.xlane.f32.xlu0 %v1600
    %v1602 = vpop.xlane.xlu0 %1601
    %v1603 = vrcp.pop %v1599
    %v1604 = vrcp.pop %v1602
    %v1605 = vmul.f32 %v1594, %v1603
    %v1606 = vmul.f32 %v1596, %v1604
    %v1607 = vpack.c.bf16 %v1605, %v1605
    %v1608 = vpack.c.bf16 %v1606, %v1606
    %1609 = vrot.lane.b32.xlu0 %v1482, 120
    %v1610 = vpop.permute.xlu0 %1609
    %1611 = vrot.lane.b32.xlu0 %v1482, 88
    %v1612 = vpop.permute.xlu0 %1611
    %v1614 = vsel %vm212, %v1610, 0
    %v1617 = vsel %vm212, %v1612, 0
    %1619 = vmatprep.subr.bf16.mxu0 0
    %1620 = vmatpush1.bf16.xpose.msra.mxu0 %v1617
    %1621 = vmatprep.subr.bf16.mxu0 0
    %1622 = vmatpush1.bf16.xpose.msra.mxu0 0
    %1623 = vmatprep.subr.bf16.mxu0 0
    %1624 = vmatpush1.bf16.xpose.msra.mxu0 0
    %1625 = vmatprep.subr.bf16.mxu0 0
    %1626 = vmatpush1.bf16.xpose.msra.mxu0 0
    %1627 = vmatprep.subr.bf16.mxu0 0
    %1628 = vmatpush1.bf16.xpose.msra.mxu0 0
    %1629 = vmatprep.subr.bf16.mxu0 0
    %1630 = vmatpush1.bf16.xpose.msra.mxu0 0
    %1631 = vmatprep.subr.bf16.mxu0 0
    %1632 = vmatpush1.bf16.xpose.msra.mxu0 0
    %1633 = vmatprep.subr.bf16.mxu0 0
    %1634 = vmatpush1.bf16.xpose.msra.mxu0 0
    %1635 = vmatprep.subr.bf16.mxu0 0
    %1636 = vmatpush1.bf16.xpose.msra.mxu0 0
    %1637 = vmatprep.subr.bf16.mxu0 0
    %1638 = vmatpush1.bf16.xpose.msra.mxu0 0
    %1639 = vmatprep.subr.bf16.mxu0 0
    %1640 = vmatpush1.bf16.xpose.msra.mxu0 0
    %1641 = vmatprep.subr.bf16.mxu0 0
    %1642 = vmatpush1.bf16.xpose.msra.mxu0 0
    %1643 = vmatprep.subr.bf16.mxu0 0
    %1644 = vmatpush1.bf16.xpose.msra.mxu0 0
    %1645 = vmatprep.subr.bf16.mxu0 0
    %1646 = vmatpush1.bf16.xpose.msra.mxu0 0
    %1647 = vmatprep.subr.bf16.mxu0 0
    %1648 = vmatpush1.bf16.xpose.msra.mxu0 0
    %1649 = vmatprep.subr.bf16.mxu0 0
    %1650 = vmatpush1.bf16.xpose.msra.mxu0 0
    %1651 = vmatprep.mubr.bf16.mxu0 0
    %1652 = vmatmul.mubr.bf16.gmra.mrb[0].mxu0 %v1614
    %v1653 = vpop.f32.mrb[0].mxu0
    %v1654 = vadd.f32 %v58, %v1653
    %v1655 = vpop.f32.mrb[0].mxu0
    %v1656 = vpop.f32.mrb[0].mxu0
    %v1657 = vpop.f32.mrb[0].mxu0
    %1658 = vdwg.mxu0
    %1659 = vrot.lane.b32.xlu0 %v1483, 120
    %v1660 = vpop.permute.xlu0 %1659
    %1661 = vrot.lane.b32.xlu0 %v1483, 88
    %v1662 = vpop.permute.xlu0 %1661
    %v1664 = vsel %vm212, %v1660, 0
    %v1667 = vsel %vm212, %v1662, 0
    %1669 = vmatprep.subr.bf16.mxu0 0
    %1670 = vmatpush1.bf16.xpose.msra.mxu0 %v1667
    %1671 = vmatprep.subr.bf16.mxu0 0
    %1672 = vmatpush1.bf16.xpose.msra.mxu0 0
    %1673 = vmatprep.subr.bf16.mxu0 0
    %1674 = vmatpush1.bf16.xpose.msra.mxu0 0
    %1675 = vmatprep.subr.bf16.mxu0 0
    %1676 = vmatpush1.bf16.xpose.msra.mxu0 0
    %1677 = vmatprep.subr.bf16.mxu0 0
    %1678 = vmatpush1.bf16.xpose.msra.mxu0 0
    %1679 = vmatprep.subr.bf16.mxu0 0
    %1680 = vmatpush1.bf16.xpose.msra.mxu0 0
    %1681 = vmatprep.subr.bf16.mxu0 0
    %1682 = vmatpush1.bf16.xpose.msra.mxu0 0
    %1683 = vmatprep.subr.bf16.mxu0 0
    %1684 = vmatpush1.bf16.xpose.msra.mxu0 0
    %1685 = vmatprep.subr.bf16.mxu0 0
    %1686 = vmatpush1.bf16.xpose.msra.mxu0 0
    %1687 = vmatprep.subr.bf16.mxu0 0
    %1688 = vmatpush1.bf16.xpose.msra.mxu0 0
    %1689 = vmatprep.subr.bf16.mxu0 0
    %1690 = vmatpush1.bf16.xpose.msra.mxu0 0
    %1691 = vmatprep.subr.bf16.mxu0 0
    %1692 = vmatpush1.bf16.xpose.msra.mxu0 0
    %1693 = vmatprep.subr.bf16.mxu0 0
    %1694 = vmatpush1.bf16.xpose.msra.mxu0 0
    %1695 = vmatprep.subr.bf16.mxu0 0
    %1696 = vmatpush1.bf16.xpose.msra.mxu0 0
    %1697 = vmatprep.subr.bf16.mxu0 0
    %1698 = vmatpush1.bf16.xpose.msra.mxu0 0
    %1699 = vmatprep.subr.bf16.mxu0 0
    %1700 = vmatpush1.bf16.xpose.msra.mxu0 0
    %1701 = vmatprep.mubr.bf16.mxu0 0
    %1702 = vmatmul.mubr.bf16.gmra.mrb[0].mxu0 %v1664
    %v1703 = vpop.f32.mrb[0].mxu0
    %v1704 = vadd.f32 %v59, %v1703
    %v1705 = vpop.f32.mrb[0].mxu0
    %v1706 = vpop.f32.mrb[0].mxu0
    %v1707 = vpop.f32.mrb[0].mxu0
    %1708 = vdwg.mxu0
    %v1709 = vsel %vm212, %v1654, -inf
    %1710 = vmax.xlane.f32.xlu0 %v1709
    %v1711 = vpop.xlane.xlu0 %1710
    %v1712 = vsel %vm212, %v1704, -inf
    %1713 = vmax.xlane.f32.xlu0 %v1712
    %v1714 = vpop.xlane.xlu0 %1713
    %v1715 = vsub.f32 %v1654, %v1711
    %v1716 = vsub.f32 %v1704, %v1714
    %v1717 = vmul.f32 %v1715, 1.442695
    %v1718 = vpow.pop %v1717
    %v1719 = vmul.f32 %v1716, 1.442695
    %v1720 = vpow.pop %v1719
    %v1721 = vsel %vm212, %v1718, 0.0
    %1722 = vadd.xlane.f32.xlu0 %v1721
    %v1723 = vpop.xlane.xlu0 %1722
    %v1724 = vsel %vm212, %v1720, 0.0
    %1725 = vadd.xlane.f32.xlu0 %v1724
    %v1726 = vpop.xlane.xlu0 %1725
    %v1727 = vrcp.pop %v1723
    %v1728 = vrcp.pop %v1726
    %v1729 = vmul.f32 %v1718, %v1727
    %v1730 = vmul.f32 %v1720, %v1728
    %v1731 = vpack.c.bf16 %v1729, %v1729
    %v1732 = vpack.c.bf16 %v1730, %v1730
    %1733 = vrot.lane.b32.xlu0 %v1482, 32
    %v1734 = vpop.permute.xlu0 %1733
    %v1736 = vsel %vm212, %v1731, 0
    %v1739 = vsel %vm460, %v1734, 0
    %1741 = vmatprep.subr.bf16.mxu0 0
    %1742 = vmatpush1.bf16.msra.mxu0 %v1739
    %1743 = vmatprep.subr.bf16.mxu0 0
    %1744 = vmatpush1.bf16.msra.mxu0 0
    %1745 = vmatprep.subr.bf16.mxu0 0
    %1746 = vmatpush1.bf16.msra.mxu0 0
    %1747 = vmatprep.subr.bf16.mxu0 0
    %1748 = vmatpush1.bf16.msra.mxu0 0
    %1749 = vmatprep.subr.bf16.mxu0 0
    %1750 = vmatpush1.bf16.msra.mxu0 0
    %1751 = vmatprep.subr.bf16.mxu0 0
    %1752 = vmatpush1.bf16.msra.mxu0 0
    %1753 = vmatprep.subr.bf16.mxu0 0
    %1754 = vmatpush1.bf16.msra.mxu0 0
    %1755 = vmatprep.subr.bf16.mxu0 0
    %1756 = vmatpush1.bf16.msra.mxu0 0
    %1757 = vmatprep.subr.bf16.mxu0 0
    %1758 = vmatpush1.bf16.msra.mxu0 0
    %1759 = vmatprep.subr.bf16.mxu0 0
    %1760 = vmatpush1.bf16.msra.mxu0 0
    %1761 = vmatprep.subr.bf16.mxu0 0
    %1762 = vmatpush1.bf16.msra.mxu0 0
    %1763 = vmatprep.subr.bf16.mxu0 0
    %1764 = vmatpush1.bf16.msra.mxu0 0
    %1765 = vmatprep.subr.bf16.mxu0 0
    %1766 = vmatpush1.bf16.msra.mxu0 0
    %1767 = vmatprep.subr.bf16.mxu0 0
    %1768 = vmatpush1.bf16.msra.mxu0 0
    %1769 = vmatprep.subr.bf16.mxu0 0
    %1770 = vmatpush1.bf16.msra.mxu0 0
    %1771 = vmatprep.subr.bf16.mxu0 0
    %1772 = vmatpush1.bf16.msra.mxu0 0
    %1773 = vmatprep.mubr.bf16.mxu0 0
    %1774 = vmatmul.mubr.bf16.gmra.mrb[0].mxu0 %v1736
    %v1775 = vpop.f32.mrb[0].mxu0
    %v1776 = vadd.f32 0.0, %v1775
    %v1777 = vpop.f32.mrb[0].mxu0
    %v1778 = vpop.f32.mrb[0].mxu0
    %v1779 = vpop.f32.mrb[0].mxu0
    %1780 = vdwg.mxu0
    %1781 = vrot.lane.b32.xlu0 %v1483, 32
    %v1782 = vpop.permute.xlu0 %1781
    %v1784 = vsel %vm212, %v1732, 0
    %v1787 = vsel %vm460, %v1782, 0
    %1789 = vmatprep.subr.bf16.mxu0 0
    %1790 = vmatpush1.bf16.msra.mxu0 %v1787
    %1791 = vmatprep.subr.bf16.mxu0 0
    %1792 = vmatpush1.bf16.msra.mxu0 0
    %1793 = vmatprep.subr.bf16.mxu0 0
    %1794 = vmatpush1.bf16.msra.mxu0 0
    %1795 = vmatprep.subr.bf16.mxu0 0
    %1796 = vmatpush1.bf16.msra.mxu0 0
    %1797 = vmatprep.subr.bf16.mxu0 0
    %1798 = vmatpush1.bf16.msra.mxu0 0
    %1799 = vmatprep.subr.bf16.mxu0 0
    %1800 = vmatpush1.bf16.msra.mxu0 0
    %1801 = vmatprep.subr.bf16.mxu0 0
    %1802 = vmatpush1.bf16.msra.mxu0 0
    %1803 = vmatprep.subr.bf16.mxu0 0
    %1804 = vmatpush1.bf16.msra.mxu0 0
    %1805 = vmatprep.subr.bf16.mxu0 0
    %1806 = vmatpush1.bf16.msra.mxu0 0
    %1807 = vmatprep.subr.bf16.mxu0 0
    %1808 = vmatpush1.bf16.msra.mxu0 0
    %1809 = vmatprep.subr.bf16.mxu0 0
    %1810 = vmatpush1.bf16.msra.mxu0 0
    %1811 = vmatprep.subr.bf16.mxu0 0
    %1812 = vmatpush1.bf16.msra.mxu0 0
    %1813 = vmatprep.subr.bf16.mxu0 0
    %1814 = vmatpush1.bf16.msra.mxu0 0
    %1815 = vmatprep.subr.bf16.mxu0 0
    %1816 = vmatpush1.bf16.msra.mxu0 0
    %1817 = vmatprep.subr.bf16.mxu0 0
    %1818 = vmatpush1.bf16.msra.mxu0 0
    %1819 = vmatprep.subr.bf16.mxu0 0
    %1820 = vmatpush1.bf16.msra.mxu0 0
    %1821 = vmatprep.mubr.bf16.mxu0 0
    %1822 = vmatmul.mubr.bf16.gmra.mrb[0].mxu0 %v1784
    %v1823 = vpop.f32.mrb[0].mxu0
    %v1824 = vadd.f32 0.0, %v1823
    %v1825 = vpop.f32.mrb[0].mxu0
    %v1826 = vpop.f32.mrb[0].mxu0
    %v1827 = vpop.f32.mrb[0].mxu0
    %1828 = vdwg.mxu0
    %1829 = vrot.lane.b32.xlu0 %v1482, 64
    %v1830 = vpop.permute.xlu0 %1829
    %v1832 = vsel %vm212, %v1607, 0
    %v1835 = vsel %vm460, %v1830, 0
    %1837 = vmatprep.subr.bf16.mxu0 0
    %1838 = vmatpush1.bf16.msra.mxu0 %v1835
    %1839 = vmatprep.subr.bf16.mxu0 0
    %1840 = vmatpush1.bf16.msra.mxu0 0
    %1841 = vmatprep.subr.bf16.mxu0 0
    %1842 = vmatpush1.bf16.msra.mxu0 0
    %1843 = vmatprep.subr.bf16.mxu0 0
    %1844 = vmatpush1.bf16.msra.mxu0 0
    %1845 = vmatprep.subr.bf16.mxu0 0
    %1846 = vmatpush1.bf16.msra.mxu0 0
    %1847 = vmatprep.subr.bf16.mxu0 0
    %1848 = vmatpush1.bf16.msra.mxu0 0
    %1849 = vmatprep.subr.bf16.mxu0 0
    %1850 = vmatpush1.bf16.msra.mxu0 0
    %1851 = vmatprep.subr.bf16.mxu0 0
    %1852 = vmatpush1.bf16.msra.mxu0 0
    %1853 = vmatprep.subr.bf16.mxu0 0
    %1854 = vmatpush1.bf16.msra.mxu0 0
    %1855 = vmatprep.subr.bf16.mxu0 0
    %1856 = vmatpush1.bf16.msra.mxu0 0
    %1857 = vmatprep.subr.bf16.mxu0 0
    %1858 = vmatpush1.bf16.msra.mxu0 0
    %1859 = vmatprep.subr.bf16.mxu0 0
    %1860 = vmatpush1.bf16.msra.mxu0 0
    %1861 = vmatprep.subr.bf16.mxu0 0
    %1862 = vmatpush1.bf16.msra.mxu0 0
    %1863 = vmatprep.subr.bf16.mxu0 0
    %1864 = vmatpush1.bf16.msra.mxu0 0
    %1865 = vmatprep.subr.bf16.mxu0 0
    %1866 = vmatpush1.bf16.msra.mxu0 0
    %1867 = vmatprep.subr.bf16.mxu0 0
    %1868 = vmatpush1.bf16.msra.mxu0 0
    %1869 = vmatprep.mubr.bf16.mxu0 0
    %1870 = vmatmul.mubr.bf16.gmra.mrb[0].mxu0 %v1832
    %v1871 = vpop.f32.mrb[0].mxu0
    %v1872 = vadd.f32 %v1776, %v1871
    %v1873 = vpop.f32.mrb[0].mxu0
    %v1874 = vpop.f32.mrb[0].mxu0
    %v1875 = vpop.f32.mrb[0].mxu0
    %1876 = vdwg.mxu0
    %1877 = vrot.lane.b32.xlu0 %v1483, 64
    %v1878 = vpop.permute.xlu0 %1877
    %v1880 = vsel %vm212, %v1608, 0
    %v1883 = vsel %vm460, %v1878, 0
    %1885 = vmatprep.subr.bf16.mxu0 0
    %1886 = vmatpush1.bf16.msra.mxu0 %v1883
    %1887 = vmatprep.subr.bf16.mxu0 0
    %1888 = vmatpush1.bf16.msra.mxu0 0
    %1889 = vmatprep.subr.bf16.mxu0 0
    %1890 = vmatpush1.bf16.msra.mxu0 0
    %1891 = vmatprep.subr.bf16.mxu0 0
    %1892 = vmatpush1.bf16.msra.mxu0 0
    %1893 = vmatprep.subr.bf16.mxu0 0
    %1894 = vmatpush1.bf16.msra.mxu0 0
    %1895 = vmatprep.subr.bf16.mxu0 0
    %1896 = vmatpush1.bf16.msra.mxu0 0
    %1897 = vmatprep.subr.bf16.mxu0 0
    %1898 = vmatpush1.bf16.msra.mxu0 0
    %1899 = vmatprep.subr.bf16.mxu0 0
    %1900 = vmatpush1.bf16.msra.mxu0 0
    %1901 = vmatprep.subr.bf16.mxu0 0
    %1902 = vmatpush1.bf16.msra.mxu0 0
    %1903 = vmatprep.subr.bf16.mxu0 0
    %1904 = vmatpush1.bf16.msra.mxu0 0
    %1905 = vmatprep.subr.bf16.mxu0 0
    %1906 = vmatpush1.bf16.msra.mxu0 0
    %1907 = vmatprep.subr.bf16.mxu0 0
    %1908 = vmatpush1.bf16.msra.mxu0 0
    %1909 = vmatprep.subr.bf16.mxu0 0
    %1910 = vmatpush1.bf16.msra.mxu0 0
    %1911 = vmatprep.subr.bf16.mxu0 0
    %1912 = vmatpush1.bf16.msra.mxu0 0
    %1913 = vmatprep.subr.bf16.mxu0 0
    %1914 = vmatpush1.bf16.msra.mxu0 0
    %1915 = vmatprep.subr.bf16.mxu0 0
    %1916 = vmatpush1.bf16.msra.mxu0 0
    %1917 = vmatprep.mubr.bf16.mxu0 0
    %1918 = vmatmul.mubr.bf16.gmra.mrb[0].mxu0 %v1880
    %v1919 = vpop.f32.mrb[0].mxu0
    %v1920 = vadd.f32 %v1824, %v1919
    %v1921 = vpop.f32.mrb[0].mxu0
    %v1922 = vpop.f32.mrb[0].mxu0
    %v1923 = vpop.f32.mrb[0].mxu0
    %1924 = vdwg.mxu0
    %1925 = vrot.lane.b32.xlu0 %v1482, 112
    %v1926 = vpop.permute.xlu0 %1925
    %1927 = vrot.lane.b32.xlu0 %v1482, 80
    %v1928 = vpop.permute.xlu0 %1927
    %v1930 = vsel %vm212, %v1926, 0
    %v1933 = vsel %vm212, %v1928, 0
    %1935 = vmatprep.subr.bf16.mxu0 0
    %1936 = vmatpush1.bf16.xpose.msra.mxu0 %v1933
    %1937 = vmatprep.subr.bf16.mxu0 0
    %1938 = vmatpush1.bf16.xpose.msra.mxu0 0
    %1939 = vmatprep.subr.bf16.mxu0 0
    %1940 = vmatpush1.bf16.xpose.msra.mxu0 0
    %1941 = vmatprep.subr.bf16.mxu0 0
    %1942 = vmatpush1.bf16.xpose.msra.mxu0 0
    %1943 = vmatprep.subr.bf16.mxu0 0
    %1944 = vmatpush1.bf16.xpose.msra.mxu0 0
    %1945 = vmatprep.subr.bf16.mxu0 0
    %1946 = vmatpush1.bf16.xpose.msra.mxu0 0
    %1947 = vmatprep.subr.bf16.mxu0 0
    %1948 = vmatpush1.bf16.xpose.msra.mxu0 0
    %1949 = vmatprep.subr.bf16.mxu0 0
    %1950 = vmatpush1.bf16.xpose.msra.mxu0 0
    %1951 = vmatprep.subr.bf16.mxu0 0
    %1952 = vmatpush1.bf16.xpose.msra.mxu0 0
    %1953 = vmatprep.subr.bf16.mxu0 0
    %1954 = vmatpush1.bf16.xpose.msra.mxu0 0
    %1955 = vmatprep.subr.bf16.mxu0 0
    %1956 = vmatpush1.bf16.xpose.msra.mxu0 0
    %1957 = vmatprep.subr.bf16.mxu0 0
    %1958 = vmatpush1.bf16.xpose.msra.mxu0 0
    %1959 = vmatprep.subr.bf16.mxu0 0
    %1960 = vmatpush1.bf16.xpose.msra.mxu0 0
    %1961 = vmatprep.subr.bf16.mxu0 0
    %1962 = vmatpush1.bf16.xpose.msra.mxu0 0
    %1963 = vmatprep.subr.bf16.mxu0 0
    %1964 = vmatpush1.bf16.xpose.msra.mxu0 0
    %1965 = vmatprep.subr.bf16.mxu0 0
    %1966 = vmatpush1.bf16.xpose.msra.mxu0 0
    %1967 = vmatprep.mubr.bf16.mxu0 0
    %1968 = vmatmul.mubr.bf16.gmra.mrb[0].mxu0 %v1930
    %v1969 = vpop.f32.mrb[0].mxu0
    %v1970 = vadd.f32 %v58, %v1969
    %v1971 = vpop.f32.mrb[0].mxu0
    %v1972 = vpop.f32.mrb[0].mxu0
    %v1973 = vpop.f32.mrb[0].mxu0
    %1974 = vdwg.mxu0
    %1975 = vrot.lane.b32.xlu0 %v1483, 112
    %v1976 = vpop.permute.xlu0 %1975
    %1977 = vrot.lane.b32.xlu0 %v1483, 80
    %v1978 = vpop.permute.xlu0 %1977
    %v1980 = vsel %vm212, %v1976, 0
    %v1983 = vsel %vm212, %v1978, 0
    %1985 = vmatprep.subr.bf16.mxu0 0
    %1986 = vmatpush1.bf16.xpose.msra.mxu0 %v1983
    %1987 = vmatprep.subr.bf16.mxu0 0
    %1988 = vmatpush1.bf16.xpose.msra.mxu0 0
    %1989 = vmatprep.subr.bf16.mxu0 0
    %1990 = vmatpush1.bf16.xpose.msra.mxu0 0
    %1991 = vmatprep.subr.bf16.mxu0 0
    %1992 = vmatpush1.bf16.xpose.msra.mxu0 0
    %1993 = vmatprep.subr.bf16.mxu0 0
    %1994 = vmatpush1.bf16.xpose.msra.mxu0 0
    %1995 = vmatprep.subr.bf16.mxu0 0
    %1996 = vmatpush1.bf16.xpose.msra.mxu0 0
    %1997 = vmatprep.subr.bf16.mxu0 0
    %1998 = vmatpush1.bf16.xpose.msra.mxu0 0
    %1999 = vmatprep.subr.bf16.mxu0 0
    %2000 = vmatpush1.bf16.xpose.msra.mxu0 0
    %2001 = vmatprep.subr.bf16.mxu0 0
    %2002 = vmatpush1.bf16.xpose.msra.mxu0 0
    %2003 = vmatprep.subr.bf16.mxu0 0
    %2004 = vmatpush1.bf16.xpose.msra.mxu0 0
    %2005 = vmatprep.subr.bf16.mxu0 0
    %2006 = vmatpush1.bf16.xpose.msra.mxu0 0
    %2007 = vmatprep.subr.bf16.mxu0 0
    %2008 = vmatpush1.bf16.xpose.msra.mxu0 0
    %2009 = vmatprep.subr.bf16.mxu0 0
    %2010 = vmatpush1.bf16.xpose.msra.mxu0 0
    %2011 = vmatprep.subr.bf16.mxu0 0
    %2012 = vmatpush1.bf16.xpose.msra.mxu0 0
    %2013 = vmatprep.subr.bf16.mxu0 0
    %2014 = vmatpush1.bf16.xpose.msra.mxu0 0
    %2015 = vmatprep.subr.bf16.mxu0 0
    %2016 = vmatpush1.bf16.xpose.msra.mxu0 0
    %2017 = vmatprep.mubr.bf16.mxu0 0
    %2018 = vmatmul.mubr.bf16.gmra.mrb[0].mxu0 %v1980
    %v2019 = vpop.f32.mrb[0].mxu0
    %v2020 = vadd.f32 %v59, %v2019
    %v2021 = vpop.f32.mrb[0].mxu0
    %v2022 = vpop.f32.mrb[0].mxu0
    %v2023 = vpop.f32.mrb[0].mxu0
    %2024 = vdwg.mxu0
    %v2025 = vsel %vm212, %v1970, -inf
    %2026 = vmax.xlane.f32.xlu0 %v2025
    %v2027 = vpop.xlane.xlu0 %2026
    %v2028 = vsel %vm212, %v2020, -inf
    %2029 = vmax.xlane.f32.xlu0 %v2028
    %v2030 = vpop.xlane.xlu0 %2029
    %v2031 = vsub.f32 %v1970, %v2027
    %v2032 = vsub.f32 %v2020, %v2030
    %v2033 = vmul.f32 %v2031, 1.442695
    %v2034 = vpow.pop %v2033
    %v2035 = vmul.f32 %v2032, 1.442695
    %v2036 = vpow.pop %v2035
    %v2037 = vsel %vm212, %v2034, 0.0
    %2038 = vadd.xlane.f32.xlu0 %v2037
    %v2039 = vpop.xlane.xlu0 %2038
    %v2040 = vsel %vm212, %v2036, 0.0
    %2041 = vadd.xlane.f32.xlu0 %v2040
    %v2042 = vpop.xlane.xlu0 %2041
    %v2043 = vrcp.pop %v2039
    %v2044 = vrcp.pop %v2042
    %v2045 = vmul.f32 %v2034, %v2043
    %v2046 = vmul.f32 %v2036, %v2044
    %v2047 = vpack.c.bf16 %v2045, %v2045
    %v2048 = vpack.c.bf16 %v2046, %v2046
    %v2049 = vrot.slane %v1487, 4
    %v2051 = vsel %vm212, %v2047, 0
    %v2054 = vsel %vm460, %v2049, 0
    %2056 = vmatprep.subr.bf16.mxu0 0
    %2057 = vmatpush1.bf16.msra.mxu0 %v2054
    %2058 = vmatprep.subr.bf16.mxu0 0
    %2059 = vmatpush1.bf16.msra.mxu0 0
    %2060 = vmatprep.subr.bf16.mxu0 0
    %2061 = vmatpush1.bf16.msra.mxu0 0
    %2062 = vmatprep.subr.bf16.mxu0 0
    %2063 = vmatpush1.bf16.msra.mxu0 0
    %2064 = vmatprep.subr.bf16.mxu0 0
    %2065 = vmatpush1.bf16.msra.mxu0 0
    %2066 = vmatprep.subr.bf16.mxu0 0
    %2067 = vmatpush1.bf16.msra.mxu0 0
    %2068 = vmatprep.subr.bf16.mxu0 0
    %2069 = vmatpush1.bf16.msra.mxu0 0
    %2070 = vmatprep.subr.bf16.mxu0 0
    %2071 = vmatpush1.bf16.msra.mxu0 0
    %2072 = vmatprep.subr.bf16.mxu0 0
    %2073 = vmatpush1.bf16.msra.mxu0 0
    %2074 = vmatprep.subr.bf16.mxu0 0
    %2075 = vmatpush1.bf16.msra.mxu0 0
    %2076 = vmatprep.subr.bf16.mxu0 0
    %2077 = vmatpush1.bf16.msra.mxu0 0
    %2078 = vmatprep.subr.bf16.mxu0 0
    %2079 = vmatpush1.bf16.msra.mxu0 0
    %2080 = vmatprep.subr.bf16.mxu0 0
    %2081 = vmatpush1.bf16.msra.mxu0 0
    %2082 = vmatprep.subr.bf16.mxu0 0
    %2083 = vmatpush1.bf16.msra.mxu0 0
    %2084 = vmatprep.subr.bf16.mxu0 0
    %2085 = vmatpush1.bf16.msra.mxu0 0
    %2086 = vmatprep.subr.bf16.mxu0 0
    %2087 = vmatpush1.bf16.msra.mxu0 0
    %2088 = vmatprep.mubr.bf16.mxu0 0
    %2089 = vmatmul.mubr.bf16.gmra.mrb[0].mxu0 %v2051
    %v2090 = vpop.f32.mrb[0].mxu0
    %v2091 = vadd.f32 0.0, %v2090
    %v2092 = vpop.f32.mrb[0].mxu0
    %v2093 = vpop.f32.mrb[0].mxu0
    %v2094 = vpop.f32.mrb[0].mxu0
    %2095 = vdwg.mxu0
    %v2096 = vrot.slane %v1488, 4
    %v2098 = vsel %vm212, %v2048, 0
    %v2101 = vsel %vm460, %v2096, 0
    %2103 = vmatprep.subr.bf16.mxu0 0
    %2104 = vmatpush1.bf16.msra.mxu0 %v2101
    %2105 = vmatprep.subr.bf16.mxu0 0
    %2106 = vmatpush1.bf16.msra.mxu0 0
    %2107 = vmatprep.subr.bf16.mxu0 0
    %2108 = vmatpush1.bf16.msra.mxu0 0
    %2109 = vmatprep.subr.bf16.mxu0 0
    %2110 = vmatpush1.bf16.msra.mxu0 0
    %2111 = vmatprep.subr.bf16.mxu0 0
    %2112 = vmatpush1.bf16.msra.mxu0 0
    %2113 = vmatprep.subr.bf16.mxu0 0
    %2114 = vmatpush1.bf16.msra.mxu0 0
    %2115 = vmatprep.subr.bf16.mxu0 0
    %2116 = vmatpush1.bf16.msra.mxu0 0
    %2117 = vmatprep.subr.bf16.mxu0 0
    %2118 = vmatpush1.bf16.msra.mxu0 0
    %2119 = vmatprep.subr.bf16.mxu0 0
    %2120 = vmatpush1.bf16.msra.mxu0 0
    %2121 = vmatprep.subr.bf16.mxu0 0
    %2122 = vmatpush1.bf16.msra.mxu0 0
    %2123 = vmatprep.subr.bf16.mxu0 0
    %2124 = vmatpush1.bf16.msra.mxu0 0
    %2125 = vmatprep.subr.bf16.mxu0 0
    %2126 = vmatpush1.bf16.msra.mxu0 0
    %2127 = vmatprep.subr.bf16.mxu0 0
    %2128 = vmatpush1.bf16.msra.mxu0 0
    %2129 = vmatprep.subr.bf16.mxu0 0
    %2130 = vmatpush1.bf16.msra.mxu0 0
    %2131 = vmatprep.subr.bf16.mxu0 0
    %2132 = vmatpush1.bf16.msra.mxu0 0
    %2133 = vmatprep.subr.bf16.mxu0 0
    %2134 = vmatpush1.bf16.msra.mxu0 0
    %2135 = vmatprep.mubr.bf16.mxu0 0
    %2136 = vmatmul.mubr.bf16.gmra.mrb[0].mxu0 %v2098
    %v2137 = vpop.f32.mrb[0].mxu0
    %v2138 = vadd.f32 0.0, %v2137
    %v2139 = vpop.f32.mrb[0].mxu0
    %v2140 = vpop.f32.mrb[0].mxu0
    %v2141 = vpop.f32.mrb[0].mxu0
    %2142 = vdwg.mxu0
    %v2143 = vadd.f32 %v1872, %v2091
    %v2144 = vadd.f32 %v1920, %v2138
    %2145 = vrot.lane.b32.xlu0 %v1482, 104
    %v2146 = vpop.permute.xlu0 %2145
    %2147 = vrot.lane.b32.xlu0 %v1482, 72
    %v2148 = vpop.permute.xlu0 %2147
    %v2150 = vsel %vm212, %v2146, 0
    %v2153 = vsel %vm212, %v2148, 0
    %2155 = vmatprep.subr.bf16.mxu0 0
    %2156 = vmatpush1.bf16.xpose.msra.mxu0 %v2153
    %2157 = vmatprep.subr.bf16.mxu0 0
    %2158 = vmatpush1.bf16.xpose.msra.mxu0 0
    %2159 = vmatprep.subr.bf16.mxu0 0
    %2160 = vmatpush1.bf16.xpose.msra.mxu0 0
    %2161 = vmatprep.subr.bf16.mxu0 0
    %2162 = vmatpush1.bf16.xpose.msra.mxu0 0
    %2163 = vmatprep.subr.bf16.mxu0 0
    %2164 = vmatpush1.bf16.xpose.msra.mxu0 0
    %2165 = vmatprep.subr.bf16.mxu0 0
    %2166 = vmatpush1.bf16.xpose.msra.mxu0 0
    %2167 = vmatprep.subr.bf16.mxu0 0
    %2168 = vmatpush1.bf16.xpose.msra.mxu0 0
    %2169 = vmatprep.subr.bf16.mxu0 0
    %2170 = vmatpush1.bf16.xpose.msra.mxu0 0
    %2171 = vmatprep.subr.bf16.mxu0 0
    %2172 = vmatpush1.bf16.xpose.msra.mxu0 0
    %2173 = vmatprep.subr.bf16.mxu0 0
    %2174 = vmatpush1.bf16.xpose.msra.mxu0 0
    %2175 = vmatprep.subr.bf16.mxu0 0
    %2176 = vmatpush1.bf16.xpose.msra.mxu0 0
    %2177 = vmatprep.subr.bf16.mxu0 0
    %2178 = vmatpush1.bf16.xpose.msra.mxu0 0
    %2179 = vmatprep.subr.bf16.mxu0 0
    %2180 = vmatpush1.bf16.xpose.msra.mxu0 0
    %2181 = vmatprep.subr.bf16.mxu0 0
    %2182 = vmatpush1.bf16.xpose.msra.mxu0 0
    %2183 = vmatprep.subr.bf16.mxu0 0
    %2184 = vmatpush1.bf16.xpose.msra.mxu0 0
    %2185 = vmatprep.subr.bf16.mxu0 0
    %2186 = vmatpush1.bf16.xpose.msra.mxu0 0
    %2187 = vmatprep.mubr.bf16.mxu0 0
    %2188 = vmatmul.mubr.bf16.gmra.mrb[0].mxu0 %v2150
    %v2189 = vpop.f32.mrb[0].mxu0
    %v2190 = vadd.f32 %v58, %v2189
    %v2191 = vpop.f32.mrb[0].mxu0
    %v2192 = vpop.f32.mrb[0].mxu0
    %v2193 = vpop.f32.mrb[0].mxu0
    %2194 = vdwg.mxu0
    %2195 = vrot.lane.b32.xlu0 %v1483, 104
    %v2196 = vpop.permute.xlu0 %2195
    %2197 = vrot.lane.b32.xlu0 %v1483, 72
    %v2198 = vpop.permute.xlu0 %2197
    %v2200 = vsel %vm212, %v2196, 0
    %v2203 = vsel %vm212, %v2198, 0
    %2205 = vmatprep.subr.bf16.mxu0 0
    %2206 = vmatpush1.bf16.xpose.msra.mxu0 %v2203
    %2207 = vmatprep.subr.bf16.mxu0 0
    %2208 = vmatpush1.bf16.xpose.msra.mxu0 0
    %2209 = vmatprep.subr.bf16.mxu0 0
    %2210 = vmatpush1.bf16.xpose.msra.mxu0 0
    %2211 = vmatprep.subr.bf16.mxu0 0
    %2212 = vmatpush1.bf16.xpose.msra.mxu0 0
    %2213 = vmatprep.subr.bf16.mxu0 0
    %2214 = vmatpush1.bf16.xpose.msra.mxu0 0
    %2215 = vmatprep.subr.bf16.mxu0 0
    %2216 = vmatpush1.bf16.xpose.msra.mxu0 0
    %2217 = vmatprep.subr.bf16.mxu0 0
    %2218 = vmatpush1.bf16.xpose.msra.mxu0 0
    %2219 = vmatprep.subr.bf16.mxu0 0
    %2220 = vmatpush1.bf16.xpose.msra.mxu0 0
    %2221 = vmatprep.subr.bf16.mxu0 0
    %2222 = vmatpush1.bf16.xpose.msra.mxu0 0
    %2223 = vmatprep.subr.bf16.mxu0 0
    %2224 = vmatpush1.bf16.xpose.msra.mxu0 0
    %2225 = vmatprep.subr.bf16.mxu0 0
    %2226 = vmatpush1.bf16.xpose.msra.mxu0 0
    %2227 = vmatprep.subr.bf16.mxu0 0
    %2228 = vmatpush1.bf16.xpose.msra.mxu0 0
    %2229 = vmatprep.subr.bf16.mxu0 0
    %2230 = vmatpush1.bf16.xpose.msra.mxu0 0
    %2231 = vmatprep.subr.bf16.mxu0 0
    %2232 = vmatpush1.bf16.xpose.msra.mxu0 0
    %2233 = vmatprep.subr.bf16.mxu0 0
    %2234 = vmatpush1.bf16.xpose.msra.mxu0 0
    %2235 = vmatprep.subr.bf16.mxu0 0
    %2236 = vmatpush1.bf16.xpose.msra.mxu0 0
    %2237 = vmatprep.mubr.bf16.mxu0 0
    %2238 = vmatmul.mubr.bf16.gmra.mrb[0].mxu0 %v2200
    %v2239 = vpop.f32.mrb[0].mxu0
    %v2240 = vadd.f32 %v59, %v2239
    %v2241 = vpop.f32.mrb[0].mxu0
    %v2242 = vpop.f32.mrb[0].mxu0
    %v2243 = vpop.f32.mrb[0].mxu0
    %2244 = vdwg.mxu0
    %v2245 = vsel %vm212, %v2190, -inf
    %2246 = vmax.xlane.f32.xlu0 %v2245
    %v2247 = vpop.xlane.xlu0 %2246
    %v2248 = vsel %vm212, %v2240, -inf
    %2249 = vmax.xlane.f32.xlu0 %v2248
    %v2250 = vpop.xlane.xlu0 %2249
    %v2251 = vsub.f32 %v2190, %v2247
    %v2252 = vsub.f32 %v2240, %v2250
    %v2253 = vmul.f32 %v2251, 1.442695
    %v2254 = vpow.pop %v2253
    %v2255 = vmul.f32 %v2252, 1.442695
    %v2256 = vpow.pop %v2255
    %v2257 = vsel %vm212, %v2254, 0.0
    %2258 = vadd.xlane.f32.xlu0 %v2257
    %v2259 = vpop.xlane.xlu0 %2258
    %v2260 = vsel %vm212, %v2256, 0.0
    %2261 = vadd.xlane.f32.xlu0 %v2260
    %v2262 = vpop.xlane.xlu0 %2261
    %v2263 = vrcp.pop %v2259
    %v2264 = vrcp.pop %v2262
    %v2265 = vmul.f32 %v2254, %v2263
    %v2266 = vmul.f32 %v2256, %v2264
    %v2267 = vpack.c.bf16 %v2265, %v2265
    %v2268 = vpack.c.bf16 %v2266, %v2266
    %2269 = vrot.lane.b32.xlu0 %v1487, 96
    %v2270 = vpop.permute.xlu0 %2269
    %v2271 = vrot.slane %v2270, 4
    %v2273 = vsel %vm212, %v2267, 0
    %v2276 = vsel %vm460, %v2271, 0
    %2278 = vmatprep.subr.bf16.mxu0 0
    %2279 = vmatpush1.bf16.msra.mxu0 %v2276
    %2280 = vmatprep.subr.bf16.mxu0 0
    %2281 = vmatpush1.bf16.msra.mxu0 0
    %2282 = vmatprep.subr.bf16.mxu0 0
    %2283 = vmatpush1.bf16.msra.mxu0 0
    %2284 = vmatprep.subr.bf16.mxu0 0
    %2285 = vmatpush1.bf16.msra.mxu0 0
    %2286 = vmatprep.subr.bf16.mxu0 0
    %2287 = vmatpush1.bf16.msra.mxu0 0
    %2288 = vmatprep.subr.bf16.mxu0 0
    %2289 = vmatpush1.bf16.msra.mxu0 0
    %2290 = vmatprep.subr.bf16.mxu0 0
    %2291 = vmatpush1.bf16.msra.mxu0 0
    %2292 = vmatprep.subr.bf16.mxu0 0
    %2293 = vmatpush1.bf16.msra.mxu0 0
    %2294 = vmatprep.subr.bf16.mxu0 0
    %2295 = vmatpush1.bf16.msra.mxu0 0
    %2296 = vmatprep.subr.bf16.mxu0 0
    %2297 = vmatpush1.bf16.msra.mxu0 0
    %2298 = vmatprep.subr.bf16.mxu0 0
    %2299 = vmatpush1.bf16.msra.mxu0 0
    %2300 = vmatprep.subr.bf16.mxu0 0
    %2301 = vmatpush1.bf16.msra.mxu0 0
    %2302 = vmatprep.subr.bf16.mxu0 0
    %2303 = vmatpush1.bf16.msra.mxu0 0
    %2304 = vmatprep.subr.bf16.mxu0 0
    %2305 = vmatpush1.bf16.msra.mxu0 0
    %2306 = vmatprep.subr.bf16.mxu0 0
    %2307 = vmatpush1.bf16.msra.mxu0 0
    %2308 = vmatprep.subr.bf16.mxu0 0
    %2309 = vmatpush1.bf16.msra.mxu0 0
    %2310 = vmatprep.mubr.bf16.mxu0 0
    %2311 = vmatmul.mubr.bf16.gmra.mrb[0].mxu0 %v2273
    %v2312 = vpop.f32.mrb[0].mxu0
    %v2313 = vadd.f32 0.0, %v2312
    %v2314 = vpop.f32.mrb[0].mxu0
    %v2315 = vpop.f32.mrb[0].mxu0
    %v2316 = vpop.f32.mrb[0].mxu0
    %2317 = vdwg.mxu0
    %2318 = vrot.lane.b32.xlu0 %v1488, 96
    %v2319 = vpop.permute.xlu0 %2318
    %v2320 = vrot.slane %v2319, 4
    %v2322 = vsel %vm212, %v2268, 0
    %v2325 = vsel %vm460, %v2320, 0
    %2327 = vmatprep.subr.bf16.mxu0 0
    %2328 = vmatpush1.bf16.msra.mxu0 %v2325
    %2329 = vmatprep.subr.bf16.mxu0 0
    %2330 = vmatpush1.bf16.msra.mxu0 0
    %2331 = vmatprep.subr.bf16.mxu0 0
    %2332 = vmatpush1.bf16.msra.mxu0 0
    %2333 = vmatprep.subr.bf16.mxu0 0
    %2334 = vmatpush1.bf16.msra.mxu0 0
    %2335 = vmatprep.subr.bf16.mxu0 0
    %2336 = vmatpush1.bf16.msra.mxu0 0
    %2337 = vmatprep.subr.bf16.mxu0 0
    %2338 = vmatpush1.bf16.msra.mxu0 0
    %2339 = vmatprep.subr.bf16.mxu0 0
    %2340 = vmatpush1.bf16.msra.mxu0 0
    %2341 = vmatprep.subr.bf16.mxu0 0
    %2342 = vmatpush1.bf16.msra.mxu0 0
    %2343 = vmatprep.subr.bf16.mxu0 0
    %2344 = vmatpush1.bf16.msra.mxu0 0
    %2345 = vmatprep.subr.bf16.mxu0 0
    %2346 = vmatpush1.bf16.msra.mxu0 0
    %2347 = vmatprep.subr.bf16.mxu0 0
    %2348 = vmatpush1.bf16.msra.mxu0 0
    %2349 = vmatprep.subr.bf16.mxu0 0
    %2350 = vmatpush1.bf16.msra.mxu0 0
    %2351 = vmatprep.subr.bf16.mxu0 0
    %2352 = vmatpush1.bf16.msra.mxu0 0
    %2353 = vmatprep.subr.bf16.mxu0 0
    %2354 = vmatpush1.bf16.msra.mxu0 0
    %2355 = vmatprep.subr.bf16.mxu0 0
    %2356 = vmatpush1.bf16.msra.mxu0 0
    %2357 = vmatprep.subr.bf16.mxu0 0
    %2358 = vmatpush1.bf16.msra.mxu0 0
    %2359 = vmatprep.mubr.bf16.mxu0 0
    %2360 = vmatmul.mubr.bf16.gmra.mrb[0].mxu0 %v2322
    %v2361 = vpop.f32.mrb[0].mxu0
    %v2362 = vadd.f32 0.0, %v2361
    %v2363 = vpop.f32.mrb[0].mxu0
    %v2364 = vpop.f32.mrb[0].mxu0
    %v2365 = vpop.f32.mrb[0].mxu0
    %2366 = vdwg.mxu0
    %v2367 = vadd.f32 %v2143, %v2313
    %v2368 = vadd.f32 %v2144, %v2362
    %s2369 = scalar_lea.vmem %s8, 1
    %v2370 = vld [vmem:[%s2369] sm:$0x1]
    %v2372 = vlaneseq
    %v2373 = vshrl.u32 %v2372, 7
    %v2374 = vsub.s32 0, %v2373
    %v2375 = vrot.slane %v2370, %v2374
    %v2377 = vadd.f32 %v2367, %v2375
    %v2378 = vadd.f32 %v2368, %v2375
    %v2379 = vadd.f32 %v1390, %v2377
    %v2380 = vadd.f32 %v1391, %v2378
    %s2381 = scalar_lea.vmem %s9, 1
    %v2382 = vld [vmem:[%s2381] sm:$0x1]
    %s2383 = scalar_lea.vmem %s10, 1
    %v2384 = vld [vmem:[%s2383] sm:$0x1]
    %v2385 = vsel %vm71, %v2379, 0.0
    %2386 = vadd.xlane.f32.xlu0 %v2385
    %v2387 = vpop.xlane.xlu0 %2386
    %v2388 = vsel %vm71, %v2380, 0.0
    %2389 = vadd.xlane.f32.xlu0 %v2388
    %v2390 = vpop.xlane.xlu0 %2389
    %v2391 = vmul.f32 %v2387, %v78
    %v2392 = vmul.f32 %v2390, %v78
    %v2393 = vsub.f32 %v2379, %v2391
    %v2394 = vsub.f32 %v2380, %v2392
    %v2395 = vmul.f32 %v2393, %v2393
    %v2396 = vmul.f32 %v2394, %v2394
    %v2397 = vsel %vm71, %v2395, 0.0
    %2398 = vadd.xlane.f32.xlu0 %v2397
    %v2399 = vpop.xlane.xlu0 %2398
    %v2400 = vsel %vm71, %v2396, 0.0
    %2401 = vadd.xlane.f32.xlu0 %v2400
    %v2402 = vpop.xlane.xlu0 %2401
    %v2403 = vmul.f32 %v2399, %v78
    %v2404 = vmul.f32 %v2402, %v78
    %v2405 = vadd.f32 %v2403, 1e-12
    %v2406 = vadd.f32 %v2404, 1e-12
    %v2407 = vrsqrt.pop %v2405
    %v2408 = vrsqrt.pop %v2406
    %v2409 = vmul.f32 %v2393, %v2407
    %v2410 = vmul.f32 %v2394, %v2408
    %v2412 = vlaneseq
    %v2413 = vshrl.u32 %v2412, 7
    %v2414 = vsub.s32 0, %v2413
    %v2415 = vrot.slane %v2382, %v2414
    %v2417 = vmul.f32 %v2409, %v2415
    %v2418 = vmul.f32 %v2410, %v2415
    %v2420 = vlaneseq
    %v2421 = vshrl.u32 %v2420, 7
    %v2422 = vsub.s32 0, %v2421
    %v2423 = vrot.slane %v2384, %v2422
    %v2425 = vadd.f32 %v2417, %v2423
    %v2426 = vadd.f32 %v2418, %v2423
    %v2427 = vpack.c.bf16 %v2426, %v2425
    %s2428 = scalar_lea.vmem %s11, 16
    %v2429 = vld [vmem:[%s2428] sm:$0xf]
    %v2430 = vld [vmem:[%s2428 + $0x4] sm:$0xf]
    %v2431 = vld [vmem:[%s2428 + $0x8] sm:$0xf]
    %v2432 = vld [vmem:[%s2428 + $0xc] sm:$0xf]
    %s2433 = scalar_lea.vmem %s12, 1
    %v2434 = vld [vmem:[%s2433] sm:$0x1]
    %v2436 = vlaneseq
    %v2437 = vshrl.u32 %v2436, 7
    %v2438 = vsub.s32 0, %v2437
    %v2439 = vrot.slane %v2434, %v2438
    %v2445 = vunpack.c.l.b16 %v2429
    %v2446 = vunpack.c.l.b16 %v2430
    %v2447 = vunpack.c.l.b16 %v2431
    %v2448 = vunpack.c.l.b16 %v2432
    %v2449 = vpack.c.b16 %v2446, %v2445
    %v2450 = vpack.c.b16 %v2448, %v2447
    %v2454 = vsel %vm71, %v2427, 0
    %2456 = vmatprep.subr.bf16.mxu0 0
    %2457 = vmatpush1.bf16.msra.mxu0 %v2449
    %2458 = vmatprep.subr.bf16.mxu0 0
    %2459 = vmatpush1.bf16.msra.mxu0 %v2450
    %2460 = vmatprep.subr.bf16.mxu0 0
    %2461 = vmatpush1.bf16.msra.mxu0 0
    %2462 = vmatprep.subr.bf16.mxu0 0
    %2463 = vmatpush1.bf16.msra.mxu0 0
    %2464 = vmatprep.subr.bf16.mxu0 0
    %2465 = vmatpush1.bf16.msra.mxu0 0
    %2466 = vmatprep.subr.bf16.mxu0 0
    %2467 = vmatpush1.bf16.msra.mxu0 0
    %2468 = vmatprep.subr.bf16.mxu0 0
    %2469 = vmatpush1.bf16.msra.mxu0 0
    %2470 = vmatprep.subr.bf16.mxu0 0
    %2471 = vmatpush1.bf16.msra.mxu0 0
    %2472 = vmatprep.subr.bf16.mxu0 0
    %2473 = vmatpush1.bf16.msra.mxu0 0
    %2474 = vmatprep.subr.bf16.mxu0 0
    %2475 = vmatpush1.bf16.msra.mxu0 0
    %2476 = vmatprep.subr.bf16.mxu0 0
    %2477 = vmatpush1.bf16.msra.mxu0 0
    %2478 = vmatprep.subr.bf16.mxu0 0
    %2479 = vmatpush1.bf16.msra.mxu0 0
    %2480 = vmatprep.subr.bf16.mxu0 0
    %2481 = vmatpush1.bf16.msra.mxu0 0
    %2482 = vmatprep.subr.bf16.mxu0 0
    %2483 = vmatpush1.bf16.msra.mxu0 0
    %2484 = vmatprep.subr.bf16.mxu0 0
    %2485 = vmatpush1.bf16.msra.mxu0 0
    %2486 = vmatprep.subr.bf16.mxu0 0
    %2487 = vmatpush1.bf16.msra.mxu0 0
    %2488 = vmatprep.mubr.bf16.mxu0 0
    %2489 = vmatmul.mubr.bf16.gmra.mrb[0].mxu0 %v2454
    %v2490 = vpop.f32.mrb[0].mxu0
    %v2491 = vadd.f32 %v2439, %v2490
    %v2492 = vpop.f32.mrb[0].mxu0
    %v2493 = vpop.f32.mrb[0].mxu0
    %v2494 = vadd.f32 %v2439, %v2493
    %v2495 = vpop.f32.mrb[0].mxu0
    %2496 = vdwg.mxu0
    %v2497 = vmul.f32 %v2491, %v2491
    %v2498 = vmul.f32 %v2494, %v2494
    %v2499 = vmul.f32 %v2491, %v2497
    %v2500 = vmul.f32 %v2494, %v2498
    %v2501 = vmul.f32 %v2499, 0.044715
    %v2502 = vmul.f32 %v2500, 0.044715
    %v2503 = vadd.f32 %v2491, %v2501
    %v2504 = vadd.f32 %v2494, %v2502
    %v2505 = vmul.f32 %v2503, 0.7978846
    %v2506 = vmul.f32 %v2504, 0.7978846
    %v2507 = vtanh.pop %v2505
    %v2508 = vtanh.pop %v2506
    %v2509 = vadd.f32 %v2507, 1.0
    %v2510 = vadd.f32 %v2508, 1.0
    %v2511 = vmul.f32 %v2509, 0.5
    %v2512 = vmul.f32 %v2510, 0.5
    %v2513 = vmul.f32 %v2491, %v2511
    %v2514 = vmul.f32 %v2494, %v2512
    %v2515 = vpack.c.bf16 %v2514, %v2513
    %s2516 = scalar_lea.vmem %s13, 64
    %v2517 = vld [vmem:[%s2516] sm:$0xf]
    %v2518 = vld [vmem:[%s2516 + $0x4] sm:$0xf]
    %v2519 = vld [vmem:[%s2516 + $0x8] sm:$0xf]
    %v2520 = vld [vmem:[%s2516 + $0xc] sm:$0xf]
    %v2521 = vld [vmem:[%s2516 + $0x10] sm:$0xf]
    %v2522 = vld [vmem:[%s2516 + $0x14] sm:$0xf]
    %v2523 = vld [vmem:[%s2516 + $0x18] sm:$0xf]
    %v2524 = vld [vmem:[%s2516 + $0x1c] sm:$0xf]
    %v2525 = vld [vmem:[%s2516 + $0x20] sm:$0xf]
    %v2526 = vld [vmem:[%s2516 + $0x24] sm:$0xf]
    %v2527 = vld [vmem:[%s2516 + $0x28] sm:$0xf]
    %v2528 = vld [vmem:[%s2516 + $0x2c] sm:$0xf]
    %v2529 = vld [vmem:[%s2516 + $0x30] sm:$0xf]
    %v2530 = vld [vmem:[%s2516 + $0x34] sm:$0xf]
    %v2531 = vld [vmem:[%s2516 + $0x38] sm:$0xf]
    %v2532 = vld [vmem:[%s2516 + $0x3c] sm:$0xf]
    %s2533 = scalar_lea.vmem %s14, 1
    %v2534 = vld [vmem:[%s2533] sm:$0x1]
    %v2536 = vlaneseq
    %v2537 = vshrl.u32 %v2536, 7
    %v2538 = vsub.s32 0, %v2537
    %v2539 = vrot.slane %v2534, %v2538
    %v2557 = vunpack.c.l.b16 %v2517
    %v2558 = vunpack.c.l.b16 %v2518
    %v2559 = vunpack.c.l.b16 %v2519
    %v2560 = vunpack.c.l.b16 %v2520
    %v2561 = vunpack.c.l.b16 %v2521
    %v2562 = vunpack.c.l.b16 %v2522
    %v2563 = vunpack.c.l.b16 %v2523
    %v2564 = vunpack.c.l.b16 %v2524
    %v2565 = vunpack.c.l.b16 %v2525
    %v2566 = vunpack.c.l.b16 %v2526
    %v2567 = vunpack.c.l.b16 %v2527
    %v2568 = vunpack.c.l.b16 %v2528
    %v2569 = vunpack.c.l.b16 %v2529
    %v2570 = vunpack.c.l.b16 %v2530
    %v2571 = vunpack.c.l.b16 %v2531
    %v2572 = vunpack.c.l.b16 %v2532
    %v2573 = vpack.c.b16 %v2558, %v2557
    %v2574 = vpack.c.b16 %v2560, %v2559
    %v2575 = vpack.c.b16 %v2562, %v2561
    %v2576 = vpack.c.b16 %v2564, %v2563
    %v2577 = vpack.c.b16 %v2566, %v2565
    %v2578 = vpack.c.b16 %v2568, %v2567
    %v2579 = vpack.c.b16 %v2570, %v2569
    %v2580 = vpack.c.b16 %v2572, %v2571
    %2589 = vmatprep.subr.bf16.mxu0 0
    %2590 = vmatpush1.bf16.msra.mxu0 %v2573
    %2591 = vmatprep.subr.bf16.mxu0 0
    %2592 = vmatpush1.bf16.msra.mxu0 %v2574
    %2593 = vmatprep.subr.bf16.mxu0 0
    %2594 = vmatpush1.bf16.msra.mxu0 %v2575
    %2595 = vmatprep.subr.bf16.mxu0 0
    %2596 = vmatpush1.bf16.msra.mxu0 %v2576
    %2597 = vmatprep.subr.bf16.mxu0 0
    %2598 = vmatpush1.bf16.msra.mxu0 %v2577
    %2599 = vmatprep.subr.bf16.mxu0 0
    %2600 = vmatpush1.bf16.msra.mxu0 %v2578
    %2601 = vmatprep.subr.bf16.mxu0 0
    %2602 = vmatpush1.bf16.msra.mxu0 %v2579
    %2603 = vmatprep.subr.bf16.mxu0 0
    %2604 = vmatpush1.bf16.msra.mxu0 %v2580
    %2605 = vmatprep.subr.bf16.mxu0 0
    %2606 = vmatpush1.bf16.msra.mxu0 0
    %2607 = vmatprep.subr.bf16.mxu0 0
    %2608 = vmatpush1.bf16.msra.mxu0 0
    %2609 = vmatprep.subr.bf16.mxu0 0
    %2610 = vmatpush1.bf16.msra.mxu0 0
    %2611 = vmatprep.subr.bf16.mxu0 0
    %2612 = vmatpush1.bf16.msra.mxu0 0
    %2613 = vmatprep.subr.bf16.mxu0 0
    %2614 = vmatpush1.bf16.msra.mxu0 0
    %2615 = vmatprep.subr.bf16.mxu0 0
    %2616 = vmatpush1.bf16.msra.mxu0 0
    %2617 = vmatprep.subr.bf16.mxu0 0
    %2618 = vmatpush1.bf16.msra.mxu0 0
    %2619 = vmatprep.subr.bf16.mxu0 0
    %2620 = vmatpush1.bf16.msra.mxu0 0
    %2621 = vmatprep.mubr.bf16.mxu0 0
    %2622 = vmatmul.mubr.bf16.gmra.mrb[0].mxu0 %v2515
    %v2623 = vpop.f32.mrb[0].mxu0
    %v2624 = vadd.f32 %v2539, %v2623
    %v2625 = vpop.f32.mrb[0].mxu0
    %v2626 = vpop.f32.mrb[0].mxu0
    %v2627 = vadd.f32 %v2539, %v2626
    %v2628 = vpop.f32.mrb[0].mxu0
    %2629 = vdwg.mxu0
    %v2630 = vadd.f32 %v2425, %v2624
    %v2631 = vadd.f32 %v2426, %v2627
    %s2632 = scalar_lea.vmem %s15, 1
    %v2633 = vld [vmem:[%s2632] sm:$0x1]
    %s2634 = scalar_lea.vmem %s16, 1
    %v2635 = vld [vmem:[%s2634] sm:$0x1]
    %v2636 = vsel %vm71, %v2630, 0.0
    %2637 = vadd.xlane.f32.xlu0 %v2636
    %v2638 = vpop.xlane.xlu0 %2637
    %v2639 = vsel %vm71, %v2631, 0.0
    %2640 = vadd.xlane.f32.xlu0 %v2639
    %v2641 = vpop.xlane.xlu0 %2640
    %v2642 = vmul.f32 %v2638, %v78
    %v2643 = vmul.f32 %v2641, %v78
    %v2644 = vsub.f32 %v2630, %v2642
    %v2645 = vsub.f32 %v2631, %v2643
    %v2646 = vmul.f32 %v2644, %v2644
    %v2647 = vmul.f32 %v2645, %v2645
    %v2648 = vsel %vm71, %v2646, 0.0
    %2649 = vadd.xlane.f32.xlu0 %v2648
    %v2650 = vpop.xlane.xlu0 %2649
    %v2651 = vsel %vm71, %v2647, 0.0
    %2652 = vadd.xlane.f32.xlu0 %v2651
    %v2653 = vpop.xlane.xlu0 %2652
    %v2654 = vmul.f32 %v2650, %v78
    %v2655 = vmul.f32 %v2653, %v78
    %v2656 = vadd.f32 %v2654, 1e-12
    %v2657 = vadd.f32 %v2655, 1e-12
    %v2658 = vrsqrt.pop %v2656
    %v2659 = vrsqrt.pop %v2657
    %v2660 = vmul.f32 %v2644, %v2658
    %v2661 = vmul.f32 %v2645, %v2659
    %v2663 = vlaneseq
    %v2664 = vshrl.u32 %v2663, 7
    %v2665 = vsub.s32 0, %v2664
    %v2666 = vrot.slane %v2633, %v2665
    %v2668 = vmul.f32 %v2660, %v2666
    %v2669 = vmul.f32 %v2661, %v2666
    %v2671 = vlaneseq
    %v2672 = vshrl.u32 %v2671, 7
    %v2673 = vsub.s32 0, %v2672
    %v2674 = vrot.slane %v2635, %v2673
    %v2676 = vadd.f32 %v2668, %v2674
    %v2677 = vadd.f32 %v2669, %v2674
    %2678 = vst.msk [vmem:[#allocation2] sm:$0xff] %vm71, %v2676
    %2679 = vst.msk [vmem:[#allocation2 + $0x8] sm:$0xff] %vm71, %v2677
    // Predicated region
    $region70: #{bert_common_forward.1} parent=1 // pred_check
      _
    $region71: #{bert_common_forward.1} parent=1 // pred_check_branch
      %2681 = sbr.rel (0) target = $region73
    $region72: #{bert_common_forward.1} parent=1 // pred_region
      %s2683 = ssub.s32 256, 256
      %2684 = vsyncadd [#allocation3], %s2683
      %s2685 = sshll.u32 [#allocation2], 4
      %s2686 = int_to_ptr.vmem [resolvable:$true] %s2685
      %2691 = dma.vmem_to_hbm [thread:$0]  %s2686, 256, %s17, [#allocation3], 128, 128, 8
    $region73: #{bert_common_forward.1} parent=1 // pred_fallthru
      _
    // Predicated region
    $region74: #{bert_common_forward.1} parent=1 // pred_check
      _
    $region75: #{bert_common_forward.1} parent=1 // pred_check_branch
      %2693 = sbr.rel (0) target = $region77
    $region76: #{bert_common_forward.1} parent=1 // pred_region
      %2694 = dma.done [#allocation3], 256
    $region77: #{bert_common_forward.1} parent=1 // pred_fallthru
      _
    %2695 = vsyncpa [#allocation3], 1

</llo_original>
